<compile_context>
chip_gen: v6e
topology: v6e:2x2x1
jax: 0.10.0
libtpu: 0.0.40
codegen_flags: <defaults>
</compile_context>

<pallas_src>
import functools

import jax
import jax.numpy as jnp
from jax import lax
from jax.experimental import pallas as pl
from jax.experimental.pallas import tpu as pltpu


_NEG_INF = -1e30


def _abmil_kernel(x_ref, wvu_ref, bvu_ref, ww_ref,
                  acc_out_ref, m_out_ref, l_out_ref,
                  mmax_sc, lsum_sc, acc_sc,
                  *, n_total, tile_n, tiles_per_core, d, k, bf16_act):
    c = pl.program_id(0)          # core-split index ("parallel")
    i = pl.program_id(1)          # instance-tile index within the core ("arbitrary")

    @pl.when(i == 0)
    def _init():
        mmax_sc[...] = jnp.full_like(mmax_sc, _NEG_INF)
        lsum_sc[...] = jnp.zeros_like(lsum_sc)
        acc_sc[...] = jnp.zeros_like(acc_sc)

    # Stream x at its native dtype; cast to bf16 in-kernel for the MXU.
    x = x_ref[...].astype(jnp.bfloat16)                              # (tile_n, L)

    # Global (unclamped) row index; rows >= n_total are ragged-tail or
    # fully-out-of-range rows.  Zero them so junk (NaN/Inf) can never reach
    # the MXU (0 * NaN would poison the accumulator).
    row = (c * tiles_per_core + i) * tile_n + lax.broadcasted_iota(
        jnp.int32, (tile_n, 1), 0)
    valid = row < n_total                                            # (tile_n, 1)
    x = jnp.where(valid, x, jnp.zeros_like(x))

    # Fused gated-attention projections: one MXU pass over the tile.
    a_vu = (jnp.dot(x, wvu_ref[...], preferred_element_type=jnp.float32)
            + bvu_ref[...])                                          # (tile_n, 2D) f32
    if bf16_act:
        a_vu = a_vu.astype(jnp.bfloat16)   # bf16 EUP/VPU on v6e/v7x
    a_v = jnp.tanh(a_vu[:, :d])                                      # (tile_n, D)
    a_u = jax.nn.sigmoid(a_vu[:, d:])                                # (tile_n, D)
    gated = a_v * a_u                                                # (tile_n, D)

    # Attention logits; bw dropped (softmax over N is shift-invariant per head).
    if k == 1:
        w = ww_ref[...].astype(gated.dtype)                          # (1, D)
        logits = jnp.sum(gated * w, axis=-1, keepdims=True,
                         dtype=jnp.float32)                          # (tile_n, 1)
    else:
        logits = lax.dot_general(
            gated.astype(jnp.bfloat16), ww_ref[...],
            dimension_numbers=(((1,), (1,)), ((), ())),
            preferred_element_type=jnp.float32)                      # (tile_n, K)
    logits = jnp.where(valid, logits, _NEG_INF)

    # Online softmax over the instance axis (f32 statistics).
    m_old = mmax_sc[...]                                             # (1, K)
    m_new = jnp.maximum(m_old, jnp.max(logits, axis=0, keepdims=True))
    alpha = jnp.exp(m_old - m_new)                                   # (1, K)
    p = jnp.exp(logits - m_new)                                      # (tile_n, K)
    lsum_sc[...] = alpha * lsum_sc[...] + jnp.sum(p, axis=0, keepdims=True)

    # (tile_n, K)^T . (tile_n, L) -> (K, L): contract the instance axis so
    # A^T is never materialized.  x rows beyond n_total are already zero.
    contrib = lax.dot_general(
        p.astype(jnp.bfloat16), x,
        dimension_numbers=(((0,), (0,)), ((), ())),
        preferred_element_type=jnp.float32)                          # (K, L) f32
    acc_sc[...] = jnp.transpose(alpha) * acc_sc[...] + contrib
    mmax_sc[...] = m_new

    # Emit this core's partial softmax state once, at its last tile.
    @pl.when(i == pl.num_programs(1) - 1)
    def _finalize():
        acc_out_ref[0] = acc_sc[...]
        m_out_ref[0] = mmax_sc[...]
        l_out_ref[0] = lsum_sc[...]


def _round_up(x, m):
    return ((x + m - 1) // m) * m


def _supports_bf16_eup():
    # bf16 VPU/EUP exists on v6e / v7x (2x transcendental throughput); on v5e
    # it would only insert casts, so keep activations in f32 there.
    try:
        kind = jax.devices()[0].device_kind.lower()
    except Exception:
        return False
    return ("v6" in kind) or ("v7" in kind)


def prepare_abmil_params(wv, bv, wu, bu, ww, bw=None):
    """One-time weight preparation (hoist out of the per-call path).

    wv/wu: (L, D) pre-transposed nn.Linear weights; bv/bu: (D,); ww: (D, K).
    bw is accepted for signature parity but unused: it cancels under the
    softmax over instances.
    """
    del bw
    d = wv.shape[1]
    wvu = jnp.concatenate([wv, wu], axis=1).astype(jnp.bfloat16)          # (L, 2D)
    bvu = jnp.concatenate([jnp.reshape(bv, (1, d)),
                           jnp.reshape(bu, (1, d))], axis=1).astype(jnp.float32)
    ww_row = jnp.transpose(ww).astype(jnp.bfloat16)                       # (K, D)
    return wvu, bvu, ww_row


def _choose_tile_n(n, l, itemsize, num_core_splits, target_bytes=3 << 20):
    # Target ~3 MiB per streamed x block (double-buffered by Pallas), capped
    # at 2048 rows and at the per-core share of N; multiple of 32 so bf16 /
    # f32 sublane tiling never needs relayout.
    tn = max(32, target_bytes // max(1, l * itemsize))
    tn = min(tn, 2048)
    per_core = -(-n // num_core_splits)
    tn = min(tn, max(per_core, 32))
    return int(_round_up(tn, 32))


def abmil_forward(x, params, *, tile_n=None, num_core_splits=2,
                  bf16_activations=None, vmem_limit_bytes=32 * 1024 * 1024):
    """Gated-attention MIL pooling.

    x: (1, N, L) or (N, L), any float dtype (f32 or bf16; streamed as-is).
    params: output of prepare_abmil_params().  Returns M of shape (K, L), f32.
    """
    wvu, bvu, ww_row = params
    if x.ndim == 3:
        x = x[0]                       # squeeze(0) — glue, outside the kernel
    n, l = x.shape
    d = wvu.shape[1] // 2
    k = ww_row.shape[0]

    if bf16_activations is None:
        bf16_activations = _supports_bf16_eup()

    if tile_n is None:
        tile_n = _choose_tile_n(n, l, x.dtype.itemsize, num_core_splits)
    tile_n = int(_round_up(max(int(tile_n), 32), 32))
    if tile_n >= n:
        tile_n = n                     # single full block (full-dim blocks are always legal)

    total_tiles = -(-n // tile_n)
    num_core_splits = max(1, min(int(num_core_splits), total_tiles))
    tiles_per_core = -(-total_tiles // num_core_splits)
    grid = (num_core_splits, tiles_per_core)

    def x_index(c, i):
        # Clamp so a core whose share overruns N never issues an OOB DMA; the
        # unclamped row index inside the kernel masks those rows anyway.
        t = c * tiles_per_core + i
        return (jnp.minimum(t, total_tiles - 1), 0)

    kernel = functools.partial(
        _abmil_kernel, n_total=n, tile_n=tile_n, tiles_per_core=tiles_per_core,
        d=d, k=k, bf16_act=bf16_activations)

    part_acc, part_m, part_l = pl.pallas_call(
        kernel,
        out_shape=(
            jax.ShapeDtypeStruct((num_core_splits, k, l), jnp.float32),
            jax.ShapeDtypeStruct((num_core_splits, 1, k), jnp.float32),
            jax.ShapeDtypeStruct((num_core_splits, 1, k), jnp.float32),
        ),
        grid_spec=pltpu.PrefetchScalarGridSpec(
            num_scalar_prefetch=0,
            grid=grid,
            in_specs=[
                pl.BlockSpec((tile_n, l), x_index),                 # x: streamed tiles
                pl.BlockSpec((l, 2 * d), lambda c, i: (0, 0)),      # fused gate weights (resident)
                pl.BlockSpec((1, 2 * d), lambda c, i: (0, 0)),      # fused gate bias (resident)
                pl.BlockSpec((k, d), lambda c, i: (0, 0)),          # attention weights (K, D)
            ],
            out_specs=[
                pl.BlockSpec((1, k, l), lambda c, i: (c, 0, 0)),    # per-core partial acc
                pl.BlockSpec((1, 1, k), lambda c, i: (c, 0, 0)),    # per-core running max
                pl.BlockSpec((1, 1, k), lambda c, i: (c, 0, 0)),    # per-core running sum
            ],
            scratch_shapes=[
                pltpu.VMEM((1, k), jnp.float32),   # running max
                pltpu.VMEM((1, k), jnp.float32),   # running sum
                pltpu.VMEM((k, l), jnp.float32),   # M accumulator
            ],
        ),
        compiler_params=pltpu.CompilerParams(
            dimension_semantics=("parallel", "arbitrary"),
            vmem_limit_bytes=vmem_limit_bytes,
        ),
    )(x, wvu, bvu, ww_row)

    # Merge the per-core online-softmax states (flash-style log-sum-exp
    # combine) and normalize.  Tiny (C, K, L) epilogue; exact in f32.
    m = jnp.max(part_m, axis=0, keepdims=True)                       # (1, 1, K)
    scale = jnp.exp(part_m - m)                                      # (C, 1, K)
    l_sum = jnp.sum(part_l * scale, axis=0)                          # (1, K)
    acc = jnp.sum(part_acc * jnp.swapaxes(scale, 1, 2), axis=0)      # (K, L)
    return acc / jnp.swapaxes(l_sum, 0, 1)


def abmil_reference(x, wv, bv, wu, bu, ww, bw):
    if x.ndim == 3:
        x = x[0]
    x = x.astype(jnp.float32)
    a_v = jnp.tanh(x @ wv + bv)
    a_u = jax.nn.sigmoid(x @ wu + bu)
    a = (a_v * a_u) @ ww + bw
    a = jax.nn.softmax(a.T, axis=1)
    return a @ x


if __name__ == "__main__":
    # Module defaults L=768, D=192, K=1; small bag with N not a multiple of the
    # tile so the ragged tail, masking, core split and combine are exercised.
    N, L, D, K = 300, 768, 192, 1

    key = jax.random.PRNGKey(0)
    kx, kwv, kbv, kwu, kbu, kww, kbw = jax.random.split(key, 7)

    # Deterministic init mimicking nn.Linear's uniform(-1/sqrt(fan_in), ...).
    def uinit(k_, shape, fan_in):
        bound = 1.0 / (fan_in ** 0.5)
        return jax.random.uniform(k_, shape, jnp.float32, -bound, bound)

    x = jax.random.normal(kx, (1, N, L), jnp.float32)
    wv = uinit(kwv, (L, D), L)   # attention_V weight, pre-transposed
    bv = uinit(kbv, (D,), L)
    wu = uinit(kwu, (L, D), L)   # attention_U weight, pre-transposed
    bu = uinit(kbu, (D,), L)
    ww = uinit(kww, (D, K), D)   # attention_weights, pre-transposed
    bw = uinit(kbw, (K,), D)

    params = prepare_abmil_params(wv, bv, wu, bu, ww, bw)   # hoisted, one-time prep
    m_ref = abmil_reference(x, wv, bv, wu, bu, ww, bw)

    # 1) Default (auto-sized tile) configuration — the performance path.
    fwd = jax.jit(lambda xx: abmil_forward(xx, params))
    m1 = jax.block_until_ready(fwd(x))
    assert m1.shape == (K, L), m1.shape
    # bf16 streaming of x / gate weights -> small drift vs the f32 reference.
    assert jnp.allclose(m1, m_ref, atol=2e-2, rtol=2e-2), "mismatch (auto tile)"

    # 2) Deliberately tiny tile purely to exercise the multi-tile online
    #    softmax, the ragged tail and the fully-masked clamped tile in the
    #    test (NOT a performance setting).
    fwd_small = jax.jit(lambda xx: abmil_forward(xx, params, tile_n=64))
    m2 = jax.block_until_ready(fwd_small(x))
    assert jnp.allclose(m2, m_ref, atol=2e-2, rtol=2e-2), "mismatch (tile_n=64)"

    print("KERNEL_OK")
</pallas_src>

<mosaic_0001>
module attributes {stable_mosaic.version = 11 : i64} {
  func.func @_abmil_kernel(%arg0: i32, %arg1: i32, %arg2: memref<160x768xf32, #tpu.memory_space<vmem>>, %arg3: memref<768x384xbf16, #tpu.memory_space<vmem>>, %arg4: memref<1x384xf32, #tpu.memory_space<vmem>>, %arg5: memref<1x192xbf16, #tpu.memory_space<vmem>>, %arg6: memref<1x1x768xf32, #tpu.memory_space<vmem>>, %arg7: memref<1x1x1xf32, #tpu.memory_space<vmem>>, %arg8: memref<1x1x1xf32, #tpu.memory_space<vmem>>, %arg9: memref<1x1xf32, #tpu.memory_space<vmem>>, %arg10: memref<1x1xf32, #tpu.memory_space<vmem>>, %arg11: memref<1x768xf32, #tpu.memory_space<vmem>>) attributes {dimension_semantics = [#tpu.dimension_semantics<parallel>, #tpu.dimension_semantics<arbitrary>], iteration_bounds = array<i64: 2, 1>, scalar_prefetch = 0 : i64, scratch_operands = 3 : i64, tpu.core_type = #tpu.core_type<tc>, window_params = [{transform_indices = @transform_0, window_bounds = array<i64: 160, 768>}, {pipeline_mode = #tpu.pipeline_mode<synchronous>, transform_indices = @transform_1, window_bounds = array<i64: 768, 384>}, {pipeline_mode = #tpu.pipeline_mode<synchronous>, transform_indices = @transform_2, window_bounds = array<i64: 1, 384>}, {pipeline_mode = #tpu.pipeline_mode<synchronous>, transform_indices = @transform_3, window_bounds = array<i64: 1, 192>}, {transform_indices = @transform_4, window_bounds = array<i64: 1, 1, 768>}, {transform_indices = @transform_5, window_bounds = array<i64: 1, 1, 1>}, {transform_indices = @transform_6, window_bounds = array<i64: 1, 1, 1>}]} {
    %c0_i32 = arith.constant 0 : i32
    %0 = arith.cmpi eq, %arg1, %c0_i32 : i32
    %1 = arith.extui %0 : i1 to i32
    %c0_i32_0 = arith.constant 0 : i32
    %2 = arith.cmpi ne, %1, %c0_i32_0 : i32
    scf.if %2 {
      %cst_29 = arith.constant -1.000000e+30 : f32
      %66 = vector.broadcast %cst_29 : f32 to vector<1x1xf32>
      %c0_30 = arith.constant 0 : index
      %c0_31 = arith.constant 0 : index
      %67 = vector.load %arg9[%c0_30, %c0_31] : memref<1x1xf32, #tpu.memory_space<vmem>>, vector<1x1xf32>
      tpu.vector_store %arg9[%c0_30, %c0_31], %66 {strides = array<i32>} : memref<1x1xf32, #tpu.memory_space<vmem>>, vector<1x1xf32>,
      %cst_32 = arith.constant 0.000000e+00 : f32
      %68 = vector.broadcast %cst_32 : f32 to vector<1x1xf32>
      %c0_33 = arith.constant 0 : index
      %c0_34 = arith.constant 0 : index
      %69 = vector.load %arg10[%c0_33, %c0_34] : memref<1x1xf32, #tpu.memory_space<vmem>>, vector<1x1xf32>
      tpu.vector_store %arg10[%c0_33, %c0_34], %68 {strides = array<i32>} : memref<1x1xf32, #tpu.memory_space<vmem>>, vector<1x1xf32>,
      %cst_35 = arith.constant 0.000000e+00 : f32
      %70 = vector.broadcast %cst_35 : f32 to vector<1x768xf32>
      %c0_36 = arith.constant 0 : index
      %c0_37 = arith.constant 0 : index
      %71 = vector.load %arg11[%c0_36, %c0_37] : memref<1x768xf32, #tpu.memory_space<vmem>>, vector<1x768xf32>
      tpu.vector_store %arg11[%c0_36, %c0_37], %70 {strides = array<i32>} : memref<1x768xf32, #tpu.memory_space<vmem>>, vector<1x768xf32>,
    } else {
    }
    %c0 = arith.constant 0 : index
    %c0_1 = arith.constant 0 : index
    %3 = vector.load %arg2[%c0, %c0_1] : memref<160x768xf32, #tpu.memory_space<vmem>>, vector<160x768xf32>
    %4 = arith.truncf %3 : vector<160x768xf32> to vector<160x768xbf16>
    %c1_i32 = arith.constant 1 : i32
    %5 = arith.muli %arg0, %c1_i32 : i32
    %6 = arith.addi %5, %arg1 : i32
    %c160_i32 = arith.constant 160 : i32
    %7 = arith.muli %6, %c160_i32 : i32
    %8 = tpu.iota {dimensions = array<i32: 0>} : vector<160x1xi32>
    %9 = vector.broadcast %7 : i32 to vector<160x1xi32>
    %10 = arith.addi %9, %8 : vector<160x1xi32>
    %c300_i32 = arith.constant 300 : i32
    %11 = vector.broadcast %c300_i32 : i32 to vector<160x1xi32>
    %12 = arith.cmpi slt, %10, %11 : vector<160x1xi32>
    %cst = arith.constant 0.000000e+00 : bf16
    %13 = vector.broadcast %cst : bf16 to vector<160x768xbf16>
    %14 = vector.shape_cast %12 : vector<160x1xi1> to vector<160x1xi1>
    %15 = vector.broadcast %14 : vector<160x1xi1> to vector<160x768xi1>
    %16 = arith.select %15, %4, %13 : vector<160x768xi1>, vector<160x768xbf16>
    %c0_2 = arith.constant 0 : index
    %c0_3 = arith.constant 0 : index
    %17 = vector.load %arg3[%c0_2, %c0_3] : memref<768x384xbf16, #tpu.memory_space<vmem>>, vector<768x384xbf16>
    %cst_4 = arith.constant dense<0.000000e+00> : vector<160x384xf32>
    %18 = tpu.matmul %16, %17, %cst_4 {dimension_numbers = #tpu.dot_dimension_numbers<[1], [0], [0], [1], [0, 0, 1, 1], [], []>} : vector<160x768xbf16>, vector<768x384xbf16>, vector<160x384xf32> -> vector<160x384xf32>
    %c0_5 = arith.constant 0 : index
    %c0_6 = arith.constant 0 : index
    %19 = vector.load %arg4[%c0_5, %c0_6] : memref<1x384xf32, #tpu.memory_space<vmem>>, vector<1x384xf32>
    %20 = vector.broadcast %19 : vector<1x384xf32> to vector<160x384xf32>
    %21 = arith.addf %18, %20 : vector<160x384xf32>
    %22 = vector.extract_strided_slice %21 {offsets = [0, 0], sizes = [160, 192], strides = [1, 1]} : vector<160x384xf32> to vector<160x192xf32>
    %23 = math.tanh %22 : vector<160x192xf32>
    %24 = vector.extract_strided_slice %21 {offsets = [0, 192], sizes = [160, 192], strides = [1, 1]} : vector<160x384xf32> to vector<160x192xf32>
    %25 = arith.negf %24 : vector<160x192xf32>
    %26 = math.exp %25 : vector<160x192xf32>
    %cst_7 = arith.constant 1.000000e+00 : f32
    %27 = vector.broadcast %cst_7 : f32 to vector<160x192xf32>
    %28 = arith.addf %27, %26 : vector<160x192xf32>
    %29 = arith.divf %27, %28 : vector<160x192xf32>
    %30 = arith.mulf %23, %29 : vector<160x192xf32>
    %c0_8 = arith.constant 0 : index
    %c0_9 = arith.constant 0 : index
    %31 = vector.load %arg5[%c0_8, %c0_9] : memref<1x192xbf16, #tpu.memory_space<vmem>>, vector<1x192xbf16>
    %32 = arith.extf %31 : vector<1x192xbf16> to vector<1x192xf32>
    %33 = vector.broadcast %32 : vector<1x192xf32> to vector<160x192xf32>
    %34 = arith.mulf %30, %33 : vector<160x192xf32>
    %cst_10 = arith.constant dense<0.000000e+00> : vector<160xf32>
    %35 = vector.multi_reduction <add>, %34, %cst_10 [1] : vector<160x192xf32> to vector<160xf32>
    %36 = vector.shape_cast %35 : vector<160xf32> to vector<160x1xf32>
    %cst_11 = arith.constant -1.000000e+30 : f32
    %37 = vector.broadcast %cst_11 : f32 to vector<160x1xf32>
    %38 = arith.select %12, %36, %37 : vector<160x1xi1>, vector<160x1xf32>
    %c0_12 = arith.constant 0 : index
    %c0_13 = arith.constant 0 : index
    %39 = vector.load %arg9[%c0_12, %c0_13] : memref<1x1xf32, #tpu.memory_space<vmem>>, vector<1x1xf32>
    %cst_14 = arith.constant dense<0xFF800000> : vector<1xf32>
    %40 = vector.multi_reduction <maximumf>, %38, %cst_14 [0] : vector<160x1xf32> to vector<1xf32>
    %41 = vector.shape_cast %40 : vector<1xf32> to vector<1x1xf32>
    %42 = arith.maximumf %39, %41 : vector<1x1xf32>
    %43 = arith.subf %39, %42 : vector<1x1xf32>
    %44 = math.exp %43 : vector<1x1xf32>
    %45 = vector.broadcast %42 : vector<1x1xf32> to vector<160x1xf32>
    %46 = arith.subf %38, %45 : vector<160x1xf32>
    %47 = math.exp %46 : vector<160x1xf32>
    %c0_15 = arith.constant 0 : index
    %c0_16 = arith.constant 0 : index
    %48 = vector.load %arg10[%c0_15, %c0_16] : memref<1x1xf32, #tpu.memory_space<vmem>>, vector<1x1xf32>
    %49 = arith.mulf %44, %48 : vector<1x1xf32>
    %cst_17 = arith.constant dense<0.000000e+00> : vector<1xf32>
    %50 = vector.multi_reduction <add>, %47, %cst_17 [0] : vector<160x1xf32> to vector<1xf32>
    %51 = vector.shape_cast %50 : vector<1xf32> to vector<1x1xf32>
    %52 = arith.addf %49, %51 : vector<1x1xf32>
    %c0_18 = arith.constant 0 : index
    %c0_19 = arith.constant 0 : index
    %53 = vector.load %arg10[%c0_18, %c0_19] : memref<1x1xf32, #tpu.memory_space<vmem>>, vector<1x1xf32>
    tpu.vector_store %arg10[%c0_18, %c0_19], %52 {strides = array<i32>} : memref<1x1xf32, #tpu.memory_space<vmem>>, vector<1x1xf32>,
    %54 = arith.truncf %47 : vector<160x1xf32> to vector<160x1xbf16>
    %cst_20 = arith.constant dense<0.000000e+00> : vector<1x768xf32>
    %55 = tpu.matmul %54, %16, %cst_20 {dimension_numbers = #tpu.dot_dimension_numbers<[0], [0], [1], [1], [0, 1, 1, 1], [], []>} : vector<160x1xbf16>, vector<160x768xbf16>, vector<1x768xf32> -> vector<1x768xf32>
    %56 = tpu.transpose %44, [1, 0] : vector<1x1xf32> -> vector<1x1xf32>
    %c0_21 = arith.constant 0 : index
    %c0_22 = arith.constant 0 : index
    %57 = vector.load %arg11[%c0_21, %c0_22] : memref<1x768xf32, #tpu.memory_space<vmem>>, vector<1x768xf32>
    %58 = vector.broadcast %56 : vector<1x1xf32> to vector<1x768xf32>
    %59 = arith.mulf %58, %57 : vector<1x768xf32>
    %60 = arith.addf %59, %55 : vector<1x768xf32>
    %c0_23 = arith.constant 0 : index
    %c0_24 = arith.constant 0 : index
    %61 = vector.load %arg11[%c0_23, %c0_24] : memref<1x768xf32, #tpu.memory_space<vmem>>, vector<1x768xf32>
    tpu.vector_store %arg11[%c0_23, %c0_24], %60 {strides = array<i32>} : memref<1x768xf32, #tpu.memory_space<vmem>>, vector<1x768xf32>,
    %c0_25 = arith.constant 0 : index
    %c0_26 = arith.constant 0 : index
    %62 = vector.load %arg9[%c0_25, %c0_26] : memref<1x1xf32, #tpu.memory_space<vmem>>, vector<1x1xf32>
    tpu.vector_store %arg9[%c0_25, %c0_26], %42 {strides = array<i32>} : memref<1x1xf32, #tpu.memory_space<vmem>>, vector<1x1xf32>,
    %c0_i32_27 = arith.constant 0 : i32
    %63 = arith.cmpi eq, %arg1, %c0_i32_27 : i32
    %64 = arith.extui %63 : i1 to i32
    %c0_i32_28 = arith.constant 0 : i32
    %65 = arith.cmpi ne, %64, %c0_i32_28 : i32
    scf.if %65 {
      %c0_29 = arith.constant 0 : index
      %c0_30 = arith.constant 0 : index
      %66 = vector.load %arg11[%c0_29, %c0_30] : memref<1x768xf32, #tpu.memory_space<vmem>>, vector<1x768xf32>
      %c0_31 = arith.constant 0 : index
      %c0_32 = arith.constant 0 : index
      %c0_33 = arith.constant 0 : index
      %67 = vector.load %arg6[%c0_31, %c0_32, %c0_33] : memref<1x1x768xf32, #tpu.memory_space<vmem>>, vector<1x1x768xf32>
      %68 = vector.shape_cast %67 : vector<1x1x768xf32> to vector<1x768xf32>
      %69 = vector.shape_cast %66 : vector<1x768xf32> to vector<1x1x768xf32>
      tpu.vector_store %arg6[%c0_31, %c0_32, %c0_33], %69 {strides = array<i32>} : memref<1x1x768xf32, #tpu.memory_space<vmem>>, vector<1x1x768xf32>,
      %c0_34 = arith.constant 0 : index
      %c0_35 = arith.constant 0 : index
      %70 = vector.load %arg9[%c0_34, %c0_35] : memref<1x1xf32, #tpu.memory_space<vmem>>, vector<1x1xf32>
      %c0_36 = arith.constant 0 : index
      %c0_37 = arith.constant 0 : index
      %c0_38 = arith.constant 0 : index
      %71 = vector.load %arg7[%c0_36, %c0_37, %c0_38] : memref<1x1x1xf32, #tpu.memory_space<vmem>>, vector<1x1x1xf32>
      %72 = vector.shape_cast %71 : vector<1x1x1xf32> to vector<1x1xf32>
      %73 = vector.shape_cast %70 : vector<1x1xf32> to vector<1x1x1xf32>
      tpu.vector_store %arg7[%c0_36, %c0_37, %c0_38], %73 {strides = array<i32>} : memref<1x1x1xf32, #tpu.memory_space<vmem>>, vector<1x1x1xf32>,
      %c0_39 = arith.constant 0 : index
      %c0_40 = arith.constant 0 : index
      %74 = vector.load %arg10[%c0_39, %c0_40] : memref<1x1xf32, #tpu.memory_space<vmem>>, vector<1x1xf32>
      %c0_41 = arith.constant 0 : index
      %c0_42 = arith.constant 0 : index
      %c0_43 = arith.constant 0 : index
      %75 = vector.load %arg8[%c0_41, %c0_42, %c0_43] : memref<1x1x1xf32, #tpu.memory_space<vmem>>, vector<1x1x1xf32>
      %76 = vector.shape_cast %75 : vector<1x1x1xf32> to vector<1x1xf32>
      %77 = vector.shape_cast %74 : vector<1x1xf32> to vector<1x1x1xf32>
      tpu.vector_store %arg8[%c0_41, %c0_42, %c0_43], %77 {strides = array<i32>} : memref<1x1x1xf32, #tpu.memory_space<vmem>>, vector<1x1x1xf32>,
    } else {
    }
    return
  }
  func.func @transform_0(%arg0: i32, %arg1: i32) -> (i32, i32) {
    %c1_i32 = arith.constant 1 : i32
    %0 = arith.muli %arg0, %c1_i32 : i32
    %1 = arith.addi %0, %arg1 : i32
    %c1_i32_0 = arith.constant 1 : i32
    %2 = arith.minsi %1, %c1_i32_0 : i32
    %c0_i32 = arith.constant 0 : i32
    %c0_i32_1 = arith.constant 0 : i32
    return %2, %c0_i32 : i32, i32
  }
  func.func @transform_1(%arg0: i32, %arg1: i32) -> (i32, i32) {
    %c0_i32 = arith.constant 0 : i32
    %c0_i32_0 = arith.constant 0 : i32
    %c0_i32_1 = arith.constant 0 : i32
    return %c0_i32, %c0_i32_0 : i32, i32
  }
  func.func @transform_2(%arg0: i32, %arg1: i32) -> (i32, i32) {
    %c0_i32 = arith.constant 0 : i32
    %c0_i32_0 = arith.constant 0 : i32
    %c0_i32_1 = arith.constant 0 : i32
    return %c0_i32, %c0_i32_0 : i32, i32
  }
  func.func @transform_3(%arg0: i32, %arg1: i32) -> (i32, i32) {
    %c0_i32 = arith.constant 0 : i32
    %c0_i32_0 = arith.constant 0 : i32
    %c0_i32_1 = arith.constant 0 : i32
    return %c0_i32, %c0_i32_0 : i32, i32
  }
  func.func @transform_4(%arg0: i32, %arg1: i32) -> (i32, i32, i32) {
    %c0_i32 = arith.constant 0 : i32
    %c0_i32_0 = arith.constant 0 : i32
    %c0_i32_1 = arith.constant 0 : i32
    return %arg0, %c0_i32, %c0_i32_0 : i32, i32, i32
  }
  func.func @transform_5(%arg0: i32, %arg1: i32) -> (i32, i32, i32) {
    %c0_i32 = arith.constant 0 : i32
    %c0_i32_0 = arith.constant 0 : i32
    %c0_i32_1 = arith.constant 0 : i32
    return %arg0, %c0_i32, %c0_i32_0 : i32, i32, i32
  }
  func.func @transform_6(%arg0: i32, %arg1: i32) -> (i32, i32, i32) {
    %c0_i32 = arith.constant 0 : i32
    %c0_i32_0 = arith.constant 0 : i32
    %c0_i32_1 = arith.constant 0 : i32
    return %arg0, %c0_i32, %c0_i32_0 : i32, i32, i32
  }
}

</mosaic_0001>

<llo_original>
// kernel: _lambda_.1
$region0: #{_lambda_.1}
  #allocation0 [shape = 'u32[]', space=smem, size = 0x4, offset = 0x4, fixed_abs, tag = 'smem constant byte address 0x4 - core index']
  #allocation1 [shape = 'u32[144,128]{1,0:T(1,128)}', space=vmem, size = 0x12000, scoped, tag = 'internal scratch']
  #allocation2 [shape = 'f32[1,1]{1,0:T(1,128)}', space=vmem, size = 0x200, scoped, tag = 'scratch operand']
  #allocation3 [shape = 'f32[1,1]{1,0:T(1,128)}', space=vmem, size = 0x200, scoped, tag = 'scratch operand']
  #allocation4 [shape = 'f32[1,768]{1,0:T(1,128)}', space=vmem, size = 0xc00, scoped, tag = 'scratch operand']
  %s0 = inlined_call_operand.vmem [shape: f32[300,768], index: 0, kind: input, shape index: {}]
  %s1 = inlined_call_operand.vmem [shape: bf16[768,384], index: 1, kind: input, shape index: {}]
  %s2 = inlined_call_operand.vmem [shape: f32[1,384], index: 2, kind: input, shape index: {}]
  %s3 = inlined_call_operand.vmem [shape: bf16[1,192], index: 3, kind: input, shape index: {}]
  %s4 = inlined_call_operand.vmem [shape: f32[2,1,768], index: 4, kind: output, shape index: {0}]
  %s5 = inlined_call_operand.vmem [shape: f32[2,1,1], index: 5, kind: output, shape index: {1}]
  %s6 = inlined_call_operand.vmem [shape: f32[2,1,1], index: 6, kind: output, shape index: {2}]
  %7 = xla_tuple %s4, %s5, %s6
  %s8 = sld [smem:[#allocation0]]
  $region73: #{_lambda_.1} parent=0
    _
  %s10 = ssub.s32 1, %s8
  %s11 = scalar_select 0, %s10, %s8
  loop: start=0, step=1, limit=4
  $region2: #{_lambda_.1} parent=0 // loop_pre_header
    _
  $region3: #{_lambda_.1} parent=0 // loop_header
    %s13 = sphi 0, %s17
    %p14 = scmp.ge.s32.totalorder %s13, 4
    %s20 = sphi 0, %s32
    %s21 = sphi 0, %s28
    %s22 = sphi 0, %s20
    %s23 = sphi 0, %s21
    %s24 = sphi 0, %s22
    %s25 = sphi 0, %s23
    %s41 = sphi 0, %s43
    %s44 = sphi 0, %s41
    %s45 = sphi 0, %s44
    %s61 = sphi 0, %s45
    %s65 = sphi 0, %s65
    %s67 = sphi 0, %s65
    %s68 = sphi 0, %s67
    %s82 = sphi 0, %s68
    %s86 = sphi 0, %s86
    %s88 = sphi 0, %s86
    %s89 = sphi 0, %s88
    %s103 = sphi 0, %s89
    %s107 = sphi 0, %s107
    %s109 = sphi 0, %s107
    %s110 = sphi 0, %s109
    %s124 = sphi 0, %s110
    %s130 = sphi 0, %s132
    %s133 = sphi 0, %s130
    %s134 = sphi 0, %s133
    %s150 = sphi 0, %s134
    %s156 = sphi 0, %s158
    %s159 = sphi 0, %s156
    %s160 = sphi 0, %s159
    %s176 = sphi 0, %s160
    %s182 = sphi 0, %s184
    %s185 = sphi 0, %s182
    %s186 = sphi 0, %s185
    %s202 = sphi 0, %s186
  $region4: #{_lambda_.1} parent=0 // loop_header_branch
    %16 = sbr.rel (%p14) target = $region8
  $region5: #{_lambda_.1} parent=0 // loop_body
    %s18 = ssub.s32 %s13, 1
    %s19 = ssub.s32 %s13, 2
    %s26 = sadd.s32 1, %s21
    %p27 = scmp.ge.s32.totalorder %s26, 1
    %s28 = scalar_select %p27, 0, %s26
    %s29 = sadd.s32 1, %s20
    %s30 = scalar_select %p27, %s29, %s20
    %p31 = scmp.ge.s32.totalorder %s30, 2
    %s32 = scalar_select %p31, 0, %s30
    %s33 = sadd.s32 %s20, %s21
    %p34 = scmp.lt.s32.totalorder %s33, 1
    %s35 = scalar_select %p34, %s33, 1
    %s36 = sadd.s32 %s32, %s28
    %p37 = scmp.lt.s32.totalorder %s36, 1
    %s38 = scalar_select %p37, %s36, 1
    %s39 = ssub.s32 %s35, %s38
    %p40 = scmp.eq.s32.totalorder %s39, 0
    %s42 = sadd.s32 %s41, 1
    %s43 = scalar_select %p40, %s41, %s42
    %p46 = pneg %p40
    %p47 = scmp.eq.s32.totalorder %s13, 1
    %p48 = por %p46, %p47
    %p49 = scmp.ne.s32.totalorder %s41, %s44
    %p50 = scmp.eq.s32.totalorder %s13, 0
    %p51 = por %p49, %p50
    %p52 = scmp.ne.s32.totalorder %s41, %s44
    %p53 = scmp.eq.s32.totalorder %s18, 1
    %p54 = por %p52, %p53
    %p55 = scmp.ne.s32.totalorder %s44, %s45
    %p56 = scmp.eq.s32.totalorder %s18, 0
    %p57 = por %p55, %p56
    %p58 = scmp.ne.s32.totalorder %s44, %s45
    %p59 = scmp.eq.s32.totalorder %s19, 1
    %p60 = por %p58, %p59
    %p62 = scmp.ne.s32.totalorder %s45, %s61
    %p63 = scmp.eq.s32.totalorder %s19, 0
    %p64 = por %p62, %p63
    %s66 = sadd.s32 %s65, 1
    %p69 = scmp.eq.s32.totalorder %s13, 1
    %p70 = scmp.ne.s32.totalorder %s65, %s67
    %p71 = scmp.eq.s32.totalorder %s13, 0
    %p72 = por %p70, %p71
    %p73 = scmp.ne.s32.totalorder %s65, %s67
    %p74 = scmp.eq.s32.totalorder %s18, 1
    %p75 = por %p73, %p74
    %p76 = scmp.ne.s32.totalorder %s67, %s68
    %p77 = scmp.eq.s32.totalorder %s18, 0
    %p78 = por %p76, %p77
    %p79 = scmp.ne.s32.totalorder %s67, %s68
    %p80 = scmp.eq.s32.totalorder %s19, 1
    %p81 = por %p79, %p80
    %p83 = scmp.ne.s32.totalorder %s68, %s82
    %p84 = scmp.eq.s32.totalorder %s19, 0
    %p85 = por %p83, %p84
    %s87 = sadd.s32 %s86, 1
    %p90 = scmp.eq.s32.totalorder %s13, 1
    %p91 = scmp.ne.s32.totalorder %s86, %s88
    %p92 = scmp.eq.s32.totalorder %s13, 0
    %p93 = por %p91, %p92
    %p94 = scmp.ne.s32.totalorder %s86, %s88
    %p95 = scmp.eq.s32.totalorder %s18, 1
    %p96 = por %p94, %p95
    %p97 = scmp.ne.s32.totalorder %s88, %s89
    %p98 = scmp.eq.s32.totalorder %s18, 0
    %p99 = por %p97, %p98
    %p100 = scmp.ne.s32.totalorder %s88, %s89
    %p101 = scmp.eq.s32.totalorder %s19, 1
    %p102 = por %p100, %p101
    %p104 = scmp.ne.s32.totalorder %s89, %s103
    %p105 = scmp.eq.s32.totalorder %s19, 0
    %p106 = por %p104, %p105
    %s108 = sadd.s32 %s107, 1
    %p111 = scmp.eq.s32.totalorder %s13, 1
    %p112 = scmp.ne.s32.totalorder %s107, %s109
    %p113 = scmp.eq.s32.totalorder %s13, 0
    %p114 = por %p112, %p113
    %p115 = scmp.ne.s32.totalorder %s107, %s109
    %p116 = scmp.eq.s32.totalorder %s18, 1
    %p117 = por %p115, %p116
    %p118 = scmp.ne.s32.totalorder %s109, %s110
    %p119 = scmp.eq.s32.totalorder %s18, 0
    %p120 = por %p118, %p119
    %p121 = scmp.ne.s32.totalorder %s109, %s110
    %p122 = scmp.eq.s32.totalorder %s19, 1
    %p123 = por %p121, %p122
    %p125 = scmp.ne.s32.totalorder %s110, %s124
    %p126 = scmp.eq.s32.totalorder %s19, 0
    %p127 = por %p125, %p126
    %s128 = ssub.s32 %s20, %s32
    %p129 = scmp.eq.s32.totalorder %s128, 0
    %s131 = sadd.s32 %s130, 1
    %s132 = scalar_select %p129, %s130, %s131
    %p135 = pneg %p129
    %p136 = scmp.eq.s32.totalorder %s13, 1
    %p137 = por %p135, %p136
    %p138 = scmp.ne.s32.totalorder %s130, %s133
    %p139 = scmp.eq.s32.totalorder %s13, 0
    %p140 = por %p138, %p139
    %p141 = scmp.ne.s32.totalorder %s130, %s133
    %p142 = scmp.eq.s32.totalorder %s18, 1
    %p143 = por %p141, %p142
    %p144 = scmp.ne.s32.totalorder %s133, %s134
    %p145 = scmp.eq.s32.totalorder %s18, 0
    %p146 = por %p144, %p145
    %p147 = scmp.ne.s32.totalorder %s133, %s134
    %p148 = scmp.eq.s32.totalorder %s19, 1
    %p149 = por %p147, %p148
    %p151 = scmp.ne.s32.totalorder %s134, %s150
    %p152 = scmp.eq.s32.totalorder %s19, 0
    %p153 = por %p151, %p152
    %s154 = ssub.s32 %s20, %s32
    %p155 = scmp.eq.s32.totalorder %s154, 0
    %s157 = sadd.s32 %s156, 1
    %s158 = scalar_select %p155, %s156, %s157
    %p161 = pneg %p155
    %p162 = scmp.eq.s32.totalorder %s13, 1
    %p163 = por %p161, %p162
    %p164 = scmp.ne.s32.totalorder %s156, %s159
    %p165 = scmp.eq.s32.totalorder %s13, 0
    %p166 = por %p164, %p165
    %p167 = scmp.ne.s32.totalorder %s156, %s159
    %p168 = scmp.eq.s32.totalorder %s18, 1
    %p169 = por %p167, %p168
    %p170 = scmp.ne.s32.totalorder %s159, %s160
    %p171 = scmp.eq.s32.totalorder %s18, 0
    %p172 = por %p170, %p171
    %p173 = scmp.ne.s32.totalorder %s159, %s160
    %p174 = scmp.eq.s32.totalorder %s19, 1
    %p175 = por %p173, %p174
    %p177 = scmp.ne.s32.totalorder %s160, %s176
    %p178 = scmp.eq.s32.totalorder %s19, 0
    %p179 = por %p177, %p178
    %s180 = ssub.s32 %s20, %s32
    %p181 = scmp.eq.s32.totalorder %s180, 0
    %s183 = sadd.s32 %s182, 1
    %s184 = scalar_select %p181, %s182, %s183
    %p187 = pneg %p181
    %p188 = scmp.eq.s32.totalorder %s13, 1
    %p189 = por %p187, %p188
    %p190 = scmp.ne.s32.totalorder %s182, %s185
    %p191 = scmp.eq.s32.totalorder %s13, 0
    %p192 = por %p190, %p191
    %p193 = scmp.ne.s32.totalorder %s182, %s185
    %p194 = scmp.eq.s32.totalorder %s18, 1
    %p195 = por %p193, %p194
    %p196 = scmp.ne.s32.totalorder %s185, %s186
    %p197 = scmp.eq.s32.totalorder %s18, 0
    %p198 = por %p196, %p197
    %p199 = scmp.ne.s32.totalorder %s185, %s186
    %p200 = scmp.eq.s32.totalorder %s19, 1
    %p201 = por %p199, %p200
    %p203 = scmp.ne.s32.totalorder %s186, %s202
    %p204 = scmp.eq.s32.totalorder %s19, 0
    %p205 = por %p203, %p204
    %p206 = scmp.le.s32.totalorder 1, %s13
    %p207 = scmp.lt.s32.totalorder %s13, 3
    %p208 = pnand %p206, %p207
    %p209 = pneg %p208
    // Predicated region
    $region9: #{_lambda_.1} parent=5 // pred_check
      _
    $region10: #{_lambda_.1} parent=5 // pred_check_branch
      %211 = sbr.rel (%p208) target = $region12
    $region11: #{_lambda_.1} parent=5 // pred_region
      %s212 = ssub.s32 %s13, 1
      // Predicated region
      $region13: #{_lambda_.1} parent=11 // pred_check
        %p213 = pneg %p78
      $region14: #{_lambda_.1} parent=11 // pred_check_branch
        %215 = sbr.rel (%p213) target = $region16
      $region15: #{_lambda_.1} parent=11 // pred_region
        _
      $region16: #{_lambda_.1} parent=11 // pred_fallthru
        _
      // Predicated region
      $region17: #{_lambda_.1} parent=11 // pred_check
        %p216 = pneg %p99
      $region18: #{_lambda_.1} parent=11 // pred_check_branch
        %218 = sbr.rel (%p216) target = $region20
      $region19: #{_lambda_.1} parent=11 // pred_region
        _
      $region20: #{_lambda_.1} parent=11 // pred_fallthru
        _
      // Predicated region
      $region21: #{_lambda_.1} parent=11 // pred_check
        %p219 = pneg %p120
      $region22: #{_lambda_.1} parent=11 // pred_check_branch
        %221 = sbr.rel (%p219) target = $region24
      $region23: #{_lambda_.1} parent=11 // pred_region
        _
      $region24: #{_lambda_.1} parent=11 // pred_fallthru
        _
    $region12: #{_lambda_.1} parent=5 // pred_fallthru
      _
    %p222 = scmp.lt.s32.totalorder %s13, 2
    // Predicated region
    $region25: #{_lambda_.1} parent=5 // pred_check
      %p223 = pneg %p222
    $region26: #{_lambda_.1} parent=5 // pred_check_branch
      %225 = sbr.rel (%p223) target = $region28
    $region27: #{_lambda_.1} parent=5 // pred_region
      // Predicated region
      $region29: #{_lambda_.1} parent=27 // pred_check
        %p226 = pneg %p51
      $region30: #{_lambda_.1} parent=27 // pred_check_branch
        %228 = sbr.rel (%p226) target = $region32
      $region31: #{_lambda_.1} parent=27 // pred_region
        %s229 = sadd.s32 %s20, %s21
        %p230 = scmp.lt.s32.totalorder %s229, 1
        %s231 = scalar_select %p230, %s229, 1
        %s232 = smul.u32 20, %s231
        %s233 = ssub.s32 38, %s232
        %p234 = scmp.lt.s32.totalorder %s233, 20
        %s235 = scalar_select %p234, %s233, 20
        %s236 = smul.u32 128, %s235
        %s237 = smul.u32 %s236, 6
        %p238 = scmp.lt.s32.totalorder %s232, 37
        %s239 = scalar_select %p238, %s232, 37
        %s240 = smul.addr %s239, 6
        %s241 = smul.addr %s240, 8
        %s242 = scalar_lea.vmem %s0, %s241
        %s243 = sadd.s32 %s20, %s21
        %p244 = scmp.lt.s32.totalorder %s243, 1
        %s245 = scalar_select %p244, %s243, 1
        %s246 = smul.u32 20, %s245
        %s247 = ssub.s32 38, %s246
        %p248 = scmp.lt.s32.totalorder %s247, 20
        %s249 = scalar_select %p248, %s247, 20
        %s250 = smul.u32 128, %s249
        %s251 = smul.u32 %s250, 6
      $region32: #{_lambda_.1} parent=27 // pred_fallthru
        _
    $region28: #{_lambda_.1} parent=5 // pred_fallthru
      _
    %p252 = scmp.le.s32.totalorder 1, %s13
    %p253 = scmp.lt.s32.totalorder %s13, 3
    %p254 = pnand %p252, %p253
    %p255 = pneg %p254
    // Predicated region
    $region33: #{_lambda_.1} parent=5 // pred_check
      _
    $region34: #{_lambda_.1} parent=5 // pred_check_branch
      %257 = sbr.rel (%p254) target = $region36
    $region35: #{_lambda_.1} parent=5 // pred_region
      %s258 = ssub.s32 %s13, 1
      %s259 = sadd.s32 %s22, %s23
      %p260 = scmp.lt.s32.totalorder %s259, 1
      %s261 = scalar_select %p260, %s259, 1
      %s262 = smul.u32 20, %s261
      %s263 = ssub.s32 38, %s262
      %p264 = scmp.lt.s32.totalorder %s263, 20
      %s265 = scalar_select %p264, %s263, 20
      %s266 = smul.u32 128, %s265
      %s267 = smul.u32 %s266, 6
      %p268 = scmp.lt.s32.totalorder %s262, 37
      %s269 = scalar_select %p268, %s262, 37
      %s270 = smul.addr %s269, 6
      %s271 = smul.addr %s270, 8
      %s272 = scalar_lea.vmem %s0, %s271
      %p273 = pneg %p57
      %p274 = pneg %p54
      %p275 = pneg %p78
      %p276 = pneg %p75
      %p277 = pneg %p99
      %p278 = pneg %p96
      %p279 = pneg %p120
      %p280 = pneg %p117
      %p281 = pneg %p146
      %p282 = pneg %p143
      %p283 = scmp.lt.s32.totalorder %s22, 1
      %s284 = scalar_select %p283, %s22, 1
      %s285 = smul.addr %s284, 6
      %s286 = scalar_lea.vmem %s4, %s285
      %p287 = pneg %p172
      %p288 = pneg %p169
      %p289 = scmp.lt.s32.totalorder %s22, 1
      %s290 = scalar_select %p289, %s22, 1
      %s291 = scalar_lea.vmem %s5, %s290
      %p292 = pneg %p198
      %p293 = pneg %p195
      %p294 = scmp.lt.s32.totalorder %s22, 1
      %s295 = scalar_select %p294, %s22, 1
      %s296 = scalar_lea.vmem %s6, %s295
      %s297 = sadd.s32 %s22, %s23
      %p298 = scmp.lt.s32.totalorder %s297, 1
      %s299 = scalar_select %p298, %s297, 1
      %s300 = smul.u32 20, %s299
      %s301 = ssub.s32 38, %s300
      %p302 = scmp.lt.s32.totalorder %s301, 20
      %s303 = scalar_select %p302, %s301, 20
      %s304 = smul.u32 128, %s303
      %s305 = smul.u32 %s304, 6
      %p306 = scmp.lt.s32.totalorder %s300, 37
      %s307 = scalar_select %p306, %s300, 37
      %s308 = smul.addr %s307, 6
      %s309 = smul.addr %s308, 8
      %s310 = scalar_lea.vmem %s0, %s309
      %s311 = sadd.s32 %s22, %s23
      %p312 = scmp.lt.s32.totalorder %s311, 1
      %s313 = scalar_select %p312, %s311, 1
      %s314 = smul.u32 20, %s313
      %s315 = ssub.s32 38, %s314
      %p316 = scmp.lt.s32.totalorder %s315, 20
      %s317 = scalar_select %p316, %s315, 20
      %s318 = smul.u32 128, %s317
      %s319 = smul.u32 %s318, 6
      %p320 = scmp.lt.s32.totalorder %s22, 1
      %s321 = scalar_select %p320, %s22, 1
      %s322 = smul.addr %s321, 6
      %s323 = scalar_lea.vmem %s4, %s322
      %p324 = scmp.lt.s32.totalorder %s22, 1
      %s325 = scalar_select %p324, %s22, 1
      %s326 = scalar_lea.vmem %s5, %s325
      %p327 = scmp.lt.s32.totalorder %s22, 1
      %s328 = scalar_select %p327, %s22, 1
      %s329 = scalar_lea.vmem %s6, %s328
      %p333 = scmp.eq.s32.totalorder %s23, 0
      // Predicated region
      $region37: #{_lambda_.1} parent=35 // pred_check
        %p334 = pneg %p333
      $region38: #{_lambda_.1} parent=35 // pred_check_branch
        %336 = sbr.rel (%p334) target = $region40
      $region39: #{_lambda_.1} parent=35 // pred_region
        %vm337 = vcmask 0
        %338 = vst.msk [vmem:[#allocation2] sm:$0x1] %vm337, -1e+30
        %339 = vst.msk [vmem:[#allocation3] sm:$0x1] %vm337, 0.0
        %v340 = vlaneseq
        %vm341 = vcmp.ge.s32.totalorder %v340, 0
        %vm342 = vcmp.lt.s32.totalorder %v340, 768
        %vm343 = vmand %vm341, %vm342
        %344 = vst.msk [vmem:[#allocation4] sm:$0x3f] %vm343, 0.0
      $region40: #{_lambda_.1} parent=35 // pred_fallthru
        _
      %v345 = vld [vmem:[%s310] sm:$0xff]
      %v346 = vld [vmem:[%s310 + $0x8] sm:$0xff]
      %v347 = vld [vmem:[%s310 + $0x10] sm:$0xff]
      %v348 = vld [vmem:[%s310 + $0x18] sm:$0xff]
      %v349 = vld [vmem:[%s310 + $0x20] sm:$0xff]
      %v350 = vld [vmem:[%s310 + $0x28] sm:$0xff]
      %v351 = vld [vmem:[%s310 + $0x30] sm:$0xff]
      %v352 = vld [vmem:[%s310 + $0x38] sm:$0xff]
      %v353 = vld [vmem:[%s310 + $0x40] sm:$0xff]
      %v354 = vld [vmem:[%s310 + $0x48] sm:$0xff]
      %v355 = vld [vmem:[%s310 + $0x50] sm:$0xff]
      %v356 = vld [vmem:[%s310 + $0x58] sm:$0xff]
      %v357 = vld [vmem:[%s310 + $0x60] sm:$0xff]
      %v358 = vld [vmem:[%s310 + $0x68] sm:$0xff]
      %v359 = vld [vmem:[%s310 + $0x70] sm:$0xff]
      %v360 = vld [vmem:[%s310 + $0x78] sm:$0xff]
      %v361 = vld [vmem:[%s310 + $0x80] sm:$0xff]
      %v362 = vld [vmem:[%s310 + $0x88] sm:$0xff]
      %v363 = vld [vmem:[%s310 + $0x90] sm:$0xff]
      %v364 = vld [vmem:[%s310 + $0x98] sm:$0xff]
      %v365 = vld [vmem:[%s310 + $0xa0] sm:$0xff]
      %v366 = vld [vmem:[%s310 + $0xa8] sm:$0xff]
      %v367 = vld [vmem:[%s310 + $0xb0] sm:$0xff]
      %v368 = vld [vmem:[%s310 + $0xb8] sm:$0xff]
      %v369 = vld [vmem:[%s310 + $0xc0] sm:$0xff]
      %v370 = vld [vmem:[%s310 + $0xc8] sm:$0xff]
      %v371 = vld [vmem:[%s310 + $0xd0] sm:$0xff]
      %v372 = vld [vmem:[%s310 + $0xd8] sm:$0xff]
      %v373 = vld [vmem:[%s310 + $0xe0] sm:$0xff]
      %v374 = vld [vmem:[%s310 + $0xe8] sm:$0xff]
      %v375 = vld [vmem:[%s310 + $0xf0] sm:$0xff]
      %v376 = vld [vmem:[%s310 + $0xf8] sm:$0xff]
      %v377 = vld [vmem:[%s310 + $0x100] sm:$0xff]
      %v378 = vld [vmem:[%s310 + $0x108] sm:$0xff]
      %v379 = vld [vmem:[%s310 + $0x110] sm:$0xff]
      %v380 = vld [vmem:[%s310 + $0x118] sm:$0xff]
      %v381 = vld [vmem:[%s310 + $0x120] sm:$0xff]
      %v382 = vld [vmem:[%s310 + $0x128] sm:$0xff]
      %v383 = vld [vmem:[%s310 + $0x130] sm:$0xff]
      %v384 = vld [vmem:[%s310 + $0x138] sm:$0xff]
      %v385 = vld [vmem:[%s310 + $0x140] sm:$0xff]
      %v386 = vld [vmem:[%s310 + $0x148] sm:$0xff]
      %v387 = vld [vmem:[%s310 + $0x150] sm:$0xff]
      %v388 = vld [vmem:[%s310 + $0x158] sm:$0xff]
      %v389 = vld [vmem:[%s310 + $0x160] sm:$0xff]
      %v390 = vld [vmem:[%s310 + $0x168] sm:$0xff]
      %v391 = vld [vmem:[%s310 + $0x170] sm:$0xff]
      %v392 = vld [vmem:[%s310 + $0x178] sm:$0xff]
      %v393 = vld [vmem:[%s310 + $0x180] sm:$0xff]
      %v394 = vld [vmem:[%s310 + $0x188] sm:$0xff]
      %v395 = vld [vmem:[%s310 + $0x190] sm:$0xff]
      %v396 = vld [vmem:[%s310 + $0x198] sm:$0xff]
      %v397 = vld [vmem:[%s310 + $0x1a0] sm:$0xff]
      %v398 = vld [vmem:[%s310 + $0x1a8] sm:$0xff]
      %v399 = vld [vmem:[%s310 + $0x1b0] sm:$0xff]
      %v400 = vld [vmem:[%s310 + $0x1b8] sm:$0xff]
      %v401 = vld [vmem:[%s310 + $0x1c0] sm:$0xff]
      %v402 = vld [vmem:[%s310 + $0x1c8] sm:$0xff]
      %v403 = vld [vmem:[%s310 + $0x1d0] sm:$0xff]
      %v404 = vld [vmem:[%s310 + $0x1d8] sm:$0xff]
      %v405 = vld [vmem:[%s310 + $0x1e0] sm:$0xff]
      %v406 = vld [vmem:[%s310 + $0x1e8] sm:$0xff]
      %v407 = vld [vmem:[%s310 + $0x1f0] sm:$0xff]
      %v408 = vld [vmem:[%s310 + $0x1f8] sm:$0xff]
      %v409 = vld [vmem:[%s310 + $0x200] sm:$0xff]
      %v410 = vld [vmem:[%s310 + $0x208] sm:$0xff]
      %v411 = vld [vmem:[%s310 + $0x210] sm:$0xff]
      %v412 = vld [vmem:[%s310 + $0x218] sm:$0xff]
      %v413 = vld [vmem:[%s310 + $0x220] sm:$0xff]
      %v414 = vld [vmem:[%s310 + $0x228] sm:$0xff]
      %v415 = vld [vmem:[%s310 + $0x230] sm:$0xff]
      %v416 = vld [vmem:[%s310 + $0x238] sm:$0xff]
      %v417 = vld [vmem:[%s310 + $0x240] sm:$0xff]
      %v418 = vld [vmem:[%s310 + $0x248] sm:$0xff]
      %v419 = vld [vmem:[%s310 + $0x250] sm:$0xff]
      %v420 = vld [vmem:[%s310 + $0x258] sm:$0xff]
      %v421 = vld [vmem:[%s310 + $0x260] sm:$0xff]
      %v422 = vld [vmem:[%s310 + $0x268] sm:$0xff]
      %v423 = vld [vmem:[%s310 + $0x270] sm:$0xff]
      %v424 = vld [vmem:[%s310 + $0x278] sm:$0xff]
      %v425 = vld [vmem:[%s310 + $0x280] sm:$0xff]
      %v426 = vld [vmem:[%s310 + $0x288] sm:$0xff]
      %v427 = vld [vmem:[%s310 + $0x290] sm:$0xff]
      %v428 = vld [vmem:[%s310 + $0x298] sm:$0xff]
      %v429 = vld [vmem:[%s310 + $0x2a0] sm:$0xff]
      %v430 = vld [vmem:[%s310 + $0x2a8] sm:$0xff]
      %v431 = vld [vmem:[%s310 + $0x2b0] sm:$0xff]
      %v432 = vld [vmem:[%s310 + $0x2b8] sm:$0xff]
      %v433 = vld [vmem:[%s310 + $0x2c0] sm:$0xff]
      %v434 = vld [vmem:[%s310 + $0x2c8] sm:$0xff]
      %v435 = vld [vmem:[%s310 + $0x2d0] sm:$0xff]
      %v436 = vld [vmem:[%s310 + $0x2d8] sm:$0xff]
      %v437 = vld [vmem:[%s310 + $0x2e0] sm:$0xff]
      %v438 = vld [vmem:[%s310 + $0x2e8] sm:$0xff]
      %v439 = vld [vmem:[%s310 + $0x2f0] sm:$0xff]
      %v440 = vld [vmem:[%s310 + $0x2f8] sm:$0xff]
      %v441 = vld [vmem:[%s310 + $0x300] sm:$0xff]
      %v442 = vld [vmem:[%s310 + $0x308] sm:$0xff]
      %v443 = vld [vmem:[%s310 + $0x310] sm:$0xff]
      %v444 = vld [vmem:[%s310 + $0x318] sm:$0xff]
      %v445 = vld [vmem:[%s310 + $0x320] sm:$0xff]
      %v446 = vld [vmem:[%s310 + $0x328] sm:$0xff]
      %v447 = vld [vmem:[%s310 + $0x330] sm:$0xff]
      %v448 = vld [vmem:[%s310 + $0x338] sm:$0xff]
      %v449 = vld [vmem:[%s310 + $0x340] sm:$0xff]
      %v450 = vld [vmem:[%s310 + $0x348] sm:$0xff]
      %v451 = vld [vmem:[%s310 + $0x350] sm:$0xff]
      %v452 = vld [vmem:[%s310 + $0x358] sm:$0xff]
      %v453 = vld [vmem:[%s310 + $0x360] sm:$0xff]
      %v454 = vld [vmem:[%s310 + $0x368] sm:$0xff]
      %v455 = vld [vmem:[%s310 + $0x370] sm:$0xff]
      %v456 = vld [vmem:[%s310 + $0x378] sm:$0xff]
      %v457 = vld [vmem:[%s310 + $0x380] sm:$0xff]
      %v458 = vld [vmem:[%s310 + $0x388] sm:$0xff]
      %v459 = vld [vmem:[%s310 + $0x390] sm:$0xff]
      %v460 = vld [vmem:[%s310 + $0x398] sm:$0xff]
      %v461 = vld [vmem:[%s310 + $0x3a0] sm:$0xff]
      %v462 = vld [vmem:[%s310 + $0x3a8] sm:$0xff]
      %v463 = vld [vmem:[%s310 + $0x3b0] sm:$0xff]
      %v464 = vld [vmem:[%s310 + $0x3b8] sm:$0xff]
      %v465 = vpack.c.bf16 %v351, %v345
      %v466 = vpack.c.bf16 %v352, %v346
      %v467 = vpack.c.bf16 %v353, %v347
      %v468 = vpack.c.bf16 %v354, %v348
      %v469 = vpack.c.bf16 %v355, %v349
      %v470 = vpack.c.bf16 %v356, %v350
      %v471 = vpack.c.bf16 %v363, %v357
      %v472 = vpack.c.bf16 %v364, %v358
      %v473 = vpack.c.bf16 %v365, %v359
      %v474 = vpack.c.bf16 %v366, %v360
      %v475 = vpack.c.bf16 %v367, %v361
      %v476 = vpack.c.bf16 %v368, %v362
      %v477 = vpack.c.bf16 %v375, %v369
      %v478 = vpack.c.bf16 %v376, %v370
      %v479 = vpack.c.bf16 %v377, %v371
      %v480 = vpack.c.bf16 %v378, %v372
      %v481 = vpack.c.bf16 %v379, %v373
      %v482 = vpack.c.bf16 %v380, %v374
      %v483 = vpack.c.bf16 %v387, %v381
      %v484 = vpack.c.bf16 %v388, %v382
      %v485 = vpack.c.bf16 %v389, %v383
      %v486 = vpack.c.bf16 %v390, %v384
      %v487 = vpack.c.bf16 %v391, %v385
      %v488 = vpack.c.bf16 %v392, %v386
      %v489 = vpack.c.bf16 %v399, %v393
      %v490 = vpack.c.bf16 %v400, %v394
      %v491 = vpack.c.bf16 %v401, %v395
      %v492 = vpack.c.bf16 %v402, %v396
      %v493 = vpack.c.bf16 %v403, %v397
      %v494 = vpack.c.bf16 %v404, %v398
      %v495 = vpack.c.bf16 %v411, %v405
      %v496 = vpack.c.bf16 %v412, %v406
      %v497 = vpack.c.bf16 %v413, %v407
      %v498 = vpack.c.bf16 %v414, %v408
      %v499 = vpack.c.bf16 %v415, %v409
      %v500 = vpack.c.bf16 %v416, %v410
      %v501 = vpack.c.bf16 %v423, %v417
      %v502 = vpack.c.bf16 %v424, %v418
      %v503 = vpack.c.bf16 %v425, %v419
      %v504 = vpack.c.bf16 %v426, %v420
      %v505 = vpack.c.bf16 %v427, %v421
      %v506 = vpack.c.bf16 %v428, %v422
      %v507 = vpack.c.bf16 %v435, %v429
      %v508 = vpack.c.bf16 %v436, %v430
      %v509 = vpack.c.bf16 %v437, %v431
      %v510 = vpack.c.bf16 %v438, %v432
      %v511 = vpack.c.bf16 %v439, %v433
      %v512 = vpack.c.bf16 %v440, %v434
      %v513 = vpack.c.bf16 %v447, %v441
      %v514 = vpack.c.bf16 %v448, %v442
      %v515 = vpack.c.bf16 %v449, %v443
      %v516 = vpack.c.bf16 %v450, %v444
      %v517 = vpack.c.bf16 %v451, %v445
      %v518 = vpack.c.bf16 %v452, %v446
      %v519 = vpack.c.bf16 %v459, %v453
      %v520 = vpack.c.bf16 %v460, %v454
      %v521 = vpack.c.bf16 %v461, %v455
      %v522 = vpack.c.bf16 %v462, %v456
      %v523 = vpack.c.bf16 %v463, %v457
      %v524 = vpack.c.bf16 %v464, %v458
      %s525 = sadd.s32 %s22, %s23
      %s526 = smul.u32 %s525, 160
      %v527 = vlaneseq
      %v528 = vshrl.u32 %v527, 7
      %v529 = vadd.s32 %v528, 8
      %v530 = vadd.s32 %v528, 16
      %v531 = vadd.s32 %v528, 24
      %v532 = vadd.s32 %v528, 32
      %v533 = vadd.s32 %v528, 40
      %v534 = vadd.s32 %v528, 48
      %v535 = vadd.s32 %v528, 56
      %v536 = vadd.s32 %v528, 64
      %v537 = vadd.s32 %v528, 72
      %v538 = vadd.s32 %v528, 80
      %v539 = vadd.s32 %v528, 88
      %v540 = vadd.s32 %v528, 96
      %v541 = vadd.s32 %v528, 104
      %v542 = vadd.s32 %v528, 112
      %v543 = vadd.s32 %v528, 120
      %v544 = vadd.s32 %v528, 128
      %v545 = vadd.s32 %v528, 136
      %v546 = vadd.s32 %v528, 144
      %v547 = vadd.s32 %v528, 152
      %v548 = vstv %s526
      %v549 = vadd.s32 %v548, %v528
      %v550 = vadd.s32 %v548, %v529
      %v551 = vadd.s32 %v548, %v530
      %v552 = vadd.s32 %v548, %v531
      %v553 = vadd.s32 %v548, %v532
      %v554 = vadd.s32 %v548, %v533
      %v555 = vadd.s32 %v548, %v534
      %v556 = vadd.s32 %v548, %v535
      %v557 = vadd.s32 %v548, %v536
      %v558 = vadd.s32 %v548, %v537
      %v559 = vadd.s32 %v548, %v538
      %v560 = vadd.s32 %v548, %v539
      %v561 = vadd.s32 %v548, %v540
      %v562 = vadd.s32 %v548, %v541
      %v563 = vadd.s32 %v548, %v542
      %v564 = vadd.s32 %v548, %v543
      %v565 = vadd.s32 %v548, %v544
      %v566 = vadd.s32 %v548, %v545
      %v567 = vadd.s32 %v548, %v546
      %v568 = vadd.s32 %v548, %v547
      %vm569 = vcmp.lt.s32.totalorder %v549, 300
      %vm570 = vcmp.lt.s32.totalorder %v550, 300
      %vm571 = vcmp.lt.s32.totalorder %v551, 300
      %vm572 = vcmp.lt.s32.totalorder %v552, 300
      %vm573 = vcmp.lt.s32.totalorder %v553, 300
      %vm574 = vcmp.lt.s32.totalorder %v554, 300
      %vm575 = vcmp.lt.s32.totalorder %v555, 300
      %vm576 = vcmp.lt.s32.totalorder %v556, 300
      %vm577 = vcmp.lt.s32.totalorder %v557, 300
      %vm578 = vcmp.lt.s32.totalorder %v558, 300
      %vm579 = vcmp.lt.s32.totalorder %v559, 300
      %vm580 = vcmp.lt.s32.totalorder %v560, 300
      %vm581 = vcmp.lt.s32.totalorder %v561, 300
      %vm582 = vcmp.lt.s32.totalorder %v562, 300
      %vm583 = vcmp.lt.s32.totalorder %v563, 300
      %vm584 = vcmp.lt.s32.totalorder %v564, 300
      %vm585 = vcmp.lt.s32.totalorder %v565, 300
      %vm586 = vcmp.lt.s32.totalorder %v566, 300
      %vm587 = vcmp.lt.s32.totalorder %v567, 300
      %vm588 = vcmp.lt.s32.totalorder %v568, 300
      %v589 = vsel %vm569, 1, 0
      %v590 = vsel %vm570, 1, 0
      %v591 = vsel %vm571, 1, 0
      %v592 = vsel %vm572, 1, 0
      %v593 = vsel %vm573, 1, 0
      %v594 = vsel %vm574, 1, 0
      %v595 = vsel %vm575, 1, 0
      %v596 = vsel %vm576, 1, 0
      %v597 = vsel %vm577, 1, 0
      %v598 = vsel %vm578, 1, 0
      %v599 = vsel %vm579, 1, 0
      %v600 = vsel %vm580, 1, 0
      %v601 = vsel %vm581, 1, 0
      %v602 = vsel %vm582, 1, 0
      %v603 = vsel %vm583, 1, 0
      %v604 = vsel %vm584, 1, 0
      %v605 = vsel %vm585, 1, 0
      %v606 = vsel %vm586, 1, 0
      %v607 = vsel %vm587, 1, 0
      %v608 = vsel %vm588, 1, 0
      %vm609 = vcmp.eq.s32.totalorder %v589, 1
      %vm610 = vcmp.eq.s32.totalorder %v590, 1
      %vm611 = vcmp.eq.s32.totalorder %v591, 1
      %vm612 = vcmp.eq.s32.totalorder %v592, 1
      %vm613 = vcmp.eq.s32.totalorder %v593, 1
      %vm614 = vcmp.eq.s32.totalorder %v594, 1
      %vm615 = vcmp.eq.s32.totalorder %v595, 1
      %vm616 = vcmp.eq.s32.totalorder %v596, 1
      %vm617 = vcmp.eq.s32.totalorder %v597, 1
      %vm618 = vcmp.eq.s32.totalorder %v598, 1
      %vm619 = vcmp.eq.s32.totalorder %v599, 1
      %vm620 = vcmp.eq.s32.totalorder %v600, 1
      %vm621 = vcmp.eq.s32.totalorder %v601, 1
      %vm622 = vcmp.eq.s32.totalorder %v602, 1
      %vm623 = vcmp.eq.s32.totalorder %v603, 1
      %vm624 = vcmp.eq.s32.totalorder %v604, 1
      %vm625 = vcmp.eq.s32.totalorder %v605, 1
      %vm626 = vcmp.eq.s32.totalorder %v606, 1
      %vm627 = vcmp.eq.s32.totalorder %v607, 1
      %vm628 = vcmp.eq.s32.totalorder %v608, 1
      %vm629 = vmpackc.low %vm609, %vm609
      %vm630 = vmpackc.low %vm610, %vm610
      %vm631 = vmpackc.low %vm611, %vm611
      %vm632 = vmpackc.low %vm612, %vm612
      %vm633 = vmpackc.low %vm613, %vm613
      %vm634 = vmpackc.low %vm614, %vm614
      %vm635 = vmpackc.low %vm615, %vm615
      %vm636 = vmpackc.low %vm616, %vm616
      %vm637 = vmpackc.low %vm617, %vm617
      %vm638 = vmpackc.low %vm618, %vm618
      %vm639 = vmpackc.low %vm619, %vm619
      %vm640 = vmpackc.low %vm620, %vm620
      %vm641 = vmpackc.low %vm621, %vm621
      %vm642 = vmpackc.low %vm622, %vm622
      %vm643 = vmpackc.low %vm623, %vm623
      %vm644 = vmpackc.low %vm624, %vm624
      %vm645 = vmpackc.low %vm625, %vm625
      %vm646 = vmpackc.low %vm626, %vm626
      %vm647 = vmpackc.low %vm627, %vm627
      %vm648 = vmpackc.low %vm628, %vm628
      %v649 = vsel %vm629, 65537, 0
      %v650 = vsel %vm630, 65537, 0
      %v651 = vsel %vm631, 65537, 0
      %v652 = vsel %vm632, 65537, 0
      %v653 = vsel %vm633, 65537, 0
      %v654 = vsel %vm634, 65537, 0
      %v655 = vsel %vm635, 65537, 0
      %v656 = vsel %vm636, 65537, 0
      %v657 = vsel %vm637, 65537, 0
      %v658 = vsel %vm638, 65537, 0
      %v659 = vsel %vm639, 65537, 0
      %v660 = vsel %vm640, 65537, 0
      %v661 = vsel %vm641, 65537, 0
      %v662 = vsel %vm642, 65537, 0
      %v663 = vsel %vm643, 65537, 0
      %v664 = vsel %vm644, 65537, 0
      %v665 = vsel %vm645, 65537, 0
      %v666 = vsel %vm646, 65537, 0
      %v667 = vsel %vm647, 65537, 0
      %v668 = vsel %vm648, 65537, 0
      %v669 = vunpack.c.l.b16 %v649
      %v670 = vunpack.c.l.b16 %v650
      %v671 = vunpack.c.l.b16 %v651
      %v672 = vunpack.c.l.b16 %v652
      %v673 = vunpack.c.l.b16 %v653
      %v674 = vunpack.c.l.b16 %v654
      %v675 = vunpack.c.l.b16 %v655
      %v676 = vunpack.c.l.b16 %v656
      %v677 = vunpack.c.l.b16 %v657
      %v678 = vunpack.c.l.b16 %v658
      %v679 = vunpack.c.l.b16 %v659
      %v680 = vunpack.c.l.b16 %v660
      %v681 = vunpack.c.l.b16 %v661
      %v682 = vunpack.c.l.b16 %v662
      %v683 = vunpack.c.l.b16 %v663
      %v684 = vunpack.c.l.b16 %v664
      %v685 = vunpack.c.l.b16 %v665
      %v686 = vunpack.c.l.b16 %v666
      %v687 = vunpack.c.l.b16 %v667
      %v688 = vunpack.c.l.b16 %v668
      %v689 = vpack.c.b16 %v670, %v669
      %v690 = vpack.c.b16 %v672, %v671
      %v691 = vpack.c.b16 %v674, %v673
      %v692 = vpack.c.b16 %v676, %v675
      %v693 = vpack.c.b16 %v678, %v677
      %v694 = vpack.c.b16 %v680, %v679
      %v695 = vpack.c.b16 %v682, %v681
      %v696 = vpack.c.b16 %v684, %v683
      %v697 = vpack.c.b16 %v686, %v685
      %v698 = vpack.c.b16 %v688, %v687
      %vm699 = vcmp.ne.s16.totalorder %v689, 0
      %vm700 = vcmp.ne.s16.totalorder %v690, 0
      %vm701 = vcmp.ne.s16.totalorder %v691, 0
      %vm702 = vcmp.ne.s16.totalorder %v692, 0
      %vm703 = vcmp.ne.s16.totalorder %v693, 0
      %vm704 = vcmp.ne.s16.totalorder %v694, 0
      %vm705 = vcmp.ne.s16.totalorder %v695, 0
      %vm706 = vcmp.ne.s16.totalorder %v696, 0
      %vm707 = vcmp.ne.s16.totalorder %v697, 0
      %vm708 = vcmp.ne.s16.totalorder %v698, 0
      %v709 = vsel %vm699, %v465, 0
      %v710 = vsel %vm699, %v466, 0
      %v711 = vsel %vm699, %v467, 0
      %v712 = vsel %vm699, %v468, 0
      %v713 = vsel %vm699, %v469, 0
      %v714 = vsel %vm699, %v470, 0
      %v715 = vsel %vm700, %v471, 0
      %v716 = vsel %vm700, %v472, 0
      %v717 = vsel %vm700, %v473, 0
      %v718 = vsel %vm700, %v474, 0
      %v719 = vsel %vm700, %v475, 0
      %v720 = vsel %vm700, %v476, 0
      %v721 = vsel %vm701, %v477, 0
      %v722 = vsel %vm701, %v478, 0
      %v723 = vsel %vm701, %v479, 0
      %v724 = vsel %vm701, %v480, 0
      %v725 = vsel %vm701, %v481, 0
      %v726 = vsel %vm701, %v482, 0
      %v727 = vsel %vm702, %v483, 0
      %v728 = vsel %vm702, %v484, 0
      %v729 = vsel %vm702, %v485, 0
      %v730 = vsel %vm702, %v486, 0
      %v731 = vsel %vm702, %v487, 0
      %v732 = vsel %vm702, %v488, 0
      %v733 = vsel %vm703, %v489, 0
      %v734 = vsel %vm703, %v490, 0
      %v735 = vsel %vm703, %v491, 0
      %v736 = vsel %vm703, %v492, 0
      %v737 = vsel %vm703, %v493, 0
      %v738 = vsel %vm703, %v494, 0
      %v739 = vsel %vm704, %v495, 0
      %v740 = vsel %vm704, %v496, 0
      %v741 = vsel %vm704, %v497, 0
      %v742 = vsel %vm704, %v498, 0
      %v743 = vsel %vm704, %v499, 0
      %v744 = vsel %vm704, %v500, 0
      %v745 = vsel %vm705, %v501, 0
      %v746 = vsel %vm705, %v502, 0
      %v747 = vsel %vm705, %v503, 0
      %v748 = vsel %vm705, %v504, 0
      %v749 = vsel %vm705, %v505, 0
      %v750 = vsel %vm705, %v506, 0
      %v751 = vsel %vm706, %v507, 0
      %v752 = vsel %vm706, %v508, 0
      %v753 = vsel %vm706, %v509, 0
      %v754 = vsel %vm706, %v510, 0
      %v755 = vsel %vm706, %v511, 0
      %v756 = vsel %vm706, %v512, 0
      %v757 = vsel %vm707, %v513, 0
      %v758 = vsel %vm707, %v514, 0
      %v759 = vsel %vm707, %v515, 0
      %v760 = vsel %vm707, %v516, 0
      %v761 = vsel %vm707, %v517, 0
      %v762 = vsel %vm707, %v518, 0
      %v763 = vsel %vm708, %v519, 0
      %v764 = vsel %vm708, %v520, 0
      %v765 = vsel %vm708, %v521, 0
      %v766 = vsel %vm708, %v522, 0
      %v767 = vsel %vm708, %v523, 0
      %v768 = vsel %vm708, %v524, 0
      %v769 = vld [vmem:[%s1] sm:$0xff]
      %v770 = vld [vmem:[%s1 + $0x8] sm:$0xf]
      %v771 = vld [vmem:[%s1 + $0xc] sm:$0xff]
      %v772 = vld [vmem:[%s1 + $0x14] sm:$0xf]
      %v773 = vld [vmem:[%s1 + $0x18] sm:$0xff]
      %v774 = vld [vmem:[%s1 + $0x20] sm:$0xf]
      %v775 = vld [vmem:[%s1 + $0x24] sm:$0xff]
      %v776 = vld [vmem:[%s1 + $0x2c] sm:$0xf]
      %v777 = vld [vmem:[%s1 + $0x30] sm:$0xff]
      %v778 = vld [vmem:[%s1 + $0x38] sm:$0xf]
      %v779 = vld [vmem:[%s1 + $0x3c] sm:$0xff]
      %v780 = vld [vmem:[%s1 + $0x44] sm:$0xf]
      %v781 = vld [vmem:[%s1 + $0x48] sm:$0xff]
      %v782 = vld [vmem:[%s1 + $0x50] sm:$0xf]
      %v783 = vld [vmem:[%s1 + $0x54] sm:$0xff]
      %v784 = vld [vmem:[%s1 + $0x5c] sm:$0xf]
      %v785 = vld [vmem:[%s1 + $0x60] sm:$0xff]
      %v786 = vld [vmem:[%s1 + $0x68] sm:$0xf]
      %v787 = vld [vmem:[%s1 + $0x6c] sm:$0xff]
      %v788 = vld [vmem:[%s1 + $0x74] sm:$0xf]
      %v789 = vld [vmem:[%s1 + $0x78] sm:$0xff]
      %v790 = vld [vmem:[%s1 + $0x80] sm:$0xf]
      %v791 = vld [vmem:[%s1 + $0x84] sm:$0xff]
      %v792 = vld [vmem:[%s1 + $0x8c] sm:$0xf]
      %v793 = vld [vmem:[%s1 + $0x90] sm:$0xff]
      %v794 = vld [vmem:[%s1 + $0x98] sm:$0xf]
      %v795 = vld [vmem:[%s1 + $0x9c] sm:$0xff]
      %v796 = vld [vmem:[%s1 + $0xa4] sm:$0xf]
      %v797 = vld [vmem:[%s1 + $0xa8] sm:$0xff]
      %v798 = vld [vmem:[%s1 + $0xb0] sm:$0xf]
      %v799 = vld [vmem:[%s1 + $0xb4] sm:$0xff]
      %v800 = vld [vmem:[%s1 + $0xbc] sm:$0xf]
      %v801 = vld [vmem:[%s1 + $0xc0] sm:$0xff]
      %v802 = vld [vmem:[%s1 + $0xc8] sm:$0xf]
      %v803 = vld [vmem:[%s1 + $0xcc] sm:$0xff]
      %v804 = vld [vmem:[%s1 + $0xd4] sm:$0xf]
      %v805 = vld [vmem:[%s1 + $0xd8] sm:$0xff]
      %v806 = vld [vmem:[%s1 + $0xe0] sm:$0xf]
      %v807 = vld [vmem:[%s1 + $0xe4] sm:$0xff]
      %v808 = vld [vmem:[%s1 + $0xec] sm:$0xf]
      %v809 = vld [vmem:[%s1 + $0xf0] sm:$0xff]
      %v810 = vld [vmem:[%s1 + $0xf8] sm:$0xf]
      %v811 = vld [vmem:[%s1 + $0xfc] sm:$0xff]
      %v812 = vld [vmem:[%s1 + $0x104] sm:$0xf]
      %v813 = vld [vmem:[%s1 + $0x108] sm:$0xff]
      %v814 = vld [vmem:[%s1 + $0x110] sm:$0xf]
      %v815 = vld [vmem:[%s1 + $0x114] sm:$0xff]
      %v816 = vld [vmem:[%s1 + $0x11c] sm:$0xf]
      %v817 = vld [vmem:[%s1 + $0x120] sm:$0xff]
      %v818 = vld [vmem:[%s1 + $0x128] sm:$0xf]
      %v819 = vld [vmem:[%s1 + $0x12c] sm:$0xff]
      %v820 = vld [vmem:[%s1 + $0x134] sm:$0xf]
      %v821 = vld [vmem:[%s1 + $0x138] sm:$0xff]
      %v822 = vld [vmem:[%s1 + $0x140] sm:$0xf]
      %v823 = vld [vmem:[%s1 + $0x144] sm:$0xff]
      %v824 = vld [vmem:[%s1 + $0x14c] sm:$0xf]
      %v825 = vld [vmem:[%s1 + $0x150] sm:$0xff]
      %v826 = vld [vmem:[%s1 + $0x158] sm:$0xf]
      %v827 = vld [vmem:[%s1 + $0x15c] sm:$0xff]
      %v828 = vld [vmem:[%s1 + $0x164] sm:$0xf]
      %v829 = vld [vmem:[%s1 + $0x168] sm:$0xff]
      %v830 = vld [vmem:[%s1 + $0x170] sm:$0xf]
      %v831 = vld [vmem:[%s1 + $0x174] sm:$0xff]
      %v832 = vld [vmem:[%s1 + $0x17c] sm:$0xf]
      %v833 = vld [vmem:[%s1 + $0x180] sm:$0xff]
      %v834 = vld [vmem:[%s1 + $0x188] sm:$0xf]
      %v835 = vld [vmem:[%s1 + $0x18c] sm:$0xff]
      %v836 = vld [vmem:[%s1 + $0x194] sm:$0xf]
      %v837 = vld [vmem:[%s1 + $0x198] sm:$0xff]
      %v838 = vld [vmem:[%s1 + $0x1a0] sm:$0xf]
      %v839 = vld [vmem:[%s1 + $0x1a4] sm:$0xff]
      %v840 = vld [vmem:[%s1 + $0x1ac] sm:$0xf]
      %v841 = vld [vmem:[%s1 + $0x1b0] sm:$0xff]
      %v842 = vld [vmem:[%s1 + $0x1b8] sm:$0xf]
      %v843 = vld [vmem:[%s1 + $0x1bc] sm:$0xff]
      %v844 = vld [vmem:[%s1 + $0x1c4] sm:$0xf]
      %v845 = vld [vmem:[%s1 + $0x1c8] sm:$0xff]
      %v846 = vld [vmem:[%s1 + $0x1d0] sm:$0xf]
      %v847 = vld [vmem:[%s1 + $0x1d4] sm:$0xff]
      %v848 = vld [vmem:[%s1 + $0x1dc] sm:$0xf]
      %v849 = vld [vmem:[%s1 + $0x1e0] sm:$0xff]
      %v850 = vld [vmem:[%s1 + $0x1e8] sm:$0xf]
      %v851 = vld [vmem:[%s1 + $0x1ec] sm:$0xff]
      %v852 = vld [vmem:[%s1 + $0x1f4] sm:$0xf]
      %v853 = vld [vmem:[%s1 + $0x1f8] sm:$0xff]
      %v854 = vld [vmem:[%s1 + $0x200] sm:$0xf]
      %v855 = vld [vmem:[%s1 + $0x204] sm:$0xff]
      %v856 = vld [vmem:[%s1 + $0x20c] sm:$0xf]
      %v857 = vld [vmem:[%s1 + $0x210] sm:$0xff]
      %v858 = vld [vmem:[%s1 + $0x218] sm:$0xf]
      %v859 = vld [vmem:[%s1 + $0x21c] sm:$0xff]
      %v860 = vld [vmem:[%s1 + $0x224] sm:$0xf]
      %v861 = vld [vmem:[%s1 + $0x228] sm:$0xff]
      %v862 = vld [vmem:[%s1 + $0x230] sm:$0xf]
      %v863 = vld [vmem:[%s1 + $0x234] sm:$0xff]
      %v864 = vld [vmem:[%s1 + $0x23c] sm:$0xf]
      %v865 = vld [vmem:[%s1 + $0x240] sm:$0xff]
      %v866 = vld [vmem:[%s1 + $0x248] sm:$0xf]
      %v867 = vld [vmem:[%s1 + $0x24c] sm:$0xff]
      %v868 = vld [vmem:[%s1 + $0x254] sm:$0xf]
      %v869 = vld [vmem:[%s1 + $0x258] sm:$0xff]
      %v870 = vld [vmem:[%s1 + $0x260] sm:$0xf]
      %v871 = vld [vmem:[%s1 + $0x264] sm:$0xff]
      %v872 = vld [vmem:[%s1 + $0x26c] sm:$0xf]
      %v873 = vld [vmem:[%s1 + $0x270] sm:$0xff]
      %v874 = vld [vmem:[%s1 + $0x278] sm:$0xf]
      %v875 = vld [vmem:[%s1 + $0x27c] sm:$0xff]
      %v876 = vld [vmem:[%s1 + $0x284] sm:$0xf]
      %v877 = vld [vmem:[%s1 + $0x288] sm:$0xff]
      %v878 = vld [vmem:[%s1 + $0x290] sm:$0xf]
      %v879 = vld [vmem:[%s1 + $0x294] sm:$0xff]
      %v880 = vld [vmem:[%s1 + $0x29c] sm:$0xf]
      %v881 = vld [vmem:[%s1 + $0x2a0] sm:$0xff]
      %v882 = vld [vmem:[%s1 + $0x2a8] sm:$0xf]
      %v883 = vld [vmem:[%s1 + $0x2ac] sm:$0xff]
      %v884 = vld [vmem:[%s1 + $0x2b4] sm:$0xf]
      %v885 = vld [vmem:[%s1 + $0x2b8] sm:$0xff]
      %v886 = vld [vmem:[%s1 + $0x2c0] sm:$0xf]
      %v887 = vld [vmem:[%s1 + $0x2c4] sm:$0xff]
      %v888 = vld [vmem:[%s1 + $0x2cc] sm:$0xf]
      %v889 = vld [vmem:[%s1 + $0x2d0] sm:$0xff]
      %v890 = vld [vmem:[%s1 + $0x2d8] sm:$0xf]
      %v891 = vld [vmem:[%s1 + $0x2dc] sm:$0xff]
      %v892 = vld [vmem:[%s1 + $0x2e4] sm:$0xf]
      %v893 = vld [vmem:[%s1 + $0x2e8] sm:$0xff]
      %v894 = vld [vmem:[%s1 + $0x2f0] sm:$0xf]
      %v895 = vld [vmem:[%s1 + $0x2f4] sm:$0xff]
      %v896 = vld [vmem:[%s1 + $0x2fc] sm:$0xf]
      %v897 = vld [vmem:[%s1 + $0x300] sm:$0xff]
      %v898 = vld [vmem:[%s1 + $0x308] sm:$0xf]
      %v899 = vld [vmem:[%s1 + $0x30c] sm:$0xff]
      %v900 = vld [vmem:[%s1 + $0x314] sm:$0xf]
      %v901 = vld [vmem:[%s1 + $0x318] sm:$0xff]
      %v902 = vld [vmem:[%s1 + $0x320] sm:$0xf]
      %v903 = vld [vmem:[%s1 + $0x324] sm:$0xff]
      %v904 = vld [vmem:[%s1 + $0x32c] sm:$0xf]
      %v905 = vld [vmem:[%s1 + $0x330] sm:$0xff]
      %v906 = vld [vmem:[%s1 + $0x338] sm:$0xf]
      %v907 = vld [vmem:[%s1 + $0x33c] sm:$0xff]
      %v908 = vld [vmem:[%s1 + $0x344] sm:$0xf]
      %v909 = vld [vmem:[%s1 + $0x348] sm:$0xff]
      %v910 = vld [vmem:[%s1 + $0x350] sm:$0xf]
      %v911 = vld [vmem:[%s1 + $0x354] sm:$0xff]
      %v912 = vld [vmem:[%s1 + $0x35c] sm:$0xf]
      %v913 = vld [vmem:[%s1 + $0x360] sm:$0xff]
      %v914 = vld [vmem:[%s1 + $0x368] sm:$0xf]
      %v915 = vld [vmem:[%s1 + $0x36c] sm:$0xff]
      %v916 = vld [vmem:[%s1 + $0x374] sm:$0xf]
      %v917 = vld [vmem:[%s1 + $0x378] sm:$0xff]
      %v918 = vld [vmem:[%s1 + $0x380] sm:$0xf]
      %v919 = vld [vmem:[%s1 + $0x384] sm:$0xff]
      %v920 = vld [vmem:[%s1 + $0x38c] sm:$0xf]
      %v921 = vld [vmem:[%s1 + $0x390] sm:$0xff]
      %v922 = vld [vmem:[%s1 + $0x398] sm:$0xf]
      %v923 = vld [vmem:[%s1 + $0x39c] sm:$0xff]
      %v924 = vld [vmem:[%s1 + $0x3a4] sm:$0xf]
      %v925 = vld [vmem:[%s1 + $0x3a8] sm:$0xff]
      %v926 = vld [vmem:[%s1 + $0x3b0] sm:$0xf]
      %v927 = vld [vmem:[%s1 + $0x3b4] sm:$0xff]
      %v928 = vld [vmem:[%s1 + $0x3bc] sm:$0xf]
      %v929 = vld [vmem:[%s1 + $0x3c0] sm:$0xff]
      %v930 = vld [vmem:[%s1 + $0x3c8] sm:$0xf]
      %v931 = vld [vmem:[%s1 + $0x3cc] sm:$0xff]
      %v932 = vld [vmem:[%s1 + $0x3d4] sm:$0xf]
      %v933 = vld [vmem:[%s1 + $0x3d8] sm:$0xff]
      %v934 = vld [vmem:[%s1 + $0x3e0] sm:$0xf]
      %v935 = vld [vmem:[%s1 + $0x3e4] sm:$0xff]
      %v936 = vld [vmem:[%s1 + $0x3ec] sm:$0xf]
      %v937 = vld [vmem:[%s1 + $0x3f0] sm:$0xff]
      %v938 = vld [vmem:[%s1 + $0x3f8] sm:$0xf]
      %v939 = vld [vmem:[%s1 + $0x3fc] sm:$0xff]
      %v940 = vld [vmem:[%s1 + $0x404] sm:$0xf]
      %v941 = vld [vmem:[%s1 + $0x408] sm:$0xff]
      %v942 = vld [vmem:[%s1 + $0x410] sm:$0xf]
      %v943 = vld [vmem:[%s1 + $0x414] sm:$0xff]
      %v944 = vld [vmem:[%s1 + $0x41c] sm:$0xf]
      %v945 = vld [vmem:[%s1 + $0x420] sm:$0xff]
      %v946 = vld [vmem:[%s1 + $0x428] sm:$0xf]
      %v947 = vld [vmem:[%s1 + $0x42c] sm:$0xff]
      %v948 = vld [vmem:[%s1 + $0x434] sm:$0xf]
      %v949 = vld [vmem:[%s1 + $0x438] sm:$0xff]
      %v950 = vld [vmem:[%s1 + $0x440] sm:$0xf]
      %v951 = vld [vmem:[%s1 + $0x444] sm:$0xff]
      %v952 = vld [vmem:[%s1 + $0x44c] sm:$0xf]
      %v953 = vld [vmem:[%s1 + $0x450] sm:$0xff]
      %v954 = vld [vmem:[%s1 + $0x458] sm:$0xf]
      %v955 = vld [vmem:[%s1 + $0x45c] sm:$0xff]
      %v956 = vld [vmem:[%s1 + $0x464] sm:$0xf]
      %v957 = vld [vmem:[%s1 + $0x468] sm:$0xff]
      %v958 = vld [vmem:[%s1 + $0x470] sm:$0xf]
      %v959 = vld [vmem:[%s1 + $0x474] sm:$0xff]
      %v960 = vld [vmem:[%s1 + $0x47c] sm:$0xf]
      %v961 = vld [vmem:[%s2] sm:$0x7]
      %v963 = vlaneseq
      %v964 = vshrl.u32 %v963, 7
      %v965 = vsub.s32 0, %v964
      %v966 = vrot.slane %v961, %v965
      %v967 = vlaneseq
      %v968 = vshrl.u32 %v967, 7
      %v969 = vsub.s32 1, %v968
      %v970 = vrot.slane %v961, %v969
      %v971 = vlaneseq
      %v972 = vshrl.u32 %v971, 7
      %v973 = vsub.s32 2, %v972
      %v974 = vrot.slane %v961, %v973
      %v1170 = vunpack.c.l.b16 %v769
      %v1171 = vunpack.c.h.b16 %v769
      %v1172 = vunpack.c.l.b16 %v770
      %v1173 = vunpack.c.l.b16 %v771
      %v1174 = vunpack.c.h.b16 %v771
      %v1175 = vunpack.c.l.b16 %v772
      %v1176 = vunpack.c.l.b16 %v773
      %v1177 = vunpack.c.h.b16 %v773
      %v1178 = vunpack.c.l.b16 %v774
      %v1179 = vunpack.c.l.b16 %v775
      %v1180 = vunpack.c.h.b16 %v775
      %v1181 = vunpack.c.l.b16 %v776
      %v1182 = vunpack.c.l.b16 %v777
      %v1183 = vunpack.c.h.b16 %v777
      %v1184 = vunpack.c.l.b16 %v778
      %v1185 = vunpack.c.l.b16 %v779
      %v1186 = vunpack.c.h.b16 %v779
      %v1187 = vunpack.c.l.b16 %v780
      %v1188 = vunpack.c.l.b16 %v781
      %v1189 = vunpack.c.h.b16 %v781
      %v1190 = vunpack.c.l.b16 %v782
      %v1191 = vunpack.c.l.b16 %v783
      %v1192 = vunpack.c.h.b16 %v783
      %v1193 = vunpack.c.l.b16 %v784
      %v1194 = vunpack.c.l.b16 %v785
      %v1195 = vunpack.c.h.b16 %v785
      %v1196 = vunpack.c.l.b16 %v786
      %v1197 = vunpack.c.l.b16 %v787
      %v1198 = vunpack.c.h.b16 %v787
      %v1199 = vunpack.c.l.b16 %v788
      %v1200 = vunpack.c.l.b16 %v789
      %v1201 = vunpack.c.h.b16 %v789
      %v1202 = vunpack.c.l.b16 %v790
      %v1203 = vunpack.c.l.b16 %v791
      %v1204 = vunpack.c.h.b16 %v791
      %v1205 = vunpack.c.l.b16 %v792
      %v1206 = vunpack.c.l.b16 %v793
      %v1207 = vunpack.c.h.b16 %v793
      %v1208 = vunpack.c.l.b16 %v794
      %v1209 = vunpack.c.l.b16 %v795
      %v1210 = vunpack.c.h.b16 %v795
      %v1211 = vunpack.c.l.b16 %v796
      %v1212 = vunpack.c.l.b16 %v797
      %v1213 = vunpack.c.h.b16 %v797
      %v1214 = vunpack.c.l.b16 %v798
      %v1215 = vunpack.c.l.b16 %v799
      %v1216 = vunpack.c.h.b16 %v799
      %v1217 = vunpack.c.l.b16 %v800
      %v1218 = vunpack.c.l.b16 %v801
      %v1219 = vunpack.c.h.b16 %v801
      %v1220 = vunpack.c.l.b16 %v802
      %v1221 = vunpack.c.l.b16 %v803
      %v1222 = vunpack.c.h.b16 %v803
      %v1223 = vunpack.c.l.b16 %v804
      %v1224 = vunpack.c.l.b16 %v805
      %v1225 = vunpack.c.h.b16 %v805
      %v1226 = vunpack.c.l.b16 %v806
      %v1227 = vunpack.c.l.b16 %v807
      %v1228 = vunpack.c.h.b16 %v807
      %v1229 = vunpack.c.l.b16 %v808
      %v1230 = vunpack.c.l.b16 %v809
      %v1231 = vunpack.c.h.b16 %v809
      %v1232 = vunpack.c.l.b16 %v810
      %v1233 = vunpack.c.l.b16 %v811
      %v1234 = vunpack.c.h.b16 %v811
      %v1235 = vunpack.c.l.b16 %v812
      %v1236 = vunpack.c.l.b16 %v813
      %v1237 = vunpack.c.h.b16 %v813
      %v1238 = vunpack.c.l.b16 %v814
      %v1239 = vunpack.c.l.b16 %v815
      %v1240 = vunpack.c.h.b16 %v815
      %v1241 = vunpack.c.l.b16 %v816
      %v1242 = vunpack.c.l.b16 %v817
      %v1243 = vunpack.c.h.b16 %v817
      %v1244 = vunpack.c.l.b16 %v818
      %v1245 = vunpack.c.l.b16 %v819
      %v1246 = vunpack.c.h.b16 %v819
      %v1247 = vunpack.c.l.b16 %v820
      %v1248 = vunpack.c.l.b16 %v821
      %v1249 = vunpack.c.h.b16 %v821
      %v1250 = vunpack.c.l.b16 %v822
      %v1251 = vunpack.c.l.b16 %v823
      %v1252 = vunpack.c.h.b16 %v823
      %v1253 = vunpack.c.l.b16 %v824
      %v1254 = vunpack.c.l.b16 %v825
      %v1255 = vunpack.c.h.b16 %v825
      %v1256 = vunpack.c.l.b16 %v826
      %v1257 = vunpack.c.l.b16 %v827
      %v1258 = vunpack.c.h.b16 %v827
      %v1259 = vunpack.c.l.b16 %v828
      %v1260 = vunpack.c.l.b16 %v829
      %v1261 = vunpack.c.h.b16 %v829
      %v1262 = vunpack.c.l.b16 %v830
      %v1263 = vunpack.c.l.b16 %v831
      %v1264 = vunpack.c.h.b16 %v831
      %v1265 = vunpack.c.l.b16 %v832
      %v1266 = vunpack.c.l.b16 %v833
      %v1267 = vunpack.c.h.b16 %v833
      %v1268 = vunpack.c.l.b16 %v834
      %v1269 = vunpack.c.l.b16 %v835
      %v1270 = vunpack.c.h.b16 %v835
      %v1271 = vunpack.c.l.b16 %v836
      %v1272 = vunpack.c.l.b16 %v837
      %v1273 = vunpack.c.h.b16 %v837
      %v1274 = vunpack.c.l.b16 %v838
      %v1275 = vunpack.c.l.b16 %v839
      %v1276 = vunpack.c.h.b16 %v839
      %v1277 = vunpack.c.l.b16 %v840
      %v1278 = vunpack.c.l.b16 %v841
      %v1279 = vunpack.c.h.b16 %v841
      %v1280 = vunpack.c.l.b16 %v842
      %v1281 = vunpack.c.l.b16 %v843
      %v1282 = vunpack.c.h.b16 %v843
      %v1283 = vunpack.c.l.b16 %v844
      %v1284 = vunpack.c.l.b16 %v845
      %v1285 = vunpack.c.h.b16 %v845
      %v1286 = vunpack.c.l.b16 %v846
      %v1287 = vunpack.c.l.b16 %v847
      %v1288 = vunpack.c.h.b16 %v847
      %v1289 = vunpack.c.l.b16 %v848
      %v1290 = vunpack.c.l.b16 %v849
      %v1291 = vunpack.c.h.b16 %v849
      %v1292 = vunpack.c.l.b16 %v850
      %v1293 = vunpack.c.l.b16 %v851
      %v1294 = vunpack.c.h.b16 %v851
      %v1295 = vunpack.c.l.b16 %v852
      %v1296 = vunpack.c.l.b16 %v853
      %v1297 = vunpack.c.h.b16 %v853
      %v1298 = vunpack.c.l.b16 %v854
      %v1299 = vunpack.c.l.b16 %v855
      %v1300 = vunpack.c.h.b16 %v855
      %v1301 = vunpack.c.l.b16 %v856
      %v1302 = vunpack.c.l.b16 %v857
      %v1303 = vunpack.c.h.b16 %v857
      %v1304 = vunpack.c.l.b16 %v858
      %v1305 = vunpack.c.l.b16 %v859
      %v1306 = vunpack.c.h.b16 %v859
      %v1307 = vunpack.c.l.b16 %v860
      %v1308 = vunpack.c.l.b16 %v861
      %v1309 = vunpack.c.h.b16 %v861
      %v1310 = vunpack.c.l.b16 %v862
      %v1311 = vunpack.c.l.b16 %v863
      %v1312 = vunpack.c.h.b16 %v863
      %v1313 = vunpack.c.l.b16 %v864
      %v1314 = vunpack.c.l.b16 %v865
      %v1315 = vunpack.c.h.b16 %v865
      %v1316 = vunpack.c.l.b16 %v866
      %v1317 = vunpack.c.l.b16 %v867
      %v1318 = vunpack.c.h.b16 %v867
      %v1319 = vunpack.c.l.b16 %v868
      %v1320 = vunpack.c.l.b16 %v869
      %v1321 = vunpack.c.h.b16 %v869
      %v1322 = vunpack.c.l.b16 %v870
      %v1323 = vunpack.c.l.b16 %v871
      %v1324 = vunpack.c.h.b16 %v871
      %v1325 = vunpack.c.l.b16 %v872
      %v1326 = vunpack.c.l.b16 %v873
      %v1327 = vunpack.c.h.b16 %v873
      %v1328 = vunpack.c.l.b16 %v874
      %v1329 = vunpack.c.l.b16 %v875
      %v1330 = vunpack.c.h.b16 %v875
      %v1331 = vunpack.c.l.b16 %v876
      %v1332 = vunpack.c.l.b16 %v877
      %v1333 = vunpack.c.h.b16 %v877
      %v1334 = vunpack.c.l.b16 %v878
      %v1335 = vunpack.c.l.b16 %v879
      %v1336 = vunpack.c.h.b16 %v879
      %v1337 = vunpack.c.l.b16 %v880
      %v1338 = vunpack.c.l.b16 %v881
      %v1339 = vunpack.c.h.b16 %v881
      %v1340 = vunpack.c.l.b16 %v882
      %v1341 = vunpack.c.l.b16 %v883
      %v1342 = vunpack.c.h.b16 %v883
      %v1343 = vunpack.c.l.b16 %v884
      %v1344 = vunpack.c.l.b16 %v885
      %v1345 = vunpack.c.h.b16 %v885
      %v1346 = vunpack.c.l.b16 %v886
      %v1347 = vunpack.c.l.b16 %v887
      %v1348 = vunpack.c.h.b16 %v887
      %v1349 = vunpack.c.l.b16 %v888
      %v1350 = vunpack.c.l.b16 %v889
      %v1351 = vunpack.c.h.b16 %v889
      %v1352 = vunpack.c.l.b16 %v890
      %v1353 = vunpack.c.l.b16 %v891
      %v1354 = vunpack.c.h.b16 %v891
      %v1355 = vunpack.c.l.b16 %v892
      %v1356 = vunpack.c.l.b16 %v893
      %v1357 = vunpack.c.h.b16 %v893
      %v1358 = vunpack.c.l.b16 %v894
      %v1359 = vunpack.c.l.b16 %v895
      %v1360 = vunpack.c.h.b16 %v895
      %v1361 = vunpack.c.l.b16 %v896
      %v1362 = vunpack.c.l.b16 %v897
      %v1363 = vunpack.c.h.b16 %v897
      %v1364 = vunpack.c.l.b16 %v898
      %v1365 = vunpack.c.l.b16 %v899
      %v1366 = vunpack.c.h.b16 %v899
      %v1367 = vunpack.c.l.b16 %v900
      %v1368 = vunpack.c.l.b16 %v901
      %v1369 = vunpack.c.h.b16 %v901
      %v1370 = vunpack.c.l.b16 %v902
      %v1371 = vunpack.c.l.b16 %v903
      %v1372 = vunpack.c.h.b16 %v903
      %v1373 = vunpack.c.l.b16 %v904
      %v1374 = vunpack.c.l.b16 %v905
      %v1375 = vunpack.c.h.b16 %v905
      %v1376 = vunpack.c.l.b16 %v906
      %v1377 = vunpack.c.l.b16 %v907
      %v1378 = vunpack.c.h.b16 %v907
      %v1379 = vunpack.c.l.b16 %v908
      %v1380 = vunpack.c.l.b16 %v909
      %v1381 = vunpack.c.h.b16 %v909
      %v1382 = vunpack.c.l.b16 %v910
      %v1383 = vunpack.c.l.b16 %v911
      %v1384 = vunpack.c.h.b16 %v911
      %v1385 = vunpack.c.l.b16 %v912
      %v1386 = vunpack.c.l.b16 %v913
      %v1387 = vunpack.c.h.b16 %v913
      %v1388 = vunpack.c.l.b16 %v914
      %v1389 = vunpack.c.l.b16 %v915
      %v1390 = vunpack.c.h.b16 %v915
      %v1391 = vunpack.c.l.b16 %v916
      %v1392 = vunpack.c.l.b16 %v917
      %v1393 = vunpack.c.h.b16 %v917
      %v1394 = vunpack.c.l.b16 %v918
      %v1395 = vunpack.c.l.b16 %v919
      %v1396 = vunpack.c.h.b16 %v919
      %v1397 = vunpack.c.l.b16 %v920
      %v1398 = vunpack.c.l.b16 %v921
      %v1399 = vunpack.c.h.b16 %v921
      %v1400 = vunpack.c.l.b16 %v922
      %v1401 = vunpack.c.l.b16 %v923
      %v1402 = vunpack.c.h.b16 %v923
      %v1403 = vunpack.c.l.b16 %v924
      %v1404 = vunpack.c.l.b16 %v925
      %v1405 = vunpack.c.h.b16 %v925
      %v1406 = vunpack.c.l.b16 %v926
      %v1407 = vunpack.c.l.b16 %v927
      %v1408 = vunpack.c.h.b16 %v927
      %v1409 = vunpack.c.l.b16 %v928
      %v1410 = vunpack.c.l.b16 %v929
      %v1411 = vunpack.c.h.b16 %v929
      %v1412 = vunpack.c.l.b16 %v930
      %v1413 = vunpack.c.l.b16 %v931
      %v1414 = vunpack.c.h.b16 %v931
      %v1415 = vunpack.c.l.b16 %v932
      %v1416 = vunpack.c.l.b16 %v933
      %v1417 = vunpack.c.h.b16 %v933
      %v1418 = vunpack.c.l.b16 %v934
      %v1419 = vunpack.c.l.b16 %v935
      %v1420 = vunpack.c.h.b16 %v935
      %v1421 = vunpack.c.l.b16 %v936
      %v1422 = vunpack.c.l.b16 %v937
      %v1423 = vunpack.c.h.b16 %v937
      %v1424 = vunpack.c.l.b16 %v938
      %v1425 = vunpack.c.l.b16 %v939
      %v1426 = vunpack.c.h.b16 %v939
      %v1427 = vunpack.c.l.b16 %v940
      %v1428 = vunpack.c.l.b16 %v941
      %v1429 = vunpack.c.h.b16 %v941
      %v1430 = vunpack.c.l.b16 %v942
      %v1431 = vunpack.c.l.b16 %v943
      %v1432 = vunpack.c.h.b16 %v943
      %v1433 = vunpack.c.l.b16 %v944
      %v1434 = vunpack.c.l.b16 %v945
      %v1435 = vunpack.c.h.b16 %v945
      %v1436 = vunpack.c.l.b16 %v946
      %v1437 = vunpack.c.l.b16 %v947
      %v1438 = vunpack.c.h.b16 %v947
      %v1439 = vunpack.c.l.b16 %v948
      %v1440 = vunpack.c.l.b16 %v949
      %v1441 = vunpack.c.h.b16 %v949
      %v1442 = vunpack.c.l.b16 %v950
      %v1443 = vunpack.c.l.b16 %v951
      %v1444 = vunpack.c.h.b16 %v951
      %v1445 = vunpack.c.l.b16 %v952
      %v1446 = vunpack.c.l.b16 %v953
      %v1447 = vunpack.c.h.b16 %v953
      %v1448 = vunpack.c.l.b16 %v954
      %v1449 = vunpack.c.l.b16 %v955
      %v1450 = vunpack.c.h.b16 %v955
      %v1451 = vunpack.c.l.b16 %v956
      %v1452 = vunpack.c.l.b16 %v957
      %v1453 = vunpack.c.h.b16 %v957
      %v1454 = vunpack.c.l.b16 %v958
      %v1455 = vunpack.c.l.b16 %v959
      %v1456 = vunpack.c.h.b16 %v959
      %v1457 = vunpack.c.l.b16 %v960
      %v1458 = vpack.c.b16 %v1173, %v1170
      %v1459 = vpack.c.b16 %v1174, %v1171
      %v1460 = vpack.c.b16 %v1175, %v1172
      %v1461 = vpack.c.b16 %v1179, %v1176
      %v1462 = vpack.c.b16 %v1180, %v1177
      %v1463 = vpack.c.b16 %v1181, %v1178
      %v1464 = vpack.c.b16 %v1185, %v1182
      %v1465 = vpack.c.b16 %v1186, %v1183
      %v1466 = vpack.c.b16 %v1187, %v1184
      %v1467 = vpack.c.b16 %v1191, %v1188
      %v1468 = vpack.c.b16 %v1192, %v1189
      %v1469 = vpack.c.b16 %v1193, %v1190
      %v1470 = vpack.c.b16 %v1197, %v1194
      %v1471 = vpack.c.b16 %v1198, %v1195
      %v1472 = vpack.c.b16 %v1199, %v1196
      %v1473 = vpack.c.b16 %v1203, %v1200
      %v1474 = vpack.c.b16 %v1204, %v1201
      %v1475 = vpack.c.b16 %v1205, %v1202
      %v1476 = vpack.c.b16 %v1209, %v1206
      %v1477 = vpack.c.b16 %v1210, %v1207
      %v1478 = vpack.c.b16 %v1211, %v1208
      %v1479 = vpack.c.b16 %v1215, %v1212
      %v1480 = vpack.c.b16 %v1216, %v1213
      %v1481 = vpack.c.b16 %v1217, %v1214
      %v1482 = vpack.c.b16 %v1221, %v1218
      %v1483 = vpack.c.b16 %v1222, %v1219
      %v1484 = vpack.c.b16 %v1223, %v1220
      %v1485 = vpack.c.b16 %v1227, %v1224
      %v1486 = vpack.c.b16 %v1228, %v1225
      %v1487 = vpack.c.b16 %v1229, %v1226
      %v1488 = vpack.c.b16 %v1233, %v1230
      %v1489 = vpack.c.b16 %v1234, %v1231
      %v1490 = vpack.c.b16 %v1235, %v1232
      %v1491 = vpack.c.b16 %v1239, %v1236
      %v1492 = vpack.c.b16 %v1240, %v1237
      %v1493 = vpack.c.b16 %v1241, %v1238
      %v1494 = vpack.c.b16 %v1245, %v1242
      %v1495 = vpack.c.b16 %v1246, %v1243
      %v1496 = vpack.c.b16 %v1247, %v1244
      %v1497 = vpack.c.b16 %v1251, %v1248
      %v1498 = vpack.c.b16 %v1252, %v1249
      %v1499 = vpack.c.b16 %v1253, %v1250
      %v1500 = vpack.c.b16 %v1257, %v1254
      %v1501 = vpack.c.b16 %v1258, %v1255
      %v1502 = vpack.c.b16 %v1259, %v1256
      %v1503 = vpack.c.b16 %v1263, %v1260
      %v1504 = vpack.c.b16 %v1264, %v1261
      %v1505 = vpack.c.b16 %v1265, %v1262
      %v1506 = vpack.c.b16 %v1269, %v1266
      %v1507 = vpack.c.b16 %v1270, %v1267
      %v1508 = vpack.c.b16 %v1271, %v1268
      %v1509 = vpack.c.b16 %v1275, %v1272
      %v1510 = vpack.c.b16 %v1276, %v1273
      %v1511 = vpack.c.b16 %v1277, %v1274
      %v1512 = vpack.c.b16 %v1281, %v1278
      %v1513 = vpack.c.b16 %v1282, %v1279
      %v1514 = vpack.c.b16 %v1283, %v1280
      %v1515 = vpack.c.b16 %v1287, %v1284
      %v1516 = vpack.c.b16 %v1288, %v1285
      %v1517 = vpack.c.b16 %v1289, %v1286
      %v1518 = vpack.c.b16 %v1293, %v1290
      %v1519 = vpack.c.b16 %v1294, %v1291
      %v1520 = vpack.c.b16 %v1295, %v1292
      %v1521 = vpack.c.b16 %v1299, %v1296
      %v1522 = vpack.c.b16 %v1300, %v1297
      %v1523 = vpack.c.b16 %v1301, %v1298
      %v1524 = vpack.c.b16 %v1305, %v1302
      %v1525 = vpack.c.b16 %v1306, %v1303
      %v1526 = vpack.c.b16 %v1307, %v1304
      %v1527 = vpack.c.b16 %v1311, %v1308
      %v1528 = vpack.c.b16 %v1312, %v1309
      %v1529 = vpack.c.b16 %v1313, %v1310
      %v1530 = vpack.c.b16 %v1317, %v1314
      %v1531 = vpack.c.b16 %v1318, %v1315
      %v1532 = vpack.c.b16 %v1319, %v1316
      %v1533 = vpack.c.b16 %v1323, %v1320
      %v1534 = vpack.c.b16 %v1324, %v1321
      %v1535 = vpack.c.b16 %v1325, %v1322
      %v1536 = vpack.c.b16 %v1329, %v1326
      %v1537 = vpack.c.b16 %v1330, %v1327
      %v1538 = vpack.c.b16 %v1331, %v1328
      %v1539 = vpack.c.b16 %v1335, %v1332
      %v1540 = vpack.c.b16 %v1336, %v1333
      %v1541 = vpack.c.b16 %v1337, %v1334
      %v1542 = vpack.c.b16 %v1341, %v1338
      %v1543 = vpack.c.b16 %v1342, %v1339
      %v1544 = vpack.c.b16 %v1343, %v1340
      %v1545 = vpack.c.b16 %v1347, %v1344
      %v1546 = vpack.c.b16 %v1348, %v1345
      %v1547 = vpack.c.b16 %v1349, %v1346
      %v1548 = vpack.c.b16 %v1353, %v1350
      %v1549 = vpack.c.b16 %v1354, %v1351
      %v1550 = vpack.c.b16 %v1355, %v1352
      %v1551 = vpack.c.b16 %v1359, %v1356
      %v1552 = vpack.c.b16 %v1360, %v1357
      %v1553 = vpack.c.b16 %v1361, %v1358
      %v1554 = vpack.c.b16 %v1365, %v1362
      %v1555 = vpack.c.b16 %v1366, %v1363
      %v1556 = vpack.c.b16 %v1367, %v1364
      %v1557 = vpack.c.b16 %v1371, %v1368
      %v1558 = vpack.c.b16 %v1372, %v1369
      %v1559 = vpack.c.b16 %v1373, %v1370
      %v1560 = vpack.c.b16 %v1377, %v1374
      %v1561 = vpack.c.b16 %v1378, %v1375
      %v1562 = vpack.c.b16 %v1379, %v1376
      %v1563 = vpack.c.b16 %v1383, %v1380
      %v1564 = vpack.c.b16 %v1384, %v1381
      %v1565 = vpack.c.b16 %v1385, %v1382
      %v1566 = vpack.c.b16 %v1389, %v1386
      %v1567 = vpack.c.b16 %v1390, %v1387
      %v1568 = vpack.c.b16 %v1391, %v1388
      %v1569 = vpack.c.b16 %v1395, %v1392
      %v1570 = vpack.c.b16 %v1396, %v1393
      %v1571 = vpack.c.b16 %v1397, %v1394
      %v1572 = vpack.c.b16 %v1401, %v1398
      %v1573 = vpack.c.b16 %v1402, %v1399
      %v1574 = vpack.c.b16 %v1403, %v1400
      %v1575 = vpack.c.b16 %v1407, %v1404
      %v1576 = vpack.c.b16 %v1408, %v1405
      %v1577 = vpack.c.b16 %v1409, %v1406
      %v1578 = vpack.c.b16 %v1413, %v1410
      %v1579 = vpack.c.b16 %v1414, %v1411
      %v1580 = vpack.c.b16 %v1415, %v1412
      %v1581 = vpack.c.b16 %v1419, %v1416
      %v1582 = vpack.c.b16 %v1420, %v1417
      %v1583 = vpack.c.b16 %v1421, %v1418
      %v1584 = vpack.c.b16 %v1425, %v1422
      %v1585 = vpack.c.b16 %v1426, %v1423
      %v1586 = vpack.c.b16 %v1427, %v1424
      %v1587 = vpack.c.b16 %v1431, %v1428
      %v1588 = vpack.c.b16 %v1432, %v1429
      %v1589 = vpack.c.b16 %v1433, %v1430
      %v1590 = vpack.c.b16 %v1437, %v1434
      %v1591 = vpack.c.b16 %v1438, %v1435
      %v1592 = vpack.c.b16 %v1439, %v1436
      %v1593 = vpack.c.b16 %v1443, %v1440
      %v1594 = vpack.c.b16 %v1444, %v1441
      %v1595 = vpack.c.b16 %v1445, %v1442
      %v1596 = vpack.c.b16 %v1449, %v1446
      %v1597 = vpack.c.b16 %v1450, %v1447
      %v1598 = vpack.c.b16 %v1451, %v1448
      %v1599 = vpack.c.b16 %v1455, %v1452
      %v1600 = vpack.c.b16 %v1456, %v1453
      %v1601 = vpack.c.b16 %v1457, %v1454
      %1746 = vmatprep.subr.bf16.mxu0 %v1480
      %1747 = vmatpush1.bf16.msra.mxu0 %v1479
      %1748 = vmatprep.subr.bf16.mxu0 %v1477
      %1749 = vmatpush1.bf16.msra.mxu0 %v1476
      %1750 = vmatprep.subr.bf16.mxu0 %v1474
      %1751 = vmatpush1.bf16.msra.mxu0 %v1473
      %1752 = vmatprep.subr.bf16.mxu0 %v1471
      %1753 = vmatpush1.bf16.msra.mxu0 %v1470
      %1754 = vmatprep.subr.bf16.mxu0 %v1468
      %1755 = vmatpush1.bf16.msra.mxu0 %v1467
      %1756 = vmatprep.subr.bf16.mxu0 %v1465
      %1757 = vmatpush1.bf16.msra.mxu0 %v1464
      %1758 = vmatprep.subr.bf16.mxu0 %v1462
      %1759 = vmatpush1.bf16.msra.mxu0 %v1461
      %1760 = vmatprep.subr.bf16.mxu0 %v1459
      %1761 = vmatpush1.bf16.msra.mxu0 %v1458
      %1762 = vmatprep.subr.bf16.mxu0 %v1504
      %1763 = vmatpush2.bf16.msra.mxu0 %v1503
      %1764 = vmatprep.subr.bf16.mxu0 %v1501
      %1765 = vmatpush2.bf16.msra.mxu0 %v1500
      %1766 = vmatprep.subr.bf16.mxu0 %v1498
      %1767 = vmatpush2.bf16.msra.mxu0 %v1497
      %1768 = vmatprep.subr.bf16.mxu0 %v1495
      %1769 = vmatpush2.bf16.msra.mxu0 %v1494
      %1770 = vmatprep.subr.bf16.mxu0 %v1492
      %1771 = vmatpush2.bf16.msra.mxu0 %v1491
      %1772 = vmatprep.subr.bf16.mxu0 %v1489
      %1773 = vmatpush2.bf16.msra.mxu0 %v1488
      %1774 = vmatprep.subr.bf16.mxu0 %v1486
      %1775 = vmatpush2.bf16.msra.mxu0 %v1485
      %1776 = vmatprep.subr.bf16.mxu0 %v1483
      %1777 = vmatpush2.bf16.msra.mxu0 %v1482
      %1778 = vmatprep.mubr.bf16.mxu0 %v710
      %1779 = vmatmul.mubr.bf16.gmra.mxu0 %v709
      %v1780 = vpop.f32.mrf.mxu0
      %v1781 = vadd.f32 %v966, %v1780
      %v1782 = vpop.f32.mrf.mxu0
      %v1783 = vadd.f32 %v970, %v1782
      %v1784 = vpop.f32.mrf.mxu0
      %v1785 = vadd.f32 %v966, %v1784
      %v1786 = vpop.f32.mrf.mxu0
      %v1787 = vadd.f32 %v970, %v1786
      %1788 = vmatprep.mubr.bf16.mxu0 %v716
      %1789 = vmatmul.mubr.bf16.gmra.mxu0 %v715
      %v1790 = vpop.f32.mrf.mxu0
      %v1791 = vadd.f32 %v966, %v1790
      %v1792 = vpop.f32.mrf.mxu0
      %v1793 = vadd.f32 %v970, %v1792
      %v1794 = vpop.f32.mrf.mxu0
      %v1795 = vadd.f32 %v966, %v1794
      %v1796 = vpop.f32.mrf.mxu0
      %v1797 = vadd.f32 %v970, %v1796
      %1798 = vmatprep.mubr.bf16.mxu0 %v722
      %1799 = vmatmul.mubr.bf16.gmra.mxu0 %v721
      %v1800 = vpop.f32.mrf.mxu0
      %v1801 = vadd.f32 %v966, %v1800
      %v1802 = vpop.f32.mrf.mxu0
      %v1803 = vadd.f32 %v970, %v1802
      %v1804 = vpop.f32.mrf.mxu0
      %v1805 = vadd.f32 %v966, %v1804
      %v1806 = vpop.f32.mrf.mxu0
      %v1807 = vadd.f32 %v970, %v1806
      %1808 = vmatprep.mubr.bf16.mxu0 %v728
      %1809 = vmatmul.mubr.bf16.gmra.mxu0 %v727
      %v1810 = vpop.f32.mrf.mxu0
      %v1811 = vadd.f32 %v966, %v1810
      %v1812 = vpop.f32.mrf.mxu0
      %v1813 = vadd.f32 %v970, %v1812
      %v1814 = vpop.f32.mrf.mxu0
      %v1815 = vadd.f32 %v966, %v1814
      %v1816 = vpop.f32.mrf.mxu0
      %v1817 = vadd.f32 %v970, %v1816
      %1818 = vmatprep.mubr.bf16.mxu0 %v734
      %1819 = vmatmul.mubr.bf16.gmra.mxu0 %v733
      %v1820 = vpop.f32.mrf.mxu0
      %v1821 = vadd.f32 %v966, %v1820
      %v1822 = vpop.f32.mrf.mxu0
      %v1823 = vadd.f32 %v970, %v1822
      %v1824 = vpop.f32.mrf.mxu0
      %v1825 = vadd.f32 %v966, %v1824
      %v1826 = vpop.f32.mrf.mxu0
      %v1827 = vadd.f32 %v970, %v1826
      %1828 = vmatprep.mubr.bf16.mxu0 %v740
      %1829 = vmatmul.mubr.bf16.gmra.mxu0 %v739
      %v1830 = vpop.f32.mrf.mxu0
      %v1831 = vadd.f32 %v966, %v1830
      %v1832 = vpop.f32.mrf.mxu0
      %v1833 = vadd.f32 %v970, %v1832
      %v1834 = vpop.f32.mrf.mxu0
      %v1835 = vadd.f32 %v966, %v1834
      %v1836 = vpop.f32.mrf.mxu0
      %v1837 = vadd.f32 %v970, %v1836
      %1838 = vmatprep.mubr.bf16.mxu0 %v746
      %1839 = vmatmul.mubr.bf16.gmra.mxu0 %v745
      %v1840 = vpop.f32.mrf.mxu0
      %v1841 = vadd.f32 %v966, %v1840
      %v1842 = vpop.f32.mrf.mxu0
      %v1843 = vadd.f32 %v970, %v1842
      %v1844 = vpop.f32.mrf.mxu0
      %v1845 = vadd.f32 %v966, %v1844
      %v1846 = vpop.f32.mrf.mxu0
      %v1847 = vadd.f32 %v970, %v1846
      %1848 = vmatprep.mubr.bf16.mxu0 %v752
      %1849 = vmatmul.mubr.bf16.gmra.mxu0 %v751
      %v1850 = vpop.f32.mrf.mxu0
      %v1851 = vadd.f32 %v966, %v1850
      %v1852 = vpop.f32.mrf.mxu0
      %v1853 = vadd.f32 %v970, %v1852
      %v1854 = vpop.f32.mrf.mxu0
      %v1855 = vadd.f32 %v966, %v1854
      %v1856 = vpop.f32.mrf.mxu0
      %v1857 = vadd.f32 %v970, %v1856
      %1858 = vmatprep.mubr.bf16.mxu0 %v758
      %1859 = vmatmul.mubr.bf16.gmra.mxu0 %v757
      %v1860 = vpop.f32.mrf.mxu0
      %v1861 = vadd.f32 %v966, %v1860
      %v1862 = vpop.f32.mrf.mxu0
      %v1863 = vadd.f32 %v970, %v1862
      %v1864 = vpop.f32.mrf.mxu0
      %v1865 = vadd.f32 %v966, %v1864
      %v1866 = vpop.f32.mrf.mxu0
      %v1867 = vadd.f32 %v970, %v1866
      %1868 = vmatprep.mubr.bf16.mxu0 %v764
      %1869 = vmatmul.mubr.bf16.gmra.mxu0 %v763
      %v1870 = vpop.f32.mrf.mxu0
      %v1871 = vadd.f32 %v966, %v1870
      %v1872 = vpop.f32.mrf.mxu0
      %v1873 = vadd.f32 %v970, %v1872
      %v1874 = vpop.f32.mrf.mxu0
      %v1875 = vadd.f32 %v966, %v1874
      %v1876 = vpop.f32.mrf.mxu0
      %v1877 = vadd.f32 %v970, %v1876
      %1878 = vdwg.mxu0
      %1879 = vmatprep.subr.bf16.mxu0 %v1528
      %1880 = vmatpush1.bf16.msra.mxu0 %v1527
      %1881 = vmatprep.subr.bf16.mxu0 %v1525
      %1882 = vmatpush1.bf16.msra.mxu0 %v1524
      %1883 = vmatprep.subr.bf16.mxu0 %v1522
      %1884 = vmatpush1.bf16.msra.mxu0 %v1521
      %1885 = vmatprep.subr.bf16.mxu0 %v1519
      %1886 = vmatpush1.bf16.msra.mxu0 %v1518
      %1887 = vmatprep.subr.bf16.mxu0 %v1516
      %1888 = vmatpush1.bf16.msra.mxu0 %v1515
      %1889 = vmatprep.subr.bf16.mxu0 %v1513
      %1890 = vmatpush1.bf16.msra.mxu0 %v1512
      %1891 = vmatprep.subr.bf16.mxu0 %v1510
      %1892 = vmatpush1.bf16.msra.mxu0 %v1509
      %1893 = vmatprep.subr.bf16.mxu0 %v1507
      %1894 = vmatpush1.bf16.msra.mxu0 %v1506
      %1895 = vmatprep.subr.bf16.mxu0 %v1552
      %1896 = vmatpush2.bf16.msra.mxu0 %v1551
      %1897 = vmatprep.subr.bf16.mxu0 %v1549
      %1898 = vmatpush2.bf16.msra.mxu0 %v1548
      %1899 = vmatprep.subr.bf16.mxu0 %v1546
      %1900 = vmatpush2.bf16.msra.mxu0 %v1545
      %1901 = vmatprep.subr.bf16.mxu0 %v1543
      %1902 = vmatpush2.bf16.msra.mxu0 %v1542
      %1903 = vmatprep.subr.bf16.mxu0 %v1540
      %1904 = vmatpush2.bf16.msra.mxu0 %v1539
      %1905 = vmatprep.subr.bf16.mxu0 %v1537
      %1906 = vmatpush2.bf16.msra.mxu0 %v1536
      %1907 = vmatprep.subr.bf16.mxu0 %v1534
      %1908 = vmatpush2.bf16.msra.mxu0 %v1533
      %1909 = vmatprep.subr.bf16.mxu0 %v1531
      %1910 = vmatpush2.bf16.msra.mxu0 %v1530
      %1911 = vmatprep.mubr.bf16.mxu0 %v712
      %1912 = vmatmul.mubr.bf16.gmra.mxu0 %v711
      %v1913 = vpop.f32.mrf.mxu0
      %v1914 = vadd.f32 %v1781, %v1913
      %v1915 = vpop.f32.mrf.mxu0
      %v1916 = vadd.f32 %v1783, %v1915
      %v1917 = vpop.f32.mrf.mxu0
      %v1918 = vadd.f32 %v1785, %v1917
      %v1919 = vpop.f32.mrf.mxu0
      %v1920 = vadd.f32 %v1787, %v1919
      %1921 = vmatprep.mubr.bf16.mxu0 %v718
      %1922 = vmatmul.mubr.bf16.gmra.mxu0 %v717
      %v1923 = vpop.f32.mrf.mxu0
      %v1924 = vadd.f32 %v1791, %v1923
      %v1925 = vpop.f32.mrf.mxu0
      %v1926 = vadd.f32 %v1793, %v1925
      %v1927 = vpop.f32.mrf.mxu0
      %v1928 = vadd.f32 %v1795, %v1927
      %v1929 = vpop.f32.mrf.mxu0
      %v1930 = vadd.f32 %v1797, %v1929
      %1931 = vmatprep.mubr.bf16.mxu0 %v724
      %1932 = vmatmul.mubr.bf16.gmra.mxu0 %v723
      %v1933 = vpop.f32.mrf.mxu0
      %v1934 = vadd.f32 %v1801, %v1933
      %v1935 = vpop.f32.mrf.mxu0
      %v1936 = vadd.f32 %v1803, %v1935
      %v1937 = vpop.f32.mrf.mxu0
      %v1938 = vadd.f32 %v1805, %v1937
      %v1939 = vpop.f32.mrf.mxu0
      %v1940 = vadd.f32 %v1807, %v1939
      %1941 = vmatprep.mubr.bf16.mxu0 %v730
      %1942 = vmatmul.mubr.bf16.gmra.mxu0 %v729
      %v1943 = vpop.f32.mrf.mxu0
      %v1944 = vadd.f32 %v1811, %v1943
      %v1945 = vpop.f32.mrf.mxu0
      %v1946 = vadd.f32 %v1813, %v1945
      %v1947 = vpop.f32.mrf.mxu0
      %v1948 = vadd.f32 %v1815, %v1947
      %v1949 = vpop.f32.mrf.mxu0
      %v1950 = vadd.f32 %v1817, %v1949
      %1951 = vmatprep.mubr.bf16.mxu0 %v736
      %1952 = vmatmul.mubr.bf16.gmra.mxu0 %v735
      %v1953 = vpop.f32.mrf.mxu0
      %v1954 = vadd.f32 %v1821, %v1953
      %v1955 = vpop.f32.mrf.mxu0
      %v1956 = vadd.f32 %v1823, %v1955
      %v1957 = vpop.f32.mrf.mxu0
      %v1958 = vadd.f32 %v1825, %v1957
      %v1959 = vpop.f32.mrf.mxu0
      %v1960 = vadd.f32 %v1827, %v1959
      %1961 = vmatprep.mubr.bf16.mxu0 %v742
      %1962 = vmatmul.mubr.bf16.gmra.mxu0 %v741
      %v1963 = vpop.f32.mrf.mxu0
      %v1964 = vadd.f32 %v1831, %v1963
      %v1965 = vpop.f32.mrf.mxu0
      %v1966 = vadd.f32 %v1833, %v1965
      %v1967 = vpop.f32.mrf.mxu0
      %v1968 = vadd.f32 %v1835, %v1967
      %v1969 = vpop.f32.mrf.mxu0
      %v1970 = vadd.f32 %v1837, %v1969
      %1971 = vmatprep.mubr.bf16.mxu0 %v748
      %1972 = vmatmul.mubr.bf16.gmra.mxu0 %v747
      %v1973 = vpop.f32.mrf.mxu0
      %v1974 = vadd.f32 %v1841, %v1973
      %v1975 = vpop.f32.mrf.mxu0
      %v1976 = vadd.f32 %v1843, %v1975
      %v1977 = vpop.f32.mrf.mxu0
      %v1978 = vadd.f32 %v1845, %v1977
      %v1979 = vpop.f32.mrf.mxu0
      %v1980 = vadd.f32 %v1847, %v1979
      %1981 = vmatprep.mubr.bf16.mxu0 %v754
      %1982 = vmatmul.mubr.bf16.gmra.mxu0 %v753
      %v1983 = vpop.f32.mrf.mxu0
      %v1984 = vadd.f32 %v1851, %v1983
      %v1985 = vpop.f32.mrf.mxu0
      %v1986 = vadd.f32 %v1853, %v1985
      %v1987 = vpop.f32.mrf.mxu0
      %v1988 = vadd.f32 %v1855, %v1987
      %v1989 = vpop.f32.mrf.mxu0
      %v1990 = vadd.f32 %v1857, %v1989
      %1991 = vmatprep.mubr.bf16.mxu0 %v760
      %1992 = vmatmul.mubr.bf16.gmra.mxu0 %v759
      %v1993 = vpop.f32.mrf.mxu0
      %v1994 = vadd.f32 %v1861, %v1993
      %v1995 = vpop.f32.mrf.mxu0
      %v1996 = vadd.f32 %v1863, %v1995
      %v1997 = vpop.f32.mrf.mxu0
      %v1998 = vadd.f32 %v1865, %v1997
      %v1999 = vpop.f32.mrf.mxu0
      %v2000 = vadd.f32 %v1867, %v1999
      %2001 = vmatprep.mubr.bf16.mxu0 %v766
      %2002 = vmatmul.mubr.bf16.gmra.mxu0 %v765
      %v2003 = vpop.f32.mrf.mxu0
      %v2004 = vadd.f32 %v1871, %v2003
      %v2005 = vpop.f32.mrf.mxu0
      %v2006 = vadd.f32 %v1873, %v2005
      %v2007 = vpop.f32.mrf.mxu0
      %v2008 = vadd.f32 %v1875, %v2007
      %v2009 = vpop.f32.mrf.mxu0
      %v2010 = vadd.f32 %v1877, %v2009
      %2011 = vdwg.mxu0
      %2012 = vmatprep.subr.bf16.mxu0 %v1576
      %2013 = vmatpush1.bf16.msra.mxu0 %v1575
      %2014 = vmatprep.subr.bf16.mxu0 %v1573
      %2015 = vmatpush1.bf16.msra.mxu0 %v1572
      %2016 = vmatprep.subr.bf16.mxu0 %v1570
      %2017 = vmatpush1.bf16.msra.mxu0 %v1569
      %2018 = vmatprep.subr.bf16.mxu0 %v1567
      %2019 = vmatpush1.bf16.msra.mxu0 %v1566
      %2020 = vmatprep.subr.bf16.mxu0 %v1564
      %2021 = vmatpush1.bf16.msra.mxu0 %v1563
      %2022 = vmatprep.subr.bf16.mxu0 %v1561
      %2023 = vmatpush1.bf16.msra.mxu0 %v1560
      %2024 = vmatprep.subr.bf16.mxu0 %v1558
      %2025 = vmatpush1.bf16.msra.mxu0 %v1557
      %2026 = vmatprep.subr.bf16.mxu0 %v1555
      %2027 = vmatpush1.bf16.msra.mxu0 %v1554
      %2028 = vmatprep.subr.bf16.mxu0 %v1600
      %2029 = vmatpush2.bf16.msra.mxu0 %v1599
      %2030 = vmatprep.subr.bf16.mxu0 %v1597
      %2031 = vmatpush2.bf16.msra.mxu0 %v1596
      %2032 = vmatprep.subr.bf16.mxu0 %v1594
      %2033 = vmatpush2.bf16.msra.mxu0 %v1593
      %2034 = vmatprep.subr.bf16.mxu0 %v1591
      %2035 = vmatpush2.bf16.msra.mxu0 %v1590
      %2036 = vmatprep.subr.bf16.mxu0 %v1588
      %2037 = vmatpush2.bf16.msra.mxu0 %v1587
      %2038 = vmatprep.subr.bf16.mxu0 %v1585
      %2039 = vmatpush2.bf16.msra.mxu0 %v1584
      %2040 = vmatprep.subr.bf16.mxu0 %v1582
      %2041 = vmatpush2.bf16.msra.mxu0 %v1581
      %2042 = vmatprep.subr.bf16.mxu0 %v1579
      %2043 = vmatpush2.bf16.msra.mxu0 %v1578
      %2044 = vmatprep.mubr.bf16.mxu0 %v714
      %2045 = vmatmul.mubr.bf16.gmra.mxu0 %v713
      %v2046 = vpop.f32.mrf.mxu0
      %v2047 = vadd.f32 %v1914, %v2046
      %v2048 = vpop.f32.mrf.mxu0
      %v2049 = vadd.f32 %v1916, %v2048
      %v2050 = vpop.f32.mrf.mxu0
      %v2051 = vadd.f32 %v1918, %v2050
      %v2052 = vpop.f32.mrf.mxu0
      %v2053 = vadd.f32 %v1920, %v2052
      %2054 = vmatprep.mubr.bf16.mxu0 %v720
      %2055 = vmatmul.mubr.bf16.gmra.mxu0 %v719
      %v2056 = vpop.f32.mrf.mxu0
      %v2057 = vadd.f32 %v1924, %v2056
      %v2058 = vpop.f32.mrf.mxu0
      %v2059 = vadd.f32 %v1926, %v2058
      %v2060 = vpop.f32.mrf.mxu0
      %v2061 = vadd.f32 %v1928, %v2060
      %v2062 = vpop.f32.mrf.mxu0
      %v2063 = vadd.f32 %v1930, %v2062
      %2064 = vmatprep.mubr.bf16.mxu0 %v726
      %2065 = vmatmul.mubr.bf16.gmra.mxu0 %v725
      %v2066 = vpop.f32.mrf.mxu0
      %v2067 = vadd.f32 %v1934, %v2066
      %v2068 = vpop.f32.mrf.mxu0
      %v2069 = vadd.f32 %v1936, %v2068
      %v2070 = vpop.f32.mrf.mxu0
      %v2071 = vadd.f32 %v1938, %v2070
      %v2072 = vpop.f32.mrf.mxu0
      %v2073 = vadd.f32 %v1940, %v2072
      %2074 = vmatprep.mubr.bf16.mxu0 %v732
      %2075 = vmatmul.mubr.bf16.gmra.mxu0 %v731
      %v2076 = vpop.f32.mrf.mxu0
      %v2077 = vadd.f32 %v1944, %v2076
      %v2078 = vpop.f32.mrf.mxu0
      %v2079 = vadd.f32 %v1946, %v2078
      %v2080 = vpop.f32.mrf.mxu0
      %v2081 = vadd.f32 %v1948, %v2080
      %v2082 = vpop.f32.mrf.mxu0
      %v2083 = vadd.f32 %v1950, %v2082
      %2084 = vmatprep.mubr.bf16.mxu0 %v738
      %2085 = vmatmul.mubr.bf16.gmra.mxu0 %v737
      %v2086 = vpop.f32.mrf.mxu0
      %v2087 = vadd.f32 %v1954, %v2086
      %v2088 = vpop.f32.mrf.mxu0
      %v2089 = vadd.f32 %v1956, %v2088
      %v2090 = vpop.f32.mrf.mxu0
      %v2091 = vadd.f32 %v1958, %v2090
      %v2092 = vpop.f32.mrf.mxu0
      %v2093 = vadd.f32 %v1960, %v2092
      %2094 = vmatprep.mubr.bf16.mxu0 %v744
      %2095 = vmatmul.mubr.bf16.gmra.mxu0 %v743
      %v2096 = vpop.f32.mrf.mxu0
      %v2097 = vadd.f32 %v1964, %v2096
      %v2098 = vpop.f32.mrf.mxu0
      %v2099 = vadd.f32 %v1966, %v2098
      %v2100 = vpop.f32.mrf.mxu0
      %v2101 = vadd.f32 %v1968, %v2100
      %v2102 = vpop.f32.mrf.mxu0
      %v2103 = vadd.f32 %v1970, %v2102
      %2104 = vmatprep.mubr.bf16.mxu0 %v750
      %2105 = vmatmul.mubr.bf16.gmra.mxu0 %v749
      %v2106 = vpop.f32.mrf.mxu0
      %v2107 = vadd.f32 %v1974, %v2106
      %v2108 = vpop.f32.mrf.mxu0
      %v2109 = vadd.f32 %v1976, %v2108
      %v2110 = vpop.f32.mrf.mxu0
      %v2111 = vadd.f32 %v1978, %v2110
      %v2112 = vpop.f32.mrf.mxu0
      %v2113 = vadd.f32 %v1980, %v2112
      %2114 = vmatprep.mubr.bf16.mxu0 %v756
      %2115 = vmatmul.mubr.bf16.gmra.mxu0 %v755
      %v2116 = vpop.f32.mrf.mxu0
      %v2117 = vadd.f32 %v1984, %v2116
      %v2118 = vpop.f32.mrf.mxu0
      %v2119 = vadd.f32 %v1986, %v2118
      %v2120 = vpop.f32.mrf.mxu0
      %v2121 = vadd.f32 %v1988, %v2120
      %v2122 = vpop.f32.mrf.mxu0
      %v2123 = vadd.f32 %v1990, %v2122
      %2124 = vmatprep.mubr.bf16.mxu0 %v762
      %2125 = vmatmul.mubr.bf16.gmra.mxu0 %v761
      %v2126 = vpop.f32.mrf.mxu0
      %v2127 = vadd.f32 %v1994, %v2126
      %v2128 = vpop.f32.mrf.mxu0
      %v2129 = vadd.f32 %v1996, %v2128
      %v2130 = vpop.f32.mrf.mxu0
      %v2131 = vadd.f32 %v1998, %v2130
      %v2132 = vpop.f32.mrf.mxu0
      %v2133 = vadd.f32 %v2000, %v2132
      %2134 = vmatprep.mubr.bf16.mxu0 %v768
      %2135 = vmatmul.mubr.bf16.gmra.mxu0 %v767
      %v2136 = vpop.f32.mrf.mxu0
      %v2137 = vadd.f32 %v2004, %v2136
      %v2138 = vpop.f32.mrf.mxu0
      %v2139 = vadd.f32 %v2006, %v2138
      %v2140 = vpop.f32.mrf.mxu0
      %v2141 = vadd.f32 %v2008, %v2140
      %v2142 = vpop.f32.mrf.mxu0
      %v2143 = vadd.f32 %v2010, %v2142
      %2144 = vdwg.mxu0
      %2145 = vmatprep.subr.bf16.mxu0 0
      %2146 = vmatpush1.bf16.msra.mxu0 %v1481
      %2147 = vmatprep.subr.bf16.mxu0 0
      %2148 = vmatpush1.bf16.msra.mxu0 %v1478
      %2149 = vmatprep.subr.bf16.mxu0 0
      %2150 = vmatpush1.bf16.msra.mxu0 %v1475
      %2151 = vmatprep.subr.bf16.mxu0 0
      %2152 = vmatpush1.bf16.msra.mxu0 %v1472
      %2153 = vmatprep.subr.bf16.mxu0 0
      %2154 = vmatpush1.bf16.msra.mxu0 %v1469
      %2155 = vmatprep.subr.bf16.mxu0 0
      %2156 = vmatpush1.bf16.msra.mxu0 %v1466
      %2157 = vmatprep.subr.bf16.mxu0 0
      %2158 = vmatpush1.bf16.msra.mxu0 %v1463
      %2159 = vmatprep.subr.bf16.mxu0 0
      %2160 = vmatpush1.bf16.msra.mxu0 %v1460
      %2161 = vmatprep.subr.bf16.mxu0 0
      %2162 = vmatpush2.bf16.msra.mxu0 %v1505
      %2163 = vmatprep.subr.bf16.mxu0 0
      %2164 = vmatpush2.bf16.msra.mxu0 %v1502
      %2165 = vmatprep.subr.bf16.mxu0 0
      %2166 = vmatpush2.bf16.msra.mxu0 %v1499
      %2167 = vmatprep.subr.bf16.mxu0 0
      %2168 = vmatpush2.bf16.msra.mxu0 %v1496
      %2169 = vmatprep.subr.bf16.mxu0 0
      %2170 = vmatpush2.bf16.msra.mxu0 %v1493
      %2171 = vmatprep.subr.bf16.mxu0 0
      %2172 = vmatpush2.bf16.msra.mxu0 %v1490
      %2173 = vmatprep.subr.bf16.mxu0 0
      %2174 = vmatpush2.bf16.msra.mxu0 %v1487
      %2175 = vmatprep.subr.bf16.mxu0 0
      %2176 = vmatpush2.bf16.msra.mxu0 %v1484
      %2177 = vmatprep.mubr.bf16.mxu0 %v710
      %2178 = vmatmul.mubr.bf16.gmra.mxu0 %v709
      %v2179 = vpop.f32.mrf.mxu0
      %v2180 = vadd.f32 %v974, %v2179
      %v2181 = vpop.f32.mrf.mxu0
      %v2182 = vpop.f32.mrf.mxu0
      %v2183 = vadd.f32 %v974, %v2182
      %v2184 = vpop.f32.mrf.mxu0
      %2185 = vmatprep.mubr.bf16.mxu0 %v716
      %2186 = vmatmul.mubr.bf16.gmra.mxu0 %v715
      %v2187 = vpop.f32.mrf.mxu0
      %v2188 = vadd.f32 %v974, %v2187
      %v2189 = vpop.f32.mrf.mxu0
      %v2190 = vpop.f32.mrf.mxu0
      %v2191 = vadd.f32 %v974, %v2190
      %v2192 = vpop.f32.mrf.mxu0
      %2193 = vmatprep.mubr.bf16.mxu0 %v722
      %2194 = vmatmul.mubr.bf16.gmra.mxu0 %v721
      %v2195 = vpop.f32.mrf.mxu0
      %v2196 = vadd.f32 %v974, %v2195
      %v2197 = vpop.f32.mrf.mxu0
      %v2198 = vpop.f32.mrf.mxu0
      %v2199 = vadd.f32 %v974, %v2198
      %v2200 = vpop.f32.mrf.mxu0
      %2201 = vmatprep.mubr.bf16.mxu0 %v728
      %2202 = vmatmul.mubr.bf16.gmra.mxu0 %v727
      %v2203 = vpop.f32.mrf.mxu0
      %v2204 = vadd.f32 %v974, %v2203
      %v2205 = vpop.f32.mrf.mxu0
      %v2206 = vpop.f32.mrf.mxu0
      %v2207 = vadd.f32 %v974, %v2206
      %v2208 = vpop.f32.mrf.mxu0
      %2209 = vmatprep.mubr.bf16.mxu0 %v734
      %2210 = vmatmul.mubr.bf16.gmra.mxu0 %v733
      %v2211 = vpop.f32.mrf.mxu0
      %v2212 = vadd.f32 %v974, %v2211
      %v2213 = vpop.f32.mrf.mxu0
      %v2214 = vpop.f32.mrf.mxu0
      %v2215 = vadd.f32 %v974, %v2214
      %v2216 = vpop.f32.mrf.mxu0
      %2217 = vmatprep.mubr.bf16.mxu0 %v740
      %2218 = vmatmul.mubr.bf16.gmra.mxu0 %v739
      %v2219 = vpop.f32.mrf.mxu0
      %v2220 = vadd.f32 %v974, %v2219
      %v2221 = vpop.f32.mrf.mxu0
      %v2222 = vpop.f32.mrf.mxu0
      %v2223 = vadd.f32 %v974, %v2222
      %v2224 = vpop.f32.mrf.mxu0
      %2225 = vmatprep.mubr.bf16.mxu0 %v746
      %2226 = vmatmul.mubr.bf16.gmra.mxu0 %v745
      %v2227 = vpop.f32.mrf.mxu0
      %v2228 = vadd.f32 %v974, %v2227
      %v2229 = vpop.f32.mrf.mxu0
      %v2230 = vpop.f32.mrf.mxu0
      %v2231 = vadd.f32 %v974, %v2230
      %v2232 = vpop.f32.mrf.mxu0
      %2233 = vmatprep.mubr.bf16.mxu0 %v752
      %2234 = vmatmul.mubr.bf16.gmra.mxu0 %v751
      %v2235 = vpop.f32.mrf.mxu0
      %v2236 = vadd.f32 %v974, %v2235
      %v2237 = vpop.f32.mrf.mxu0
      %v2238 = vpop.f32.mrf.mxu0
      %v2239 = vadd.f32 %v974, %v2238
      %v2240 = vpop.f32.mrf.mxu0
      %2241 = vmatprep.mubr.bf16.mxu0 %v758
      %2242 = vmatmul.mubr.bf16.gmra.mxu0 %v757
      %v2243 = vpop.f32.mrf.mxu0
      %v2244 = vadd.f32 %v974, %v2243
      %v2245 = vpop.f32.mrf.mxu0
      %v2246 = vpop.f32.mrf.mxu0
      %v2247 = vadd.f32 %v974, %v2246
      %v2248 = vpop.f32.mrf.mxu0
      %2249 = vmatprep.mubr.bf16.mxu0 %v764
      %2250 = vmatmul.mubr.bf16.gmra.mxu0 %v763
      %v2251 = vpop.f32.mrf.mxu0
      %v2252 = vadd.f32 %v974, %v2251
      %v2253 = vpop.f32.mrf.mxu0
      %v2254 = vpop.f32.mrf.mxu0
      %v2255 = vadd.f32 %v974, %v2254
      %v2256 = vpop.f32.mrf.mxu0
      %2257 = vdwg.mxu0
      %2258 = vmatprep.subr.bf16.mxu0 0
      %2259 = vmatpush1.bf16.msra.mxu0 %v1529
      %2260 = vmatprep.subr.bf16.mxu0 0
      %2261 = vmatpush1.bf16.msra.mxu0 %v1526
      %2262 = vmatprep.subr.bf16.mxu0 0
      %2263 = vmatpush1.bf16.msra.mxu0 %v1523
      %2264 = vmatprep.subr.bf16.mxu0 0
      %2265 = vmatpush1.bf16.msra.mxu0 %v1520
      %2266 = vmatprep.subr.bf16.mxu0 0
      %2267 = vmatpush1.bf16.msra.mxu0 %v1517
      %2268 = vmatprep.subr.bf16.mxu0 0
      %2269 = vmatpush1.bf16.msra.mxu0 %v1514
      %2270 = vmatprep.subr.bf16.mxu0 0
      %2271 = vmatpush1.bf16.msra.mxu0 %v1511
      %2272 = vmatprep.subr.bf16.mxu0 0
      %2273 = vmatpush1.bf16.msra.mxu0 %v1508
      %2274 = vmatprep.subr.bf16.mxu0 0
      %2275 = vmatpush2.bf16.msra.mxu0 %v1553
      %2276 = vmatprep.subr.bf16.mxu0 0
      %2277 = vmatpush2.bf16.msra.mxu0 %v1550
      %2278 = vmatprep.subr.bf16.mxu0 0
      %2279 = vmatpush2.bf16.msra.mxu0 %v1547
      %2280 = vmatprep.subr.bf16.mxu0 0
      %2281 = vmatpush2.bf16.msra.mxu0 %v1544
      %2282 = vmatprep.subr.bf16.mxu0 0
      %2283 = vmatpush2.bf16.msra.mxu0 %v1541
      %2284 = vmatprep.subr.bf16.mxu0 0
      %2285 = vmatpush2.bf16.msra.mxu0 %v1538
      %2286 = vmatprep.subr.bf16.mxu0 0
      %2287 = vmatpush2.bf16.msra.mxu0 %v1535
      %2288 = vmatprep.subr.bf16.mxu0 0
      %2289 = vmatpush2.bf16.msra.mxu0 %v1532
      %2290 = vmatprep.mubr.bf16.mxu0 %v712
      %2291 = vmatmul.mubr.bf16.gmra.mxu0 %v711
      %v2292 = vpop.f32.mrf.mxu0
      %v2293 = vadd.f32 %v2180, %v2292
      %v2294 = vpop.f32.mrf.mxu0
      %v2295 = vpop.f32.mrf.mxu0
      %v2296 = vadd.f32 %v2183, %v2295
      %v2297 = vpop.f32.mrf.mxu0
      %2298 = vmatprep.mubr.bf16.mxu0 %v718
      %2299 = vmatmul.mubr.bf16.gmra.mxu0 %v717
      %v2300 = vpop.f32.mrf.mxu0
      %v2301 = vadd.f32 %v2188, %v2300
      %v2302 = vpop.f32.mrf.mxu0
      %v2303 = vpop.f32.mrf.mxu0
      %v2304 = vadd.f32 %v2191, %v2303
      %v2305 = vpop.f32.mrf.mxu0
      %2306 = vmatprep.mubr.bf16.mxu0 %v724
      %2307 = vmatmul.mubr.bf16.gmra.mxu0 %v723
      %v2308 = vpop.f32.mrf.mxu0
      %v2309 = vadd.f32 %v2196, %v2308
      %v2310 = vpop.f32.mrf.mxu0
      %v2311 = vpop.f32.mrf.mxu0
      %v2312 = vadd.f32 %v2199, %v2311
      %v2313 = vpop.f32.mrf.mxu0
      %2314 = vmatprep.mubr.bf16.mxu0 %v730
      %2315 = vmatmul.mubr.bf16.gmra.mxu0 %v729
      %v2316 = vpop.f32.mrf.mxu0
      %v2317 = vadd.f32 %v2204, %v2316
      %v2318 = vpop.f32.mrf.mxu0
      %v2319 = vpop.f32.mrf.mxu0
      %v2320 = vadd.f32 %v2207, %v2319
      %v2321 = vpop.f32.mrf.mxu0
      %2322 = vmatprep.mubr.bf16.mxu0 %v736
      %2323 = vmatmul.mubr.bf16.gmra.mxu0 %v735
      %v2324 = vpop.f32.mrf.mxu0
      %v2325 = vadd.f32 %v2212, %v2324
      %v2326 = vpop.f32.mrf.mxu0
      %v2327 = vpop.f32.mrf.mxu0
      %v2328 = vadd.f32 %v2215, %v2327
      %v2329 = vpop.f32.mrf.mxu0
      %2330 = vmatprep.mubr.bf16.mxu0 %v742
      %2331 = vmatmul.mubr.bf16.gmra.mxu0 %v741
      %v2332 = vpop.f32.mrf.mxu0
      %v2333 = vadd.f32 %v2220, %v2332
      %v2334 = vpop.f32.mrf.mxu0
      %v2335 = vpop.f32.mrf.mxu0
      %v2336 = vadd.f32 %v2223, %v2335
      %v2337 = vpop.f32.mrf.mxu0
      %2338 = vmatprep.mubr.bf16.mxu0 %v748
      %2339 = vmatmul.mubr.bf16.gmra.mxu0 %v747
      %v2340 = vpop.f32.mrf.mxu0
      %v2341 = vadd.f32 %v2228, %v2340
      %v2342 = vpop.f32.mrf.mxu0
      %v2343 = vpop.f32.mrf.mxu0
      %v2344 = vadd.f32 %v2231, %v2343
      %v2345 = vpop.f32.mrf.mxu0
      %2346 = vmatprep.mubr.bf16.mxu0 %v754
      %2347 = vmatmul.mubr.bf16.gmra.mxu0 %v753
      %v2348 = vpop.f32.mrf.mxu0
      %v2349 = vadd.f32 %v2236, %v2348
      %v2350 = vpop.f32.mrf.mxu0
      %v2351 = vpop.f32.mrf.mxu0
      %v2352 = vadd.f32 %v2239, %v2351
      %v2353 = vpop.f32.mrf.mxu0
      %2354 = vmatprep.mubr.bf16.mxu0 %v760
      %2355 = vmatmul.mubr.bf16.gmra.mxu0 %v759
      %v2356 = vpop.f32.mrf.mxu0
      %v2357 = vadd.f32 %v2244, %v2356
      %v2358 = vpop.f32.mrf.mxu0
      %v2359 = vpop.f32.mrf.mxu0
      %v2360 = vadd.f32 %v2247, %v2359
      %v2361 = vpop.f32.mrf.mxu0
      %2362 = vmatprep.mubr.bf16.mxu0 %v766
      %2363 = vmatmul.mubr.bf16.gmra.mxu0 %v765
      %v2364 = vpop.f32.mrf.mxu0
      %v2365 = vadd.f32 %v2252, %v2364
      %v2366 = vpop.f32.mrf.mxu0
      %v2367 = vpop.f32.mrf.mxu0
      %v2368 = vadd.f32 %v2255, %v2367
      %v2369 = vpop.f32.mrf.mxu0
      %2370 = vdwg.mxu0
      %2371 = vmatprep.subr.bf16.mxu0 0
      %2372 = vmatpush1.bf16.msra.mxu0 %v1577
      %2373 = vmatprep.subr.bf16.mxu0 0
      %2374 = vmatpush1.bf16.msra.mxu0 %v1574
      %2375 = vmatprep.subr.bf16.mxu0 0
      %2376 = vmatpush1.bf16.msra.mxu0 %v1571
      %2377 = vmatprep.subr.bf16.mxu0 0
      %2378 = vmatpush1.bf16.msra.mxu0 %v1568
      %2379 = vmatprep.subr.bf16.mxu0 0
      %2380 = vmatpush1.bf16.msra.mxu0 %v1565
      %2381 = vmatprep.subr.bf16.mxu0 0
      %2382 = vmatpush1.bf16.msra.mxu0 %v1562
      %2383 = vmatprep.subr.bf16.mxu0 0
      %2384 = vmatpush1.bf16.msra.mxu0 %v1559
      %2385 = vmatprep.subr.bf16.mxu0 0
      %2386 = vmatpush1.bf16.msra.mxu0 %v1556
      %2387 = vmatprep.subr.bf16.mxu0 0
      %2388 = vmatpush2.bf16.msra.mxu0 %v1601
      %2389 = vmatprep.subr.bf16.mxu0 0
      %2390 = vmatpush2.bf16.msra.mxu0 %v1598
      %2391 = vmatprep.subr.bf16.mxu0 0
      %2392 = vmatpush2.bf16.msra.mxu0 %v1595
      %2393 = vmatprep.subr.bf16.mxu0 0
      %2394 = vmatpush2.bf16.msra.mxu0 %v1592
      %2395 = vmatprep.subr.bf16.mxu0 0
      %2396 = vmatpush2.bf16.msra.mxu0 %v1589
      %2397 = vmatprep.subr.bf16.mxu0 0
      %2398 = vmatpush2.bf16.msra.mxu0 %v1586
      %2399 = vmatprep.subr.bf16.mxu0 0
      %2400 = vmatpush2.bf16.msra.mxu0 %v1583
      %2401 = vmatprep.subr.bf16.mxu0 0
      %2402 = vmatpush2.bf16.msra.mxu0 %v1580
      %2403 = vmatprep.mubr.bf16.mxu0 %v714
      %2404 = vmatmul.mubr.bf16.gmra.mxu0 %v713
      %v2405 = vpop.f32.mrf.mxu0
      %v2406 = vadd.f32 %v2293, %v2405
      %v2407 = vpop.f32.mrf.mxu0
      %v2408 = vpop.f32.mrf.mxu0
      %v2409 = vadd.f32 %v2296, %v2408
      %v2410 = vpop.f32.mrf.mxu0
      %2411 = vmatprep.mubr.bf16.mxu0 %v720
      %2412 = vmatmul.mubr.bf16.gmra.mxu0 %v719
      %v2413 = vpop.f32.mrf.mxu0
      %v2414 = vadd.f32 %v2301, %v2413
      %v2415 = vpop.f32.mrf.mxu0
      %v2416 = vpop.f32.mrf.mxu0
      %v2417 = vadd.f32 %v2304, %v2416
      %v2418 = vpop.f32.mrf.mxu0
      %2419 = vmatprep.mubr.bf16.mxu0 %v726
      %2420 = vmatmul.mubr.bf16.gmra.mxu0 %v725
      %v2421 = vpop.f32.mrf.mxu0
      %v2422 = vadd.f32 %v2309, %v2421
      %v2423 = vpop.f32.mrf.mxu0
      %v2424 = vpop.f32.mrf.mxu0
      %v2425 = vadd.f32 %v2312, %v2424
      %v2426 = vpop.f32.mrf.mxu0
      %2427 = vmatprep.mubr.bf16.mxu0 %v732
      %2428 = vmatmul.mubr.bf16.gmra.mxu0 %v731
      %v2429 = vpop.f32.mrf.mxu0
      %v2430 = vadd.f32 %v2317, %v2429
      %v2431 = vpop.f32.mrf.mxu0
      %v2432 = vpop.f32.mrf.mxu0
      %v2433 = vadd.f32 %v2320, %v2432
      %v2434 = vpop.f32.mrf.mxu0
      %2435 = vmatprep.mubr.bf16.mxu0 %v738
      %2436 = vmatmul.mubr.bf16.gmra.mxu0 %v737
      %v2437 = vpop.f32.mrf.mxu0
      %v2438 = vadd.f32 %v2325, %v2437
      %v2439 = vpop.f32.mrf.mxu0
      %v2440 = vpop.f32.mrf.mxu0
      %v2441 = vadd.f32 %v2328, %v2440
      %v2442 = vpop.f32.mrf.mxu0
      %2443 = vmatprep.mubr.bf16.mxu0 %v744
      %2444 = vmatmul.mubr.bf16.gmra.mxu0 %v743
      %v2445 = vpop.f32.mrf.mxu0
      %v2446 = vadd.f32 %v2333, %v2445
      %v2447 = vpop.f32.mrf.mxu0
      %v2448 = vpop.f32.mrf.mxu0
      %v2449 = vadd.f32 %v2336, %v2448
      %v2450 = vpop.f32.mrf.mxu0
      %2451 = vmatprep.mubr.bf16.mxu0 %v750
      %2452 = vmatmul.mubr.bf16.gmra.mxu0 %v749
      %v2453 = vpop.f32.mrf.mxu0
      %v2454 = vadd.f32 %v2341, %v2453
      %v2455 = vpop.f32.mrf.mxu0
      %v2456 = vpop.f32.mrf.mxu0
      %v2457 = vadd.f32 %v2344, %v2456
      %v2458 = vpop.f32.mrf.mxu0
      %2459 = vmatprep.mubr.bf16.mxu0 %v756
      %2460 = vmatmul.mubr.bf16.gmra.mxu0 %v755
      %v2461 = vpop.f32.mrf.mxu0
      %v2462 = vadd.f32 %v2349, %v2461
      %v2463 = vpop.f32.mrf.mxu0
      %v2464 = vpop.f32.mrf.mxu0
      %v2465 = vadd.f32 %v2352, %v2464
      %v2466 = vpop.f32.mrf.mxu0
      %2467 = vmatprep.mubr.bf16.mxu0 %v762
      %2468 = vmatmul.mubr.bf16.gmra.mxu0 %v761
      %v2469 = vpop.f32.mrf.mxu0
      %v2470 = vadd.f32 %v2357, %v2469
      %v2471 = vpop.f32.mrf.mxu0
      %v2472 = vpop.f32.mrf.mxu0
      %v2473 = vadd.f32 %v2360, %v2472
      %v2474 = vpop.f32.mrf.mxu0
      %2475 = vmatprep.mubr.bf16.mxu0 %v768
      %2476 = vmatmul.mubr.bf16.gmra.mxu0 %v767
      %v2477 = vpop.f32.mrf.mxu0
      %v2478 = vadd.f32 %v2365, %v2477
      %v2479 = vpop.f32.mrf.mxu0
      %v2480 = vpop.f32.mrf.mxu0
      %v2481 = vadd.f32 %v2368, %v2480
      %v2482 = vpop.f32.mrf.mxu0
      %2483 = vdwg.mxu0
      %v2484 = vtanh.pop %v2047
      %v2485 = vtanh.pop %v2049
      %v2486 = vtanh.pop %v2051
      %v2487 = vtanh.pop %v2053
      %v2488 = vtanh.pop %v2057
      %v2489 = vtanh.pop %v2059
      %v2490 = vtanh.pop %v2061
      %v2491 = vtanh.pop %v2063
      %v2492 = vtanh.pop %v2067
      %v2493 = vtanh.pop %v2069
      %v2494 = vtanh.pop %v2071
      %v2495 = vtanh.pop %v2073
      %v2496 = vtanh.pop %v2077
      %v2497 = vtanh.pop %v2079
      %v2498 = vtanh.pop %v2081
      %v2499 = vtanh.pop %v2083
      %v2500 = vtanh.pop %v2087
      %v2501 = vtanh.pop %v2089
      %v2502 = vtanh.pop %v2091
      %v2503 = vtanh.pop %v2093
      %v2504 = vtanh.pop %v2097
      %v2505 = vtanh.pop %v2099
      %v2506 = vtanh.pop %v2101
      %v2507 = vtanh.pop %v2103
      %v2508 = vtanh.pop %v2107
      %v2509 = vtanh.pop %v2109
      %v2510 = vtanh.pop %v2111
      %v2511 = vtanh.pop %v2113
      %v2512 = vtanh.pop %v2117
      %v2513 = vtanh.pop %v2119
      %v2514 = vtanh.pop %v2121
      %v2515 = vtanh.pop %v2123
      %v2516 = vtanh.pop %v2127
      %v2517 = vtanh.pop %v2129
      %v2518 = vtanh.pop %v2131
      %v2519 = vtanh.pop %v2133
      %v2520 = vtanh.pop %v2137
      %v2521 = vtanh.pop %v2139
      %v2522 = vtanh.pop %v2141
      %v2523 = vtanh.pop %v2143
      %v2524 = vxor.u32 %v2049, 2147483648
      %v2525 = vxor.u32 %v2406, 2147483648
      %v2526 = vxor.u32 %v2053, 2147483648
      %v2527 = vxor.u32 %v2409, 2147483648
      %v2528 = vxor.u32 %v2059, 2147483648
      %v2529 = vxor.u32 %v2414, 2147483648
      %v2530 = vxor.u32 %v2063, 2147483648
      %v2531 = vxor.u32 %v2417, 2147483648
      %v2532 = vxor.u32 %v2069, 2147483648
      %v2533 = vxor.u32 %v2422, 2147483648
      %v2534 = vxor.u32 %v2073, 2147483648
      %v2535 = vxor.u32 %v2425, 2147483648
      %v2536 = vxor.u32 %v2079, 2147483648
      %v2537 = vxor.u32 %v2430, 2147483648
      %v2538 = vxor.u32 %v2083, 2147483648
      %v2539 = vxor.u32 %v2433, 2147483648
      %v2540 = vxor.u32 %v2089, 2147483648
      %v2541 = vxor.u32 %v2438, 2147483648
      %v2542 = vxor.u32 %v2093, 2147483648
      %v2543 = vxor.u32 %v2441, 2147483648
      %v2544 = vxor.u32 %v2099, 2147483648
      %v2545 = vxor.u32 %v2446, 2147483648
      %v2546 = vxor.u32 %v2103, 2147483648
      %v2547 = vxor.u32 %v2449, 2147483648
      %v2548 = vxor.u32 %v2109, 2147483648
      %v2549 = vxor.u32 %v2454, 2147483648
      %v2550 = vxor.u32 %v2113, 2147483648
      %v2551 = vxor.u32 %v2457, 2147483648
      %v2552 = vxor.u32 %v2119, 2147483648
      %v2553 = vxor.u32 %v2462, 2147483648
      %v2554 = vxor.u32 %v2123, 2147483648
      %v2555 = vxor.u32 %v2465, 2147483648
      %v2556 = vxor.u32 %v2129, 2147483648
      %v2557 = vxor.u32 %v2470, 2147483648
      %v2558 = vxor.u32 %v2133, 2147483648
      %v2559 = vxor.u32 %v2473, 2147483648
      %v2560 = vxor.u32 %v2139, 2147483648
      %v2561 = vxor.u32 %v2478, 2147483648
      %v2562 = vxor.u32 %v2143, 2147483648
      %v2563 = vxor.u32 %v2481, 2147483648
      %v2564 = vmul.f32 %v2524, 1.442695
      %v2565 = vpow.pop %v2564
      %v2566 = vmul.f32 %v2525, 1.442695
      %v2567 = vpow.pop %v2566
      %v2568 = vmul.f32 %v2526, 1.442695
      %v2569 = vpow.pop %v2568
      %v2570 = vmul.f32 %v2527, 1.442695
      %v2571 = vpow.pop %v2570
      %v2572 = vmul.f32 %v2528, 1.442695
      %v2573 = vpow.pop %v2572
      %v2574 = vmul.f32 %v2529, 1.442695
      %v2575 = vpow.pop %v2574
      %v2576 = vmul.f32 %v2530, 1.442695
      %v2577 = vpow.pop %v2576
      %v2578 = vmul.f32 %v2531, 1.442695
      %v2579 = vpow.pop %v2578
      %v2580 = vmul.f32 %v2532, 1.442695
      %v2581 = vpow.pop %v2580
      %v2582 = vmul.f32 %v2533, 1.442695
      %v2583 = vpow.pop %v2582
      %v2584 = vmul.f32 %v2534, 1.442695
      %v2585 = vpow.pop %v2584
      %v2586 = vmul.f32 %v2535, 1.442695
      %v2587 = vpow.pop %v2586
      %v2588 = vmul.f32 %v2536, 1.442695
      %v2589 = vpow.pop %v2588
      %v2590 = vmul.f32 %v2537, 1.442695
      %v2591 = vpow.pop %v2590
      %v2592 = vmul.f32 %v2538, 1.442695
      %v2593 = vpow.pop %v2592
      %v2594 = vmul.f32 %v2539, 1.442695
      %v2595 = vpow.pop %v2594
      %v2596 = vmul.f32 %v2540, 1.442695
      %v2597 = vpow.pop %v2596
      %v2598 = vmul.f32 %v2541, 1.442695
      %v2599 = vpow.pop %v2598
      %v2600 = vmul.f32 %v2542, 1.442695
      %v2601 = vpow.pop %v2600
      %v2602 = vmul.f32 %v2543, 1.442695
      %v2603 = vpow.pop %v2602
      %v2604 = vmul.f32 %v2544, 1.442695
      %v2605 = vpow.pop %v2604
      %v2606 = vmul.f32 %v2545, 1.442695
      %v2607 = vpow.pop %v2606
      %v2608 = vmul.f32 %v2546, 1.442695
      %v2609 = vpow.pop %v2608
      %v2610 = vmul.f32 %v2547, 1.442695
      %v2611 = vpow.pop %v2610
      %v2612 = vmul.f32 %v2548, 1.442695
      %v2613 = vpow.pop %v2612
      %v2614 = vmul.f32 %v2549, 1.442695
      %v2615 = vpow.pop %v2614
      %v2616 = vmul.f32 %v2550, 1.442695
      %v2617 = vpow.pop %v2616
      %v2618 = vmul.f32 %v2551, 1.442695
      %v2619 = vpow.pop %v2618
      %v2620 = vmul.f32 %v2552, 1.442695
      %v2621 = vpow.pop %v2620
      %v2622 = vmul.f32 %v2553, 1.442695
      %v2623 = vpow.pop %v2622
      %v2624 = vmul.f32 %v2554, 1.442695
      %v2625 = vpow.pop %v2624
      %v2626 = vmul.f32 %v2555, 1.442695
      %v2627 = vpow.pop %v2626
      %v2628 = vmul.f32 %v2556, 1.442695
      %v2629 = vpow.pop %v2628
      %v2630 = vmul.f32 %v2557, 1.442695
      %v2631 = vpow.pop %v2630
      %v2632 = vmul.f32 %v2558, 1.442695
      %v2633 = vpow.pop %v2632
      %v2634 = vmul.f32 %v2559, 1.442695
      %v2635 = vpow.pop %v2634
      %v2636 = vmul.f32 %v2560, 1.442695
      %v2637 = vpow.pop %v2636
      %v2638 = vmul.f32 %v2561, 1.442695
      %v2639 = vpow.pop %v2638
      %v2640 = vmul.f32 %v2562, 1.442695
      %v2641 = vpow.pop %v2640
      %v2642 = vmul.f32 %v2563, 1.442695
      %v2643 = vpow.pop %v2642
      %v2644 = vadd.f32 %v2565, 1.0
      %v2645 = vadd.f32 %v2567, 1.0
      %v2646 = vadd.f32 %v2569, 1.0
      %v2647 = vadd.f32 %v2571, 1.0
      %v2648 = vadd.f32 %v2573, 1.0
      %v2649 = vadd.f32 %v2575, 1.0
      %v2650 = vadd.f32 %v2577, 1.0
      %v2651 = vadd.f32 %v2579, 1.0
      %v2652 = vadd.f32 %v2581, 1.0
      %v2653 = vadd.f32 %v2583, 1.0
      %v2654 = vadd.f32 %v2585, 1.0
      %v2655 = vadd.f32 %v2587, 1.0
      %v2656 = vadd.f32 %v2589, 1.0
      %v2657 = vadd.f32 %v2591, 1.0
      %v2658 = vadd.f32 %v2593, 1.0
      %v2659 = vadd.f32 %v2595, 1.0
      %v2660 = vadd.f32 %v2597, 1.0
      %v2661 = vadd.f32 %v2599, 1.0
      %v2662 = vadd.f32 %v2601, 1.0
      %v2663 = vadd.f32 %v2603, 1.0
      %v2664 = vadd.f32 %v2605, 1.0
      %v2665 = vadd.f32 %v2607, 1.0
      %v2666 = vadd.f32 %v2609, 1.0
      %v2667 = vadd.f32 %v2611, 1.0
      %v2668 = vadd.f32 %v2613, 1.0
      %v2669 = vadd.f32 %v2615, 1.0
      %v2670 = vadd.f32 %v2617, 1.0
      %v2671 = vadd.f32 %v2619, 1.0
      %v2672 = vadd.f32 %v2621, 1.0
      %v2673 = vadd.f32 %v2623, 1.0
      %v2674 = vadd.f32 %v2625, 1.0
      %v2675 = vadd.f32 %v2627, 1.0
      %v2676 = vadd.f32 %v2629, 1.0
      %v2677 = vadd.f32 %v2631, 1.0
      %v2678 = vadd.f32 %v2633, 1.0
      %v2679 = vadd.f32 %v2635, 1.0
      %v2680 = vadd.f32 %v2637, 1.0
      %v2681 = vadd.f32 %v2639, 1.0
      %v2682 = vadd.f32 %v2641, 1.0
      %v2683 = vadd.f32 %v2643, 1.0
      %v2684 = vrcp.pop %v2644
      %v2685 = vmul.f32 1.0, %v2684
      %v2686 = vrcp.pop %v2645
      %v2687 = vmul.f32 1.0, %v2686
      %v2688 = vrcp.pop %v2646
      %v2689 = vmul.f32 1.0, %v2688
      %v2690 = vrcp.pop %v2647
      %v2691 = vmul.f32 1.0, %v2690
      %v2692 = vrcp.pop %v2648
      %v2693 = vmul.f32 1.0, %v2692
      %v2694 = vrcp.pop %v2649
      %v2695 = vmul.f32 1.0, %v2694
      %v2696 = vrcp.pop %v2650
      %v2697 = vmul.f32 1.0, %v2696
      %v2698 = vrcp.pop %v2651
      %v2699 = vmul.f32 1.0, %v2698
      %v2700 = vrcp.pop %v2652
      %v2701 = vmul.f32 1.0, %v2700
      %v2702 = vrcp.pop %v2653
      %v2703 = vmul.f32 1.0, %v2702
      %v2704 = vrcp.pop %v2654
      %v2705 = vmul.f32 1.0, %v2704
      %v2706 = vrcp.pop %v2655
      %v2707 = vmul.f32 1.0, %v2706
      %v2708 = vrcp.pop %v2656
      %v2709 = vmul.f32 1.0, %v2708
      %v2710 = vrcp.pop %v2657
      %v2711 = vmul.f32 1.0, %v2710
      %v2712 = vrcp.pop %v2658
      %v2713 = vmul.f32 1.0, %v2712
      %v2714 = vrcp.pop %v2659
      %v2715 = vmul.f32 1.0, %v2714
      %v2716 = vrcp.pop %v2660
      %v2717 = vmul.f32 1.0, %v2716
      %v2718 = vrcp.pop %v2661
      %v2719 = vmul.f32 1.0, %v2718
      %v2720 = vrcp.pop %v2662
      %v2721 = vmul.f32 1.0, %v2720
      %v2722 = vrcp.pop %v2663
      %v2723 = vmul.f32 1.0, %v2722
      %v2724 = vrcp.pop %v2664
      %v2725 = vmul.f32 1.0, %v2724
      %v2726 = vrcp.pop %v2665
      %v2727 = vmul.f32 1.0, %v2726
      %v2728 = vrcp.pop %v2666
      %v2729 = vmul.f32 1.0, %v2728
      %v2730 = vrcp.pop %v2667
      %v2731 = vmul.f32 1.0, %v2730
      %v2732 = vrcp.pop %v2668
      %v2733 = vmul.f32 1.0, %v2732
      %v2734 = vrcp.pop %v2669
      %v2735 = vmul.f32 1.0, %v2734
      %v2736 = vrcp.pop %v2670
      %v2737 = vmul.f32 1.0, %v2736
      %v2738 = vrcp.pop %v2671
      %v2739 = vmul.f32 1.0, %v2738
      %v2740 = vrcp.pop %v2672
      %v2741 = vmul.f32 1.0, %v2740
      %v2742 = vrcp.pop %v2673
      %v2743 = vmul.f32 1.0, %v2742
      %v2744 = vrcp.pop %v2674
      %v2745 = vmul.f32 1.0, %v2744
      %v2746 = vrcp.pop %v2675
      %v2747 = vmul.f32 1.0, %v2746
      %v2748 = vrcp.pop %v2676
      %v2749 = vmul.f32 1.0, %v2748
      %v2750 = vrcp.pop %v2677
      %v2751 = vmul.f32 1.0, %v2750
      %v2752 = vrcp.pop %v2678
      %v2753 = vmul.f32 1.0, %v2752
      %v2754 = vrcp.pop %v2679
      %v2755 = vmul.f32 1.0, %v2754
      %v2756 = vrcp.pop %v2680
      %v2757 = vmul.f32 1.0, %v2756
      %v2758 = vrcp.pop %v2681
      %v2759 = vmul.f32 1.0, %v2758
      %v2760 = vrcp.pop %v2682
      %v2761 = vmul.f32 1.0, %v2760
      %v2762 = vrcp.pop %v2683
      %v2763 = vmul.f32 1.0, %v2762
      %2804 = vrot.lane.b32.xlu0 %v2685, 64
      %v2805 = vpop.permute.xlu0 %2804
      %2806 = vrot.lane.b32.xlu0 %v2687, 64
      %v2807 = vpop.permute.xlu0 %2806
      %2808 = vrot.lane.b32.xlu0 %v2689, 64
      %v2809 = vpop.permute.xlu0 %2808
      %2810 = vrot.lane.b32.xlu0 %v2691, 64
      %v2811 = vpop.permute.xlu0 %2810
      %2812 = vrot.lane.b32.xlu0 %v2693, 64
      %v2813 = vpop.permute.xlu0 %2812
      %2814 = vrot.lane.b32.xlu0 %v2695, 64
      %v2815 = vpop.permute.xlu0 %2814
      %2816 = vrot.lane.b32.xlu0 %v2697, 64
      %v2817 = vpop.permute.xlu0 %2816
      %2818 = vrot.lane.b32.xlu0 %v2699, 64
      %v2819 = vpop.permute.xlu0 %2818
      %2820 = vrot.lane.b32.xlu0 %v2701, 64
      %v2821 = vpop.permute.xlu0 %2820
      %2822 = vrot.lane.b32.xlu0 %v2703, 64
      %v2823 = vpop.permute.xlu0 %2822
      %2824 = vrot.lane.b32.xlu0 %v2705, 64
      %v2825 = vpop.permute.xlu0 %2824
      %2826 = vrot.lane.b32.xlu0 %v2707, 64
      %v2827 = vpop.permute.xlu0 %2826
      %2828 = vrot.lane.b32.xlu0 %v2709, 64
      %v2829 = vpop.permute.xlu0 %2828
      %2830 = vrot.lane.b32.xlu0 %v2711, 64
      %v2831 = vpop.permute.xlu0 %2830
      %2832 = vrot.lane.b32.xlu0 %v2713, 64
      %v2833 = vpop.permute.xlu0 %2832
      %2834 = vrot.lane.b32.xlu0 %v2715, 64
      %v2835 = vpop.permute.xlu0 %2834
      %2836 = vrot.lane.b32.xlu0 %v2717, 64
      %v2837 = vpop.permute.xlu0 %2836
      %2838 = vrot.lane.b32.xlu0 %v2719, 64
      %v2839 = vpop.permute.xlu0 %2838
      %2840 = vrot.lane.b32.xlu0 %v2721, 64
      %v2841 = vpop.permute.xlu0 %2840
      %2842 = vrot.lane.b32.xlu0 %v2723, 64
      %v2843 = vpop.permute.xlu0 %2842
      %2844 = vrot.lane.b32.xlu0 %v2725, 64
      %v2845 = vpop.permute.xlu0 %2844
      %2846 = vrot.lane.b32.xlu0 %v2727, 64
      %v2847 = vpop.permute.xlu0 %2846
      %2848 = vrot.lane.b32.xlu0 %v2729, 64
      %v2849 = vpop.permute.xlu0 %2848
      %2850 = vrot.lane.b32.xlu0 %v2731, 64
      %v2851 = vpop.permute.xlu0 %2850
      %2852 = vrot.lane.b32.xlu0 %v2733, 64
      %v2853 = vpop.permute.xlu0 %2852
      %2854 = vrot.lane.b32.xlu0 %v2735, 64
      %v2855 = vpop.permute.xlu0 %2854
      %2856 = vrot.lane.b32.xlu0 %v2737, 64
      %v2857 = vpop.permute.xlu0 %2856
      %2858 = vrot.lane.b32.xlu0 %v2739, 64
      %v2859 = vpop.permute.xlu0 %2858
      %2860 = vrot.lane.b32.xlu0 %v2741, 64
      %v2861 = vpop.permute.xlu0 %2860
      %2862 = vrot.lane.b32.xlu0 %v2743, 64
      %v2863 = vpop.permute.xlu0 %2862
      %2864 = vrot.lane.b32.xlu0 %v2745, 64
      %v2865 = vpop.permute.xlu0 %2864
      %2866 = vrot.lane.b32.xlu0 %v2747, 64
      %v2867 = vpop.permute.xlu0 %2866
      %2868 = vrot.lane.b32.xlu0 %v2749, 64
      %v2869 = vpop.permute.xlu0 %2868
      %2870 = vrot.lane.b32.xlu0 %v2751, 64
      %v2871 = vpop.permute.xlu0 %2870
      %2872 = vrot.lane.b32.xlu0 %v2753, 64
      %v2873 = vpop.permute.xlu0 %2872
      %2874 = vrot.lane.b32.xlu0 %v2755, 64
      %v2875 = vpop.permute.xlu0 %2874
      %2876 = vrot.lane.b32.xlu0 %v2757, 64
      %v2877 = vpop.permute.xlu0 %2876
      %2878 = vrot.lane.b32.xlu0 %v2759, 64
      %v2879 = vpop.permute.xlu0 %2878
      %2880 = vrot.lane.b32.xlu0 %v2761, 64
      %v2881 = vpop.permute.xlu0 %2880
      %2882 = vrot.lane.b32.xlu0 %v2763, 64
      %v2883 = vpop.permute.xlu0 %2882
      %vm2884 = vcmask 523264
      %v2885 = vsel %vm2884, %v2805, %v2807
      %v2886 = vsel %vm2884, %v2809, %v2811
      %v2887 = vsel %vm2884, %v2813, %v2815
      %v2888 = vsel %vm2884, %v2817, %v2819
      %v2889 = vsel %vm2884, %v2821, %v2823
      %v2890 = vsel %vm2884, %v2825, %v2827
      %v2891 = vsel %vm2884, %v2829, %v2831
      %v2892 = vsel %vm2884, %v2833, %v2835
      %v2893 = vsel %vm2884, %v2837, %v2839
      %v2894 = vsel %vm2884, %v2841, %v2843
      %v2895 = vsel %vm2884, %v2845, %v2847
      %v2896 = vsel %vm2884, %v2849, %v2851
      %v2897 = vsel %vm2884, %v2853, %v2855
      %v2898 = vsel %vm2884, %v2857, %v2859
      %v2899 = vsel %vm2884, %v2861, %v2863
      %v2900 = vsel %vm2884, %v2865, %v2867
      %v2901 = vsel %vm2884, %v2869, %v2871
      %v2902 = vsel %vm2884, %v2873, %v2875
      %v2903 = vsel %vm2884, %v2877, %v2879
      %v2904 = vsel %vm2884, %v2881, %v2883
      %v2945 = vmul.f32 %v2484, %v2885
      %v2946 = vmul.f32 %v2485, %v2807
      %v2947 = vmul.f32 %v2486, %v2886
      %v2948 = vmul.f32 %v2487, %v2811
      %v2949 = vmul.f32 %v2488, %v2887
      %v2950 = vmul.f32 %v2489, %v2815
      %v2951 = vmul.f32 %v2490, %v2888
      %v2952 = vmul.f32 %v2491, %v2819
      %v2953 = vmul.f32 %v2492, %v2889
      %v2954 = vmul.f32 %v2493, %v2823
      %v2955 = vmul.f32 %v2494, %v2890
      %v2956 = vmul.f32 %v2495, %v2827
      %v2957 = vmul.f32 %v2496, %v2891
      %v2958 = vmul.f32 %v2497, %v2831
      %v2959 = vmul.f32 %v2498, %v2892
      %v2960 = vmul.f32 %v2499, %v2835
      %v2961 = vmul.f32 %v2500, %v2893
      %v2962 = vmul.f32 %v2501, %v2839
      %v2963 = vmul.f32 %v2502, %v2894
      %v2964 = vmul.f32 %v2503, %v2843
      %v2965 = vmul.f32 %v2504, %v2895
      %v2966 = vmul.f32 %v2505, %v2847
      %v2967 = vmul.f32 %v2506, %v2896
      %v2968 = vmul.f32 %v2507, %v2851
      %v2969 = vmul.f32 %v2508, %v2897
      %v2970 = vmul.f32 %v2509, %v2855
      %v2971 = vmul.f32 %v2510, %v2898
      %v2972 = vmul.f32 %v2511, %v2859
      %v2973 = vmul.f32 %v2512, %v2899
      %v2974 = vmul.f32 %v2513, %v2863
      %v2975 = vmul.f32 %v2514, %v2900
      %v2976 = vmul.f32 %v2515, %v2867
      %v2977 = vmul.f32 %v2516, %v2901
      %v2978 = vmul.f32 %v2517, %v2871
      %v2979 = vmul.f32 %v2518, %v2902
      %v2980 = vmul.f32 %v2519, %v2875
      %v2981 = vmul.f32 %v2520, %v2903
      %v2982 = vmul.f32 %v2521, %v2879
      %v2983 = vmul.f32 %v2522, %v2904
      %v2984 = vmul.f32 %v2523, %v2883
      %v2985 = vld [vmem:[%s3] sm:$0x3]
      %v2986 = vunpack.c.l.bf16 %v2985
      %v2988 = vlaneseq
      %v2989 = vshrl.u32 %v2988, 7
      %v2990 = vsub.s32 0, %v2989
      %v2991 = vrot.slane %v2986, %v2990
      %v2992 = vlaneseq
      %v2993 = vshrl.u32 %v2992, 7
      %v2994 = vsub.s32 2, %v2993
      %v2995 = vrot.slane %v2986, %v2994
      %v2998 = vlaneseq
      %v2999 = vshrl.u32 %v2998, 7
      %v3000 = vsub.s32 0, %v2999
      %v3001 = vrot.slane %v2991, %v3000
      %v3002 = vlaneseq
      %v3003 = vshrl.u32 %v3002, 7
      %v3004 = vsub.s32 0, %v3003
      %v3005 = vrot.slane %v2995, %v3004
      %v3006 = vmul.f32 %v2945, %v3001
      %v3007 = vmul.f32 %v2946, %v3005
      %v3008 = vmul.f32 %v2947, %v3001
      %v3009 = vmul.f32 %v2948, %v3005
      %v3010 = vmul.f32 %v2949, %v3001
      %v3011 = vmul.f32 %v2950, %v3005
      %v3012 = vmul.f32 %v2951, %v3001
      %v3013 = vmul.f32 %v2952, %v3005
      %v3014 = vmul.f32 %v2953, %v3001
      %v3015 = vmul.f32 %v2954, %v3005
      %v3016 = vmul.f32 %v2955, %v3001
      %v3017 = vmul.f32 %v2956, %v3005
      %v3018 = vmul.f32 %v2957, %v3001
      %v3019 = vmul.f32 %v2958, %v3005
      %v3020 = vmul.f32 %v2959, %v3001
      %v3021 = vmul.f32 %v2960, %v3005
      %v3022 = vmul.f32 %v2961, %v3001
      %v3023 = vmul.f32 %v2962, %v3005
      %v3024 = vmul.f32 %v2963, %v3001
      %v3025 = vmul.f32 %v2964, %v3005
      %v3026 = vmul.f32 %v2965, %v3001
      %v3027 = vmul.f32 %v2966, %v3005
      %v3028 = vmul.f32 %v2967, %v3001
      %v3029 = vmul.f32 %v2968, %v3005
      %v3030 = vmul.f32 %v2969, %v3001
      %v3031 = vmul.f32 %v2970, %v3005
      %v3032 = vmul.f32 %v2971, %v3001
      %v3033 = vmul.f32 %v2972, %v3005
      %v3034 = vmul.f32 %v2973, %v3001
      %v3035 = vmul.f32 %v2974, %v3005
      %v3036 = vmul.f32 %v2975, %v3001
      %v3037 = vmul.f32 %v2976, %v3005
      %v3038 = vmul.f32 %v2977, %v3001
      %v3039 = vmul.f32 %v2978, %v3005
      %v3040 = vmul.f32 %v2979, %v3001
      %v3041 = vmul.f32 %v2980, %v3005
      %v3042 = vmul.f32 %v2981, %v3001
      %v3043 = vmul.f32 %v2982, %v3005
      %v3044 = vmul.f32 %v2983, %v3001
      %v3045 = vmul.f32 %v2984, %v3005
      %v3046 = vsel %vm2884, %v3007, 0.0
      %v3047 = vadd.f32 %v3006, %v3046
      %3048 = vadd.xlane.f32.xlu0 %v3047
      %v3049 = vpop.xlane.xlu0 %3048
      %v3050 = vsel %vm2884, %v3009, 0.0
      %v3051 = vadd.f32 %v3008, %v3050
      %3052 = vadd.xlane.f32.xlu0 %v3051
      %v3053 = vpop.xlane.xlu0 %3052
      %v3054 = vsel %vm2884, %v3011, 0.0
      %v3055 = vadd.f32 %v3010, %v3054
      %3056 = vadd.xlane.f32.xlu0 %v3055
      %v3057 = vpop.xlane.xlu0 %3056
      %v3058 = vsel %vm2884, %v3013, 0.0
      %v3059 = vadd.f32 %v3012, %v3058
      %3060 = vadd.xlane.f32.xlu0 %v3059
      %v3061 = vpop.xlane.xlu0 %3060
      %v3062 = vsel %vm2884, %v3015, 0.0
      %v3063 = vadd.f32 %v3014, %v3062
      %3064 = vadd.xlane.f32.xlu0 %v3063
      %v3065 = vpop.xlane.xlu0 %3064
      %v3066 = vsel %vm2884, %v3017, 0.0
      %v3067 = vadd.f32 %v3016, %v3066
      %3068 = vadd.xlane.f32.xlu0 %v3067
      %v3069 = vpop.xlane.xlu0 %3068
      %v3070 = vsel %vm2884, %v3019, 0.0
      %v3071 = vadd.f32 %v3018, %v3070
      %3072 = vadd.xlane.f32.xlu0 %v3071
      %v3073 = vpop.xlane.xlu0 %3072
      %v3074 = vsel %vm2884, %v3021, 0.0
      %v3075 = vadd.f32 %v3020, %v3074
      %3076 = vadd.xlane.f32.xlu0 %v3075
      %v3077 = vpop.xlane.xlu0 %3076
      %v3078 = vsel %vm2884, %v3023, 0.0
      %v3079 = vadd.f32 %v3022, %v3078
      %3080 = vadd.xlane.f32.xlu0 %v3079
      %v3081 = vpop.xlane.xlu0 %3080
      %v3082 = vsel %vm2884, %v3025, 0.0
      %v3083 = vadd.f32 %v3024, %v3082
      %3084 = vadd.xlane.f32.xlu0 %v3083
      %v3085 = vpop.xlane.xlu0 %3084
      %v3086 = vsel %vm2884, %v3027, 0.0
      %v3087 = vadd.f32 %v3026, %v3086
      %3088 = vadd.xlane.f32.xlu0 %v3087
      %v3089 = vpop.xlane.xlu0 %3088
      %v3090 = vsel %vm2884, %v3029, 0.0
      %v3091 = vadd.f32 %v3028, %v3090
      %3092 = vadd.xlane.f32.xlu0 %v3091
      %v3093 = vpop.xlane.xlu0 %3092
      %v3094 = vsel %vm2884, %v3031, 0.0
      %v3095 = vadd.f32 %v3030, %v3094
      %3096 = vadd.xlane.f32.xlu0 %v3095
      %v3097 = vpop.xlane.xlu0 %3096
      %v3098 = vsel %vm2884, %v3033, 0.0
      %v3099 = vadd.f32 %v3032, %v3098
      %3100 = vadd.xlane.f32.xlu0 %v3099
      %v3101 = vpop.xlane.xlu0 %3100
      %v3102 = vsel %vm2884, %v3035, 0.0
      %v3103 = vadd.f32 %v3034, %v3102
      %3104 = vadd.xlane.f32.xlu0 %v3103
      %v3105 = vpop.xlane.xlu0 %3104
      %v3106 = vsel %vm2884, %v3037, 0.0
      %v3107 = vadd.f32 %v3036, %v3106
      %3108 = vadd.xlane.f32.xlu0 %v3107
      %v3109 = vpop.xlane.xlu0 %3108
      %v3110 = vsel %vm2884, %v3039, 0.0
      %v3111 = vadd.f32 %v3038, %v3110
      %3112 = vadd.xlane.f32.xlu0 %v3111
      %v3113 = vpop.xlane.xlu0 %3112
      %v3114 = vsel %vm2884, %v3041, 0.0
      %v3115 = vadd.f32 %v3040, %v3114
      %3116 = vadd.xlane.f32.xlu0 %v3115
      %v3117 = vpop.xlane.xlu0 %3116
      %v3118 = vsel %vm2884, %v3043, 0.0
      %v3119 = vadd.f32 %v3042, %v3118
      %3120 = vadd.xlane.f32.xlu0 %v3119
      %v3121 = vpop.xlane.xlu0 %3120
      %v3122 = vsel %vm2884, %v3045, 0.0
      %v3123 = vadd.f32 %v3044, %v3122
      %3124 = vadd.xlane.f32.xlu0 %v3123
      %v3125 = vpop.xlane.xlu0 %3124
      %v3126 = vsel %vm569, %v3049, -1e+30
      %v3127 = vsel %vm570, %v3053, -1e+30
      %v3128 = vsel %vm571, %v3057, -1e+30
      %v3129 = vsel %vm572, %v3061, -1e+30
      %v3130 = vsel %vm573, %v3065, -1e+30
      %v3131 = vsel %vm574, %v3069, -1e+30
      %v3132 = vsel %vm575, %v3073, -1e+30
      %v3133 = vsel %vm576, %v3077, -1e+30
      %v3134 = vsel %vm577, %v3081, -1e+30
      %v3135 = vsel %vm578, %v3085, -1e+30
      %v3136 = vsel %vm579, %v3089, -1e+30
      %v3137 = vsel %vm580, %v3093, -1e+30
      %v3138 = vsel %vm581, %v3097, -1e+30
      %v3139 = vsel %vm582, %v3101, -1e+30
      %v3140 = vsel %vm583, %v3105, -1e+30
      %v3141 = vsel %vm584, %v3109, -1e+30
      %v3142 = vsel %vm585, %v3113, -1e+30
      %v3143 = vsel %vm586, %v3117, -1e+30
      %v3144 = vsel %vm587, %v3121, -1e+30
      %v3145 = vsel %vm588, %v3125, -1e+30
      %v3146 = vld [vmem:[#allocation2] sm:$0x1]
      %v3147 = vmax.f32 %v3126, %v3130
      %v3148 = vmax.f32 %v3127, %v3131
      %v3149 = vmax.f32 %v3128, %v3132
      %v3150 = vmax.f32 %v3129, %v3133
      %v3151 = vmax.f32 %v3147, %v3134
      %v3152 = vmax.f32 %v3148, %v3135
      %v3153 = vmax.f32 %v3149, %v3136
      %v3154 = vmax.f32 %v3150, %v3137
      %v3155 = vmax.f32 %v3151, %v3138
      %v3156 = vmax.f32 %v3152, %v3139
      %v3157 = vmax.f32 %v3153, %v3140
      %v3158 = vmax.f32 %v3154, %v3141
      %v3159 = vmax.f32 %v3155, %v3142
      %v3160 = vmax.f32 %v3156, %v3143
      %v3161 = vmax.f32 %v3157, %v3144
      %v3162 = vmax.f32 %v3158, %v3145
      %v3163 = vmax.f32 %v3159, %v3160
      %v3164 = vmax.f32 %v3161, %v3162
      %v3165 = vmax.f32 %v3163, %v3164
      %v3166 = vrot.slane %v3165, 4
      %v3167 = vmax.f32 %v3165, %v3166
      %v3168 = vrot.slane %v3167, 2
      %v3169 = vmax.f32 %v3167, %v3168
      %v3170 = vrot.slane %v3169, 1
      %v3171 = vmax.f32 %v3169, %v3170
      %v3172 = vmax.f32 %v3146, %v3171
      %v3173 = vsub.f32 %v3146, %v3172
      %v3174 = vmul.f32 %v3173, 1.442695
      %v3175 = vpow.pop %v3174
      %v3177 = vlaneseq
      %v3178 = vshrl.u32 %v3177, 7
      %v3179 = vsub.s32 0, %v3178
      %v3180 = vrot.slane %v3172, %v3179
      %v3182 = vsub.f32 %v3126, %v3180
      %v3183 = vsub.f32 %v3127, %v3180
      %v3184 = vsub.f32 %v3128, %v3180
      %v3185 = vsub.f32 %v3129, %v3180
      %v3186 = vsub.f32 %v3130, %v3180
      %v3187 = vsub.f32 %v3131, %v3180
      %v3188 = vsub.f32 %v3132, %v3180
      %v3189 = vsub.f32 %v3133, %v3180
      %v3190 = vsub.f32 %v3134, %v3180
      %v3191 = vsub.f32 %v3135, %v3180
      %v3192 = vsub.f32 %v3136, %v3180
      %v3193 = vsub.f32 %v3137, %v3180
      %v3194 = vsub.f32 %v3138, %v3180
      %v3195 = vsub.f32 %v3139, %v3180
      %v3196 = vsub.f32 %v3140, %v3180
      %v3197 = vsub.f32 %v3141, %v3180
      %v3198 = vsub.f32 %v3142, %v3180
      %v3199 = vsub.f32 %v3143, %v3180
      %v3200 = vsub.f32 %v3144, %v3180
      %v3201 = vsub.f32 %v3145, %v3180
      %v3202 = vmul.f32 %v3182, 1.442695
      %v3203 = vpow.pop %v3202
      %v3204 = vmul.f32 %v3183, 1.442695
      %v3205 = vpow.pop %v3204
      %v3206 = vmul.f32 %v3184, 1.442695
      %v3207 = vpow.pop %v3206
      %v3208 = vmul.f32 %v3185, 1.442695
      %v3209 = vpow.pop %v3208
      %v3210 = vmul.f32 %v3186, 1.442695
      %v3211 = vpow.pop %v3210
      %v3212 = vmul.f32 %v3187, 1.442695
      %v3213 = vpow.pop %v3212
      %v3214 = vmul.f32 %v3188, 1.442695
      %v3215 = vpow.pop %v3214
      %v3216 = vmul.f32 %v3189, 1.442695
      %v3217 = vpow.pop %v3216
      %v3218 = vmul.f32 %v3190, 1.442695
      %v3219 = vpow.pop %v3218
      %v3220 = vmul.f32 %v3191, 1.442695
      %v3221 = vpow.pop %v3220
      %v3222 = vmul.f32 %v3192, 1.442695
      %v3223 = vpow.pop %v3222
      %v3224 = vmul.f32 %v3193, 1.442695
      %v3225 = vpow.pop %v3224
      %v3226 = vmul.f32 %v3194, 1.442695
      %v3227 = vpow.pop %v3226
      %v3228 = vmul.f32 %v3195, 1.442695
      %v3229 = vpow.pop %v3228
      %v3230 = vmul.f32 %v3196, 1.442695
      %v3231 = vpow.pop %v3230
      %v3232 = vmul.f32 %v3197, 1.442695
      %v3233 = vpow.pop %v3232
      %v3234 = vmul.f32 %v3198, 1.442695
      %v3235 = vpow.pop %v3234
      %v3236 = vmul.f32 %v3199, 1.442695
      %v3237 = vpow.pop %v3236
      %v3238 = vmul.f32 %v3200, 1.442695
      %v3239 = vpow.pop %v3238
      %v3240 = vmul.f32 %v3201, 1.442695
      %v3241 = vpow.pop %v3240
      %v3242 = vld [vmem:[#allocation3] sm:$0x1]
      %v3243 = vmul.f32 %v3175, %v3242
      %vm3244 = vcmask 7168
      %v3245 = vsel %vm3244, %v3203, 0.0
      %v3246 = vsel %vm3244, %v3205, 0.0
      %v3247 = vadd.f32 %v3245, %v3246
      %v3248 = vsel %vm3244, %v3207, 0.0
      %v3249 = vadd.f32 %v3247, %v3248
      %v3250 = vsel %vm3244, %v3209, 0.0
      %v3251 = vadd.f32 %v3249, %v3250
      %v3252 = vsel %vm3244, %v3211, 0.0
      %v3253 = vadd.f32 %v3251, %v3252
      %v3254 = vsel %vm3244, %v3213, 0.0
      %v3255 = vadd.f32 %v3253, %v3254
      %v3256 = vsel %vm3244, %v3215, 0.0
      %v3257 = vadd.f32 %v3255, %v3256
      %v3258 = vsel %vm3244, %v3217, 0.0
      %v3259 = vadd.f32 %v3257, %v3258
      %v3260 = vsel %vm3244, %v3219, 0.0
      %v3261 = vadd.f32 %v3259, %v3260
      %v3262 = vsel %vm3244, %v3221, 0.0
      %v3263 = vadd.f32 %v3261, %v3262
      %v3264 = vsel %vm3244, %v3223, 0.0
      %v3265 = vadd.f32 %v3263, %v3264
      %v3266 = vsel %vm3244, %v3225, 0.0
      %v3267 = vadd.f32 %v3265, %v3266
      %v3268 = vsel %vm3244, %v3227, 0.0
      %v3269 = vadd.f32 %v3267, %v3268
      %v3270 = vsel %vm3244, %v3229, 0.0
      %v3271 = vadd.f32 %v3269, %v3270
      %v3272 = vsel %vm3244, %v3231, 0.0
      %v3273 = vadd.f32 %v3271, %v3272
      %v3274 = vsel %vm3244, %v3233, 0.0
      %v3275 = vadd.f32 %v3273, %v3274
      %v3276 = vsel %vm3244, %v3235, 0.0
      %v3277 = vadd.f32 %v3275, %v3276
      %v3278 = vsel %vm3244, %v3237, 0.0
      %v3279 = vadd.f32 %v3277, %v3278
      %v3280 = vsel %vm3244, %v3239, 0.0
      %v3281 = vadd.f32 %v3279, %v3280
      %v3282 = vsel %vm3244, %v3241, 0.0
      %v3283 = vadd.f32 %v3281, %v3282
      %v3284 = vrot.slane %v3283, 4
      %v3285 = vadd.f32 %v3283, %v3284
      %v3286 = vrot.slane %v3285, 2
      %v3287 = vadd.f32 %v3285, %v3286
      %v3288 = vrot.slane %v3287, 1
      %v3289 = vadd.f32 %v3287, %v3288
      %v3290 = vadd.f32 %v3243, %v3289
      %vm3291 = vcmask 0
      %3292 = vst.msk [vmem:[#allocation3] sm:$0x1] %vm3291, %v3290
      %v3293 = vpack.c.bf16 %v3205, %v3203
      %v3294 = vpack.c.bf16 %v3209, %v3207
      %v3295 = vpack.c.bf16 %v3213, %v3211
      %v3296 = vpack.c.bf16 %v3217, %v3215
      %v3297 = vpack.c.bf16 %v3221, %v3219
      %v3298 = vpack.c.bf16 %v3225, %v3223
      %v3299 = vpack.c.bf16 %v3229, %v3227
      %v3300 = vpack.c.bf16 %v3233, %v3231
      %v3301 = vpack.c.bf16 %v3237, %v3235
      %v3302 = vpack.c.bf16 %v3241, %v3239
      %3303 = vxpose.xlu0.c.b16.start [1/8] %v3293, 128
      %3304 = vxpose.xlu0.c.b16.cont [2/8] %v3294, 128
      %3305 = vxpose.xlu0.c.b16.cont [3/8] %v3295, 128
      %3306 = vxpose.xlu0.c.b16.cont [4/8] %v3296, 128
      %3307 = vxpose.xlu0.c.b16.cont [5/8] %v3297, 128
      %3308 = vxpose.xlu0.c.b16.cont [6/8] %v3298, 128
      %3309 = vxpose.xlu0.c.b16.cont [7/8] %v3299, 128
      %3310 = vxpose.xlu0.c.b16.end [8/8] %v3300, 128
      %v3311 = vpop.trf.xlu0
      %v3312 = vpop.trf.xlu0
      %v3313 = vpop.trf.xlu0
      %v3314 = vpop.trf.xlu0
      %v3315 = vpop.trf.xlu0
      %v3316 = vpop.trf.xlu0
      %v3317 = vpop.trf.xlu0
      %v3318 = vpop.trf.xlu0
      %3319 = vxpose.xlu0.c.b16.start [1/8] %v3301, 128
      %3320 = vxpose.xlu0.c.b16.cont [2/8] %v3302, 128
      %3321 = vxpose.xlu0.c.b16.cont [3/8] 0, 128
      %3322 = vxpose.xlu0.c.b16.cont [4/8] 0, 128
      %3323 = vxpose.xlu0.c.b16.cont [5/8] 0, 128
      %3324 = vxpose.xlu0.c.b16.cont [6/8] 0, 128
      %3325 = vxpose.xlu0.c.b16.cont [7/8] 0, 128
      %3326 = vxpose.xlu0.c.b16.end [8/8] 0, 128
      %v3327 = vpop.trf.xlu0
      %v3328 = vpop.trf.xlu0
      %v3329 = vpop.trf.xlu0
      %v3330 = vpop.trf.xlu0
      %v3331 = vpop.trf.xlu0
      %v3332 = vpop.trf.xlu0
      %v3333 = vpop.trf.xlu0
      %v3334 = vpop.trf.xlu0
      %vm3335 = vcmask 261120
      %v3337 = vsel %vm3335, %v3327, 0
      %3339 = vmatprep.subr.bf16.mxu0 %v752
      %3340 = vmatpush1.bf16.msra.mxu0 %v751
      %3341 = vmatprep.subr.bf16.mxu0 %v746
      %3342 = vmatpush1.bf16.msra.mxu0 %v745
      %3343 = vmatprep.subr.bf16.mxu0 %v740
      %3344 = vmatpush1.bf16.msra.mxu0 %v739
      %3345 = vmatprep.subr.bf16.mxu0 %v734
      %3346 = vmatpush1.bf16.msra.mxu0 %v733
      %3347 = vmatprep.subr.bf16.mxu0 %v728
      %3348 = vmatpush1.bf16.msra.mxu0 %v727
      %3349 = vmatprep.subr.bf16.mxu0 %v722
      %3350 = vmatpush1.bf16.msra.mxu0 %v721
      %3351 = vmatprep.subr.bf16.mxu0 %v716
      %3352 = vmatpush1.bf16.msra.mxu0 %v715
      %3353 = vmatprep.subr.bf16.mxu0 %v710
      %3354 = vmatpush1.bf16.msra.mxu0 %v709
      %3355 = vmatprep.subr.bf16.mxu0 0
      %3356 = vmatpush2.bf16.msra.mxu0 0
      %3357 = vmatprep.subr.bf16.mxu0 0
      %3358 = vmatpush2.bf16.msra.mxu0 0
      %3359 = vmatprep.subr.bf16.mxu0 0
      %3360 = vmatpush2.bf16.msra.mxu0 0
      %3361 = vmatprep.subr.bf16.mxu0 0
      %3362 = vmatpush2.bf16.msra.mxu0 0
      %3363 = vmatprep.subr.bf16.mxu0 0
      %3364 = vmatpush2.bf16.msra.mxu0 0
      %3365 = vmatprep.subr.bf16.mxu0 0
      %3366 = vmatpush2.bf16.msra.mxu0 0
      %3367 = vmatprep.subr.bf16.mxu0 %v764
      %3368 = vmatpush2.bf16.msra.mxu0 %v763
      %3369 = vmatprep.subr.bf16.mxu0 %v758
      %3370 = vmatpush2.bf16.msra.mxu0 %v757
      %3371 = vmatprep.mubr.bf16.mxu0 %v3337
      %3372 = vmatmul.mubr.bf16.gmra.mxu0 %v3311
      %v3373 = vpop.f32.mrf.mxu0
      %v3374 = vadd.f32 0.0, %v3373
      %v3375 = vpop.f32.mrf.mxu0
      %v3376 = vadd.f32 0.0, %v3375
      %v3377 = vpop.f32.mrf.mxu0
      %v3378 = vpop.f32.mrf.mxu0
      %3379 = vdwg.mxu0
      %3380 = vmatprep.subr.bf16.mxu0 %v754
      %3381 = vmatpush1.bf16.msra.mxu0 %v753
      %3382 = vmatprep.subr.bf16.mxu0 %v748
      %3383 = vmatpush1.bf16.msra.mxu0 %v747
      %3384 = vmatprep.subr.bf16.mxu0 %v742
      %3385 = vmatpush1.bf16.msra.mxu0 %v741
      %3386 = vmatprep.subr.bf16.mxu0 %v736
      %3387 = vmatpush1.bf16.msra.mxu0 %v735
      %3388 = vmatprep.subr.bf16.mxu0 %v730
      %3389 = vmatpush1.bf16.msra.mxu0 %v729
      %3390 = vmatprep.subr.bf16.mxu0 %v724
      %3391 = vmatpush1.bf16.msra.mxu0 %v723
      %3392 = vmatprep.subr.bf16.mxu0 %v718
      %3393 = vmatpush1.bf16.msra.mxu0 %v717
      %3394 = vmatprep.subr.bf16.mxu0 %v712
      %3395 = vmatpush1.bf16.msra.mxu0 %v711
      %3396 = vmatprep.subr.bf16.mxu0 0
      %3397 = vmatpush2.bf16.msra.mxu0 0
      %3398 = vmatprep.subr.bf16.mxu0 0
      %3399 = vmatpush2.bf16.msra.mxu0 0
      %3400 = vmatprep.subr.bf16.mxu0 0
      %3401 = vmatpush2.bf16.msra.mxu0 0
      %3402 = vmatprep.subr.bf16.mxu0 0
      %3403 = vmatpush2.bf16.msra.mxu0 0
      %3404 = vmatprep.subr.bf16.mxu0 0
      %3405 = vmatpush2.bf16.msra.mxu0 0
      %3406 = vmatprep.subr.bf16.mxu0 0
      %3407 = vmatpush2.bf16.msra.mxu0 0
      %3408 = vmatprep.subr.bf16.mxu0 %v766
      %3409 = vmatpush2.bf16.msra.mxu0 %v765
      %3410 = vmatprep.subr.bf16.mxu0 %v760
      %3411 = vmatpush2.bf16.msra.mxu0 %v759
      %3412 = vmatprep.mubr.bf16.mxu0 %v3337
      %3413 = vmatmul.mubr.bf16.gmra.mxu0 %v3311
      %v3414 = vpop.f32.mrf.mxu0
      %v3415 = vadd.f32 0.0, %v3414
      %v3416 = vpop.f32.mrf.mxu0
      %v3417 = vadd.f32 0.0, %v3416
      %v3418 = vpop.f32.mrf.mxu0
      %v3419 = vpop.f32.mrf.mxu0
      %3420 = vdwg.mxu0
      %3421 = vmatprep.subr.bf16.mxu0 %v756
      %3422 = vmatpush1.bf16.msra.mxu0 %v755
      %3423 = vmatprep.subr.bf16.mxu0 %v750
      %3424 = vmatpush1.bf16.msra.mxu0 %v749
      %3425 = vmatprep.subr.bf16.mxu0 %v744
      %3426 = vmatpush1.bf16.msra.mxu0 %v743
      %3427 = vmatprep.subr.bf16.mxu0 %v738
      %3428 = vmatpush1.bf16.msra.mxu0 %v737
      %3429 = vmatprep.subr.bf16.mxu0 %v732
      %3430 = vmatpush1.bf16.msra.mxu0 %v731
      %3431 = vmatprep.subr.bf16.mxu0 %v726
      %3432 = vmatpush1.bf16.msra.mxu0 %v725
      %3433 = vmatprep.subr.bf16.mxu0 %v720
      %3434 = vmatpush1.bf16.msra.mxu0 %v719
      %3435 = vmatprep.subr.bf16.mxu0 %v714
      %3436 = vmatpush1.bf16.msra.mxu0 %v713
      %3437 = vmatprep.subr.bf16.mxu0 0
      %3438 = vmatpush2.bf16.msra.mxu0 0
      %3439 = vmatprep.subr.bf16.mxu0 0
      %3440 = vmatpush2.bf16.msra.mxu0 0
      %3441 = vmatprep.subr.bf16.mxu0 0
      %3442 = vmatpush2.bf16.msra.mxu0 0
      %3443 = vmatprep.subr.bf16.mxu0 0
      %3444 = vmatpush2.bf16.msra.mxu0 0
      %3445 = vmatprep.subr.bf16.mxu0 0
      %3446 = vmatpush2.bf16.msra.mxu0 0
      %3447 = vmatprep.subr.bf16.mxu0 0
      %3448 = vmatpush2.bf16.msra.mxu0 0
      %3449 = vmatprep.subr.bf16.mxu0 %v768
      %3450 = vmatpush2.bf16.msra.mxu0 %v767
      %3451 = vmatprep.subr.bf16.mxu0 %v762
      %3452 = vmatpush2.bf16.msra.mxu0 %v761
      %3453 = vmatprep.mubr.bf16.mxu0 %v3337
      %3454 = vmatmul.mubr.bf16.gmra.mxu0 %v3311
      %v3455 = vpop.f32.mrf.mxu0
      %v3456 = vadd.f32 0.0, %v3455
      %v3457 = vpop.f32.mrf.mxu0
      %v3458 = vadd.f32 0.0, %v3457
      %v3459 = vpop.f32.mrf.mxu0
      %v3460 = vpop.f32.mrf.mxu0
      %3461 = vdwg.mxu0
      %3462 = vxpose.xlu0.b32.start [1/16] %v3175, 128
      %3463 = vxpose.xlu0.b32.cont [2/16] 0.0, 128
      %3464 = vxpose.xlu0.b32.cont [3/16] 0.0, 128
      %3465 = vxpose.xlu0.b32.cont [4/16] 0.0, 128
      %3466 = vxpose.xlu0.b32.cont [5/16] 0.0, 128
      %3467 = vxpose.xlu0.b32.cont [6/16] 0.0, 128
      %3468 = vxpose.xlu0.b32.cont [7/16] 0.0, 128
      %3469 = vxpose.xlu0.b32.cont [8/16] 0.0, 128
      %3470 = vxpose.xlu0.b32.cont [9/16] 0.0, 128
      %3471 = vxpose.xlu0.b32.cont [10/16] 0.0, 128
      %3472 = vxpose.xlu0.b32.cont [11/16] 0.0, 128
      %3473 = vxpose.xlu0.b32.cont [12/16] 0.0, 128
      %3474 = vxpose.xlu0.b32.cont [13/16] 0.0, 128
      %3475 = vxpose.xlu0.b32.cont [14/16] 0.0, 128
      %3476 = vxpose.xlu0.b32.cont [15/16] 0.0, 128
      %3477 = vxpose.xlu0.b32.end [16/16] 0.0, 128
      %v3478 = vpop.trf.xlu0
      %v3479 = vpop.trf.xlu0
      %v3480 = vpop.trf.xlu0
      %v3481 = vpop.trf.xlu0
      %v3482 = vpop.trf.xlu0
      %v3483 = vpop.trf.xlu0
      %v3484 = vpop.trf.xlu0
      %v3485 = vpop.trf.xlu0
      %v3486 = vpop.trf.xlu0
      %v3487 = vpop.trf.xlu0
      %v3488 = vpop.trf.xlu0
      %v3489 = vpop.trf.xlu0
      %v3490 = vpop.trf.xlu0
      %v3491 = vpop.trf.xlu0
      %v3492 = vpop.trf.xlu0
      %v3493 = vpop.trf.xlu0
      %v3494 = vld [vmem:[#allocation4] sm:$0x3f]
      %3496 = vset.pattern.permute.xlu0 0
      %3497 = vperm.xlu0 %3496, %v3478
      %v3498 = vpop.permute.xlu0 %3497
      %v3501 = vlaneseq
      %v3502 = vshrl.u32 %v3501, 7
      %v3503 = vsub.s32 0, %v3502
      %v3504 = vrot.slane %v3494, %v3503
      %v3505 = vlaneseq
      %v3506 = vshrl.u32 %v3505, 7
      %v3507 = vsub.s32 1, %v3506
      %v3508 = vrot.slane %v3494, %v3507
      %v3509 = vlaneseq
      %v3510 = vshrl.u32 %v3509, 7
      %v3511 = vsub.s32 2, %v3510
      %v3512 = vrot.slane %v3494, %v3511
      %v3513 = vlaneseq
      %v3514 = vshrl.u32 %v3513, 7
      %v3515 = vsub.s32 3, %v3514
      %v3516 = vrot.slane %v3494, %v3515
      %v3517 = vlaneseq
      %v3518 = vshrl.u32 %v3517, 7
      %v3519 = vsub.s32 4, %v3518
      %v3520 = vrot.slane %v3494, %v3519
      %v3521 = vlaneseq
      %v3522 = vshrl.u32 %v3521, 7
      %v3523 = vsub.s32 5, %v3522
      %v3524 = vrot.slane %v3494, %v3523
      %v3531 = vmul.f32 %v3498, %v3504
      %v3532 = vmul.f32 %v3498, %v3508
      %v3533 = vmul.f32 %v3498, %v3512
      %v3534 = vmul.f32 %v3498, %v3516
      %v3535 = vmul.f32 %v3498, %v3520
      %v3536 = vmul.f32 %v3498, %v3524
      %v3537 = vadd.f32 %v3531, %v3374
      %v3538 = vadd.f32 %v3532, %v3376
      %v3539 = vadd.f32 %v3533, %v3415
      %v3540 = vadd.f32 %v3534, %v3417
      %v3541 = vadd.f32 %v3535, %v3456
      %v3542 = vadd.f32 %v3536, %v3458
      %v3549 = vcombine.low %v3537, %v3538
      %v3550 = vcombine.low %v3539, %v3540
      %v3551 = vcombine.low %v3541, %v3542
      %v3553 = vunpack.c.l.s4 1966171168
      %v3554 = vunpack.c.0.s8 %v3553
      %v3555 = vlaneseq
      %v3556 = vshrl.u32 %v3555, 7
      %v3557 = vsub.s32 %v3554, %v3556
      %v3558 = vrot.slane %v3549, %v3557
      %v3560 = vunpack.c.l.s4 1966171168
      %v3561 = vunpack.c.0.s8 %v3560
      %v3562 = vlaneseq
      %v3563 = vshrl.u32 %v3562, 7
      %v3564 = vsub.s32 %v3561, %v3563
      %v3565 = vrot.slane %v3550, %v3564
      %v3567 = vunpack.c.l.s4 1966171168
      %v3568 = vunpack.c.0.s8 %v3567
      %v3569 = vlaneseq
      %v3570 = vshrl.u32 %v3569, 7
      %v3571 = vsub.s32 %v3568, %v3570
      %v3572 = vrot.slane %v3551, %v3571
      %v3573 = vcombine.low %v3558, %v3565
      %v3575 = vunpack.c.l.s4 1966171168
      %v3576 = vunpack.c.0.s8 %v3575
      %v3577 = vlaneseq
      %v3578 = vshrl.u32 %v3577, 7
      %v3579 = vsub.s32 %v3576, %v3578
      %v3580 = vrot.slane %v3573, %v3579
      %v3582 = vunpack.c.l.s4 1966171168
      %v3583 = vunpack.c.0.s8 %v3582
      %v3584 = vlaneseq
      %v3585 = vshrl.u32 %v3584, 7
      %v3586 = vsub.s32 %v3583, %v3585
      %v3587 = vrot.slane %v3572, %v3586
      %v3588 = vcombine.low %v3580, %v3587
      %v3590 = vlaneseq
      %vm3591 = vcmp.ge.s32.totalorder %v3590, 0
      %vm3592 = vcmp.lt.s32.totalorder %v3590, 768
      %vm3593 = vmand %vm3591, %vm3592
      %3594 = vst.msk [vmem:[#allocation4] sm:$0x3f] %vm3593, %v3588
      %3595 = vst.msk [vmem:[#allocation2] sm:$0x1] %vm3291, %v3172
      // Predicated region
      $region41: #{_lambda_.1} parent=35 // pred_check
        %p3596 = pneg %p333
      $region42: #{_lambda_.1} parent=35 // pred_check_branch
        %3598 = sbr.rel (%p3596) target = $region44
      $region43: #{_lambda_.1} parent=35 // pred_region
        %v3599 = vld [vmem:[#allocation4] sm:$0x3f]
        %3600 = vst.msk [vmem:[%s323] sm:$0x3f] %vm3593, %v3599
        %v3601 = vld [vmem:[#allocation2] sm:$0x1]
        %3602 = vst.msk [vmem:[%s326] sm:$0x1] %vm3291, %v3601
        %v3603 = vld [vmem:[#allocation3] sm:$0x1]
        %3604 = vst.msk [vmem:[%s329] sm:$0x1] %vm3291, %v3603
      $region44: #{_lambda_.1} parent=35 // pred_fallthru
        _
      %p3605 = scmp.lt.s32.totalorder %s22, 1
      %s3606 = scalar_select %p3605, %s22, 1
      %s3607 = smul.addr %s3606, 6
      %s3608 = scalar_lea.vmem %s4, %s3607
      %p3609 = scmp.lt.s32.totalorder %s22, 1
      %s3610 = scalar_select %p3609, %s22, 1
      %s3611 = scalar_lea.vmem %s5, %s3610
      %p3612 = scmp.lt.s32.totalorder %s22, 1
      %s3613 = scalar_select %p3612, %s22, 1
      %s3614 = scalar_lea.vmem %s6, %s3613
      // Predicated region
      $region45: #{_lambda_.1} parent=35 // pred_check
        %p3615 = pneg %p143
      $region46: #{_lambda_.1} parent=35 // pred_check_branch
        %3617 = sbr.rel (%p3615) target = $region48
      $region47: #{_lambda_.1} parent=35 // pred_region
        _
      $region48: #{_lambda_.1} parent=35 // pred_fallthru
        _
      // Predicated region
      $region49: #{_lambda_.1} parent=35 // pred_check
        %p3618 = pneg %p169
      $region50: #{_lambda_.1} parent=35 // pred_check_branch
        %3620 = sbr.rel (%p3618) target = $region52
      $region51: #{_lambda_.1} parent=35 // pred_region
        _
      $region52: #{_lambda_.1} parent=35 // pred_fallthru
        _
      // Predicated region
      $region53: #{_lambda_.1} parent=35 // pred_check
        %p3621 = pneg %p195
      $region54: #{_lambda_.1} parent=35 // pred_check_branch
        %3623 = sbr.rel (%p3621) target = $region56
      $region55: #{_lambda_.1} parent=35 // pred_region
        _
      $region56: #{_lambda_.1} parent=35 // pred_fallthru
        _
    $region36: #{_lambda_.1} parent=5 // pred_fallthru
      _
    %p3624 = scmp.le.s32.totalorder 2, %s13
    // Predicated region
    $region57: #{_lambda_.1} parent=5 // pred_check
      %p3625 = pneg %p3624
    $region58: #{_lambda_.1} parent=5 // pred_check_branch
      %3627 = sbr.rel (%p3625) target = $region60
    $region59: #{_lambda_.1} parent=5 // pred_region
      %s3628 = ssub.s32 %s13, 2
      // Predicated region
      $region61: #{_lambda_.1} parent=59 // pred_check
        %p3629 = pneg %p149
      $region62: #{_lambda_.1} parent=59 // pred_check_branch
        %3631 = sbr.rel (%p3629) target = $region64
      $region63: #{_lambda_.1} parent=59 // pred_region
        %p3632 = scmp.lt.s32.totalorder %s24, 1
        %s3633 = scalar_select %p3632, %s24, 1
        %s3634 = smul.addr %s3633, 6
        %s3635 = scalar_lea.vmem %s4, %s3634
      $region64: #{_lambda_.1} parent=59 // pred_fallthru
        _
      // Predicated region
      $region65: #{_lambda_.1} parent=59 // pred_check
        %p3636 = pneg %p175
      $region66: #{_lambda_.1} parent=59 // pred_check_branch
        %3638 = sbr.rel (%p3636) target = $region68
      $region67: #{_lambda_.1} parent=59 // pred_region
        %p3639 = scmp.lt.s32.totalorder %s24, 1
        %s3640 = scalar_select %p3639, %s24, 1
        %s3641 = scalar_lea.vmem %s5, %s3640
      $region68: #{_lambda_.1} parent=59 // pred_fallthru
        _
      // Predicated region
      $region69: #{_lambda_.1} parent=59 // pred_check
        %p3642 = pneg %p201
      $region70: #{_lambda_.1} parent=59 // pred_check_branch
        %3644 = sbr.rel (%p3642) target = $region72
      $region71: #{_lambda_.1} parent=59 // pred_region
        %p3645 = scmp.lt.s32.totalorder %s24, 1
        %s3646 = scalar_select %p3645, %s24, 1
        %s3647 = scalar_lea.vmem %s6, %s3646
      $region72: #{_lambda_.1} parent=59 // pred_fallthru
        _
    $region60: #{_lambda_.1} parent=5 // pred_fallthru
      _
  $region6: #{_lambda_.1} parent=0 // loop_footer
    %s17 = sadd.s32 1, %s13
  $region7: #{_lambda_.1} parent=0 // loop_footer_branch
    %12 = sbr.rel target = $region3
  $region8: #{_lambda_.1} parent=0 // loop_exit
    _

</llo_original>
